<compile_context>
chip_gen: v6e
topology: v6e:2x2x1
jax: 0.10.0
libtpu: 0.0.40
codegen_flags: <defaults>
</compile_context>

<pallas_src>
import functools

import jax
import jax.numpy as jnp
from jax.experimental import pallas as pl
from jax.experimental.pallas import tpu as pltpu

EPS = 1e-5  # PyTorch InstanceNorm2d default (affine=False)


# ----------------------------- Pallas kernel -------------------------------

def _resnet_block_kernel(xpad_ref, w1_ref, w2_ref, o_ref, *,
                         K, p, H, W, C, compute_dtype):
    """Fused conv+IN -> reflect-pad -> conv+IN -> residual for one sample."""
    xp = xpad_ref[0]                               # (H+2p, W+2p, C), f32

    def conv(z_pad, w_ref):
        # z_pad: (H+2p, W+2p, C) f32 value.
        # w_ref: (K*K*C, C) ref in compute_dtype, one (C_in, C_out) block per tap.
        acc = jnp.zeros((H * W, C), jnp.float32)
        for kh in range(K):                        # static 3x3 -> fully unrolled
            for kw in range(K):
                tap = z_pad[kh:kh + H, kw:kw + W, :]
                lhs = tap.reshape(H * W, C).astype(compute_dtype)
                rhs = w_ref[(kh * K + kw) * C:(kh * K + kw + 1) * C, :]
                acc = acc + jnp.dot(lhs, rhs,
                                    preferred_element_type=jnp.float32)
        return acc                                  # (H*W, C) f32

    def inst_norm(y):
        # Single-pass statistics over H*W per channel (sum + sum of squares).
        inv_n = 1.0 / float(H * W)
        mean = jnp.sum(y, axis=0, keepdims=True) * inv_n
        ex2 = jnp.sum(y * y, axis=0, keepdims=True) * inv_n
        var = jnp.maximum(ex2 - mean * mean, 0.0)
        return (y - mean) * jax.lax.rsqrt(var + EPS)

    def reflect_pad(y2d):
        # (H*W, C) -> (H+2p, W+2p, C), PyTorch ReflectionPad2d semantics.
        y = y2d.reshape(H, W, C)
        if p == 0:
            return y
        top = [y[p - r:p - r + 1, :, :] for r in range(p)]
        bot = [y[H - 2 - d:H - 1 - d, :, :] for d in range(p)]
        yr = jnp.concatenate(top + [y] + bot, axis=0)
        left = [yr[:, p - r:p - r + 1, :] for r in range(p)]
        right = [yr[:, W - 2 - d:W - 1 - d, :] for d in range(p)]
        return jnp.concatenate(left + [yr] + right, axis=1)

    y1 = inst_norm(conv(xp, w1_ref))               # stage 1, stays in VMEM
    y2 = inst_norm(conv(reflect_pad(y1), w2_ref))  # stage 2 (in-kernel halo)
    x2d = xp[p:p + H, p:p + W, :].reshape(H * W, C)  # residual (exact f32 x)
    o_ref[0] = (x2d + y2).reshape(H, W, C).astype(o_ref.dtype)


# ------------------------------- wrapper ------------------------------------

def resnet_block(x, params, kernel=3, stride=1, reflect_padding=1,
                 compute_dtype=jnp.bfloat16):
    """Forward pass of ResnetBlock: x + IN(Conv(pad(IN(Conv(pad(x))))))."""
    N, C, H, W = x.shape
    K, p = kernel, reflect_padding
    assert stride == 1 and p == (K - 1) // 2, \
        "residual add requires stride=1 and 'same' reflect padding"
    # Conv biases are a mathematical no-op under InstanceNorm(affine=False).
    w1, _b1, w2, _b2 = params

    def prep_w(w):
        # (C_out, C_in, K, K) -> (K*K*C_in, C_out): one (C_in, C_out) tap block.
        return jnp.transpose(w, (2, 3, 1, 0)).reshape(K * K * C, C) \
                  .astype(compute_dtype)

    x_nhwc = jnp.transpose(x, (0, 2, 3, 1))                       # NCHW -> NHWC
    xpad = jnp.pad(x_nhwc, ((0, 0), (p, p), (p, p), (0, 0)), mode="reflect")
    Hp, Wp = H + 2 * p, W + 2 * p

    kernel_fn = functools.partial(
        _resnet_block_kernel, K=K, p=p, H=H, W=W, C=C,
        compute_dtype=compute_dtype)

    out_nhwc = pl.pallas_call(
        kernel_fn,
        out_shape=jax.ShapeDtypeStruct((N, H, W, C), x.dtype),
        grid=(N,),
        in_specs=[
            pl.BlockSpec((1, Hp, Wp, C), lambda n: (n, 0, 0, 0)),
            pl.BlockSpec((K * K * C, C), lambda n: (0, 0)),
            pl.BlockSpec((K * K * C, C), lambda n: (0, 0)),
        ],
        out_specs=pl.BlockSpec((1, H, W, C), lambda n: (n, 0, 0, 0)),
        compiler_params=pltpu.CompilerParams(
            dimension_semantics=("parallel",),
            vmem_limit_bytes=48 * 1024 * 1024,   # safe on v5e/v6e/v7x, > default scoped
        ),
    )(xpad, prep_w(w1), prep_w(w2))

    # TODO(synk): for production CycleGAN sizes (C=256, H=W>=64) add an H*W
    # tile grid axis with sum/sumsq accumulator + @pl.when finalize so the
    # fused kernel also fits v7x's 64 MiB VMEM with double buffering.
    return jnp.transpose(out_nhwc, (0, 3, 1, 2))                  # NHWC -> NCHW


# ------------------------ pure-JAX reference check --------------------------

def _ref_forward(x, params, K, p):
    w1, b1, w2, b2 = params

    def conv(z, w, b):
        zp = jnp.pad(z, ((0, 0), (0, 0), (p, p), (p, p)), mode="reflect")
        y = jax.lax.conv_general_dilated(
            zp, w, (1, 1), "VALID", dimension_numbers=("NCHW", "OIHW", "NCHW"))
        return y + b.reshape(1, -1, 1, 1)

    def inorm(y):
        m = y.mean(axis=(2, 3), keepdims=True)
        v = ((y - m) ** 2).mean(axis=(2, 3), keepdims=True)
        return (y - m) * jax.lax.rsqrt(v + EPS)

    y = inorm(conv(x, w1, b1))
    y = inorm(conv(y, w2, b2))
    return x + y


# --------------------------------- main -------------------------------------

if __name__ == "__main__":
    # ResnetBlock(channel=4, kernel=3, stride=1, reflect_padding=1)
    C, K, PAD = 4, 3, 1
    N, H, W = 2, 16, 16

    key = jax.random.PRNGKey(0)
    k_x, k_w1, k_b1, k_w2, k_b2 = jax.random.split(key, 5)
    x = jax.random.normal(k_x, (N, C, H, W), dtype=jnp.float32)
    w1 = jax.random.normal(k_w1, (C, C, K, K), dtype=jnp.float32) * 0.1
    b1 = jax.random.normal(k_b1, (C,), dtype=jnp.float32) * 0.1
    w2 = jax.random.normal(k_w2, (C, C, K, K), dtype=jnp.float32) * 0.1
    b2 = jax.random.normal(k_b2, (C,), dtype=jnp.float32) * 0.1
    params = (w1, b1, w2, b2)

    ref = jax.block_until_ready(_ref_forward(x, params, K, PAD))

    # Tight check with f32 matmul operands (bias dropped: no-op under IN).
    out_f32 = jax.block_until_ready(
        resnet_block(x, params, kernel=K, reflect_padding=PAD,
                     compute_dtype=jnp.float32))
    assert out_f32.shape == x.shape and out_f32.dtype == x.dtype
    assert jnp.allclose(out_f32, ref, atol=2e-4, rtol=2e-4)

    # Production path: bf16 MXU operands, f32 accumulation / stats / residual.
    out_bf16 = jax.block_until_ready(
        resnet_block(x, params, kernel=K, reflect_padding=PAD,
                     compute_dtype=jnp.bfloat16))
    assert out_bf16.shape == x.shape and out_bf16.dtype == x.dtype
    assert jnp.allclose(out_bf16, ref, atol=1e-1, rtol=1e-1)

    print("KERNEL_OK")
</pallas_src>

<mosaic_0001>
module attributes {stable_mosaic.version = 11 : i64} {
  func.func @_resnet_block_kernel(%arg0: i32, %arg1: memref<1x18x18x4xf32, #tpu.memory_space<vmem>>, %arg2: memref<36x4xf32, #tpu.memory_space<vmem>>, %arg3: memref<36x4xf32, #tpu.memory_space<vmem>>, %arg4: memref<1x16x16x4xf32, #tpu.memory_space<vmem>>) attributes {dimension_semantics = [#tpu.dimension_semantics<parallel>], iteration_bounds = array<i64: 2>, scalar_prefetch = 0 : i64, scratch_operands = 0 : i64, tpu.core_type = #tpu.core_type<tc>, window_params = [{transform_indices = @transform_0, window_bounds = array<i64: 1, 18, 18, 4>}, {pipeline_mode = #tpu.pipeline_mode<synchronous>, transform_indices = @transform_1, window_bounds = array<i64: 36, 4>}, {pipeline_mode = #tpu.pipeline_mode<synchronous>, transform_indices = @transform_2, window_bounds = array<i64: 36, 4>}, {transform_indices = @transform_3, window_bounds = array<i64: 1, 16, 16, 4>}]} {
    %c0 = arith.constant 0 : index
    %c0_0 = arith.constant 0 : index
    %c0_1 = arith.constant 0 : index
    %c0_2 = arith.constant 0 : index
    %0 = vector.load %arg1[%c0, %c0_0, %c0_1, %c0_2] : memref<1x18x18x4xf32, #tpu.memory_space<vmem>>, vector<1x18x18x4xf32>
    %1 = vector.shape_cast %0 : vector<1x18x18x4xf32> to vector<18x18x4xf32>
    %cst = arith.constant 0.000000e+00 : f32
    %2 = vector.broadcast %cst : f32 to vector<256x4xf32>
    %3 = vector.extract_strided_slice %1 {offsets = [0, 0, 0], sizes = [16, 16, 4], strides = [1, 1, 1]} : vector<18x18x4xf32> to vector<16x16x4xf32>
    %4 = vector.shape_cast %3 : vector<16x16x4xf32> to vector<256x4xf32>
    %c0_3 = arith.constant 0 : index
    %c0_4 = arith.constant 0 : index
    %5 = vector.load %arg2[%c0_3, %c0_4] : memref<36x4xf32, #tpu.memory_space<vmem>>, vector<4x4xf32>
    %cst_5 = arith.constant dense<0.000000e+00> : vector<256x4xf32>
    %6 = tpu.matmul %4, %5, %cst_5 {dimension_numbers = #tpu.dot_dimension_numbers<[1], [0], [0], [1], [0, 0, 1, 1], [], []>} : vector<256x4xf32>, vector<4x4xf32>, vector<256x4xf32> -> vector<256x4xf32>
    %7 = arith.addf %2, %6 : vector<256x4xf32>
    %8 = vector.extract_strided_slice %1 {offsets = [0, 1, 0], sizes = [16, 16, 4], strides = [1, 1, 1]} : vector<18x18x4xf32> to vector<16x16x4xf32>
    %9 = vector.shape_cast %8 : vector<16x16x4xf32> to vector<256x4xf32>
    %c4 = arith.constant 4 : index
    %c0_6 = arith.constant 0 : index
    %10 = vector.load %arg2[%c4, %c0_6] : memref<36x4xf32, #tpu.memory_space<vmem>>, vector<4x4xf32>
    %cst_7 = arith.constant dense<0.000000e+00> : vector<256x4xf32>
    %11 = tpu.matmul %9, %10, %cst_7 {dimension_numbers = #tpu.dot_dimension_numbers<[1], [0], [0], [1], [0, 0, 1, 1], [], []>} : vector<256x4xf32>, vector<4x4xf32>, vector<256x4xf32> -> vector<256x4xf32>
    %12 = arith.addf %7, %11 : vector<256x4xf32>
    %13 = vector.extract_strided_slice %1 {offsets = [0, 2, 0], sizes = [16, 16, 4], strides = [1, 1, 1]} : vector<18x18x4xf32> to vector<16x16x4xf32>
    %14 = vector.shape_cast %13 : vector<16x16x4xf32> to vector<256x4xf32>
    %c8 = arith.constant 8 : index
    %c0_8 = arith.constant 0 : index
    %15 = vector.load %arg2[%c8, %c0_8] : memref<36x4xf32, #tpu.memory_space<vmem>>, vector<4x4xf32>
    %cst_9 = arith.constant dense<0.000000e+00> : vector<256x4xf32>
    %16 = tpu.matmul %14, %15, %cst_9 {dimension_numbers = #tpu.dot_dimension_numbers<[1], [0], [0], [1], [0, 0, 1, 1], [], []>} : vector<256x4xf32>, vector<4x4xf32>, vector<256x4xf32> -> vector<256x4xf32>
    %17 = arith.addf %12, %16 : vector<256x4xf32>
    %18 = vector.extract_strided_slice %1 {offsets = [1, 0, 0], sizes = [16, 16, 4], strides = [1, 1, 1]} : vector<18x18x4xf32> to vector<16x16x4xf32>
    %19 = vector.shape_cast %18 : vector<16x16x4xf32> to vector<256x4xf32>
    %c12 = arith.constant 12 : index
    %c0_10 = arith.constant 0 : index
    %20 = vector.load %arg2[%c12, %c0_10] : memref<36x4xf32, #tpu.memory_space<vmem>>, vector<4x4xf32>
    %cst_11 = arith.constant dense<0.000000e+00> : vector<256x4xf32>
    %21 = tpu.matmul %19, %20, %cst_11 {dimension_numbers = #tpu.dot_dimension_numbers<[1], [0], [0], [1], [0, 0, 1, 1], [], []>} : vector<256x4xf32>, vector<4x4xf32>, vector<256x4xf32> -> vector<256x4xf32>
    %22 = arith.addf %17, %21 : vector<256x4xf32>
    %23 = vector.extract_strided_slice %1 {offsets = [1, 1, 0], sizes = [16, 16, 4], strides = [1, 1, 1]} : vector<18x18x4xf32> to vector<16x16x4xf32>
    %24 = vector.shape_cast %23 : vector<16x16x4xf32> to vector<256x4xf32>
    %c16 = arith.constant 16 : index
    %c0_12 = arith.constant 0 : index
    %25 = vector.load %arg2[%c16, %c0_12] : memref<36x4xf32, #tpu.memory_space<vmem>>, vector<4x4xf32>
    %cst_13 = arith.constant dense<0.000000e+00> : vector<256x4xf32>
    %26 = tpu.matmul %24, %25, %cst_13 {dimension_numbers = #tpu.dot_dimension_numbers<[1], [0], [0], [1], [0, 0, 1, 1], [], []>} : vector<256x4xf32>, vector<4x4xf32>, vector<256x4xf32> -> vector<256x4xf32>
    %27 = arith.addf %22, %26 : vector<256x4xf32>
    %28 = vector.extract_strided_slice %1 {offsets = [1, 2, 0], sizes = [16, 16, 4], strides = [1, 1, 1]} : vector<18x18x4xf32> to vector<16x16x4xf32>
    %29 = vector.shape_cast %28 : vector<16x16x4xf32> to vector<256x4xf32>
    %c20 = arith.constant 20 : index
    %c0_14 = arith.constant 0 : index
    %30 = vector.load %arg2[%c20, %c0_14] : memref<36x4xf32, #tpu.memory_space<vmem>>, vector<4x4xf32>
    %cst_15 = arith.constant dense<0.000000e+00> : vector<256x4xf32>
    %31 = tpu.matmul %29, %30, %cst_15 {dimension_numbers = #tpu.dot_dimension_numbers<[1], [0], [0], [1], [0, 0, 1, 1], [], []>} : vector<256x4xf32>, vector<4x4xf32>, vector<256x4xf32> -> vector<256x4xf32>
    %32 = arith.addf %27, %31 : vector<256x4xf32>
    %33 = vector.extract_strided_slice %1 {offsets = [2, 0, 0], sizes = [16, 16, 4], strides = [1, 1, 1]} : vector<18x18x4xf32> to vector<16x16x4xf32>
    %34 = vector.shape_cast %33 : vector<16x16x4xf32> to vector<256x4xf32>
    %c24 = arith.constant 24 : index
    %c0_16 = arith.constant 0 : index
    %35 = vector.load %arg2[%c24, %c0_16] : memref<36x4xf32, #tpu.memory_space<vmem>>, vector<4x4xf32>
    %cst_17 = arith.constant dense<0.000000e+00> : vector<256x4xf32>
    %36 = tpu.matmul %34, %35, %cst_17 {dimension_numbers = #tpu.dot_dimension_numbers<[1], [0], [0], [1], [0, 0, 1, 1], [], []>} : vector<256x4xf32>, vector<4x4xf32>, vector<256x4xf32> -> vector<256x4xf32>
    %37 = arith.addf %32, %36 : vector<256x4xf32>
    %38 = vector.extract_strided_slice %1 {offsets = [2, 1, 0], sizes = [16, 16, 4], strides = [1, 1, 1]} : vector<18x18x4xf32> to vector<16x16x4xf32>
    %39 = vector.shape_cast %38 : vector<16x16x4xf32> to vector<256x4xf32>
    %c28 = arith.constant 28 : index
    %c0_18 = arith.constant 0 : index
    %40 = vector.load %arg2[%c28, %c0_18] : memref<36x4xf32, #tpu.memory_space<vmem>>, vector<4x4xf32>
    %cst_19 = arith.constant dense<0.000000e+00> : vector<256x4xf32>
    %41 = tpu.matmul %39, %40, %cst_19 {dimension_numbers = #tpu.dot_dimension_numbers<[1], [0], [0], [1], [0, 0, 1, 1], [], []>} : vector<256x4xf32>, vector<4x4xf32>, vector<256x4xf32> -> vector<256x4xf32>
    %42 = arith.addf %37, %41 : vector<256x4xf32>
    %43 = vector.extract_strided_slice %1 {offsets = [2, 2, 0], sizes = [16, 16, 4], strides = [1, 1, 1]} : vector<18x18x4xf32> to vector<16x16x4xf32>
    %44 = vector.shape_cast %43 : vector<16x16x4xf32> to vector<256x4xf32>
    %c32 = arith.constant 32 : index
    %c0_20 = arith.constant 0 : index
    %45 = vector.load %arg2[%c32, %c0_20] : memref<36x4xf32, #tpu.memory_space<vmem>>, vector<4x4xf32>
    %cst_21 = arith.constant dense<0.000000e+00> : vector<256x4xf32>
    %46 = tpu.matmul %44, %45, %cst_21 {dimension_numbers = #tpu.dot_dimension_numbers<[1], [0], [0], [1], [0, 0, 1, 1], [], []>} : vector<256x4xf32>, vector<4x4xf32>, vector<256x4xf32> -> vector<256x4xf32>
    %47 = arith.addf %42, %46 : vector<256x4xf32>
    %cst_22 = arith.constant dense<0.000000e+00> : vector<4xf32>
    %48 = vector.multi_reduction <add>, %47, %cst_22 [0] : vector<256x4xf32> to vector<4xf32>
    %49 = vector.shape_cast %48 : vector<4xf32> to vector<1x4xf32>
    %cst_23 = arith.constant 3.906250e-03 : f32
    %50 = vector.broadcast %cst_23 : f32 to vector<1x4xf32>
    %51 = arith.mulf %49, %50 : vector<1x4xf32>
    %52 = arith.mulf %47, %47 : vector<256x4xf32>
    %cst_24 = arith.constant dense<0.000000e+00> : vector<4xf32>
    %53 = vector.multi_reduction <add>, %52, %cst_24 [0] : vector<256x4xf32> to vector<4xf32>
    %54 = vector.shape_cast %53 : vector<4xf32> to vector<1x4xf32>
    %cst_25 = arith.constant 3.906250e-03 : f32
    %55 = vector.broadcast %cst_25 : f32 to vector<1x4xf32>
    %56 = arith.mulf %54, %55 : vector<1x4xf32>
    %57 = arith.mulf %51, %51 : vector<1x4xf32>
    %58 = arith.subf %56, %57 : vector<1x4xf32>
    %cst_26 = arith.constant 0.000000e+00 : f32
    %59 = vector.broadcast %cst_26 : f32 to vector<1x4xf32>
    %60 = arith.maximumf %58, %59 : vector<1x4xf32>
    %61 = vector.broadcast %51 : vector<1x4xf32> to vector<256x4xf32>
    %62 = arith.subf %47, %61 : vector<256x4xf32>
    %cst_27 = arith.constant 9.99999974E-6 : f32
    %63 = vector.broadcast %cst_27 : f32 to vector<1x4xf32>
    %64 = arith.addf %60, %63 : vector<1x4xf32>
    %65 = math.rsqrt %64 : vector<1x4xf32>
    %66 = vector.broadcast %65 : vector<1x4xf32> to vector<256x4xf32>
    %67 = arith.mulf %62, %66 : vector<256x4xf32>
    %68 = vector.shape_cast %67 : vector<256x4xf32> to vector<16x16x4xf32>
    %69 = vector.extract_strided_slice %68 {offsets = [1, 0, 0], sizes = [1, 16, 4], strides = [1, 1, 1]} : vector<16x16x4xf32> to vector<1x16x4xf32>
    %70 = vector.extract_strided_slice %68 {offsets = [14, 0, 0], sizes = [1, 16, 4], strides = [1, 1, 1]} : vector<16x16x4xf32> to vector<1x16x4xf32>
    %71 = tpu.concatenate %69, %68, %70 in 0 : vector<1x16x4xf32>, vector<16x16x4xf32>, vector<1x16x4xf32> -> vector<18x16x4xf32>
    %72 = vector.extract_strided_slice %71 {offsets = [0, 1, 0], sizes = [18, 1, 4], strides = [1, 1, 1]} : vector<18x16x4xf32> to vector<18x1x4xf32>
    %73 = vector.extract_strided_slice %71 {offsets = [0, 14, 0], sizes = [18, 1, 4], strides = [1, 1, 1]} : vector<18x16x4xf32> to vector<18x1x4xf32>
    %74 = tpu.concatenate %72, %71, %73 in 1 : vector<18x1x4xf32>, vector<18x16x4xf32>, vector<18x1x4xf32> -> vector<18x18x4xf32>
    %cst_28 = arith.constant 0.000000e+00 : f32
    %75 = vector.broadcast %cst_28 : f32 to vector<256x4xf32>
    %76 = vector.extract_strided_slice %74 {offsets = [0, 0, 0], sizes = [16, 16, 4], strides = [1, 1, 1]} : vector<18x18x4xf32> to vector<16x16x4xf32>
    %77 = vector.shape_cast %76 : vector<16x16x4xf32> to vector<256x4xf32>
    %c0_29 = arith.constant 0 : index
    %c0_30 = arith.constant 0 : index
    %78 = vector.load %arg3[%c0_29, %c0_30] : memref<36x4xf32, #tpu.memory_space<vmem>>, vector<4x4xf32>
    %cst_31 = arith.constant dense<0.000000e+00> : vector<256x4xf32>
    %79 = tpu.matmul %77, %78, %cst_31 {dimension_numbers = #tpu.dot_dimension_numbers<[1], [0], [0], [1], [0, 0, 1, 1], [], []>} : vector<256x4xf32>, vector<4x4xf32>, vector<256x4xf32> -> vector<256x4xf32>
    %80 = arith.addf %75, %79 : vector<256x4xf32>
    %81 = vector.extract_strided_slice %74 {offsets = [0, 1, 0], sizes = [16, 16, 4], strides = [1, 1, 1]} : vector<18x18x4xf32> to vector<16x16x4xf32>
    %82 = vector.shape_cast %81 : vector<16x16x4xf32> to vector<256x4xf32>
    %c4_32 = arith.constant 4 : index
    %c0_33 = arith.constant 0 : index
    %83 = vector.load %arg3[%c4_32, %c0_33] : memref<36x4xf32, #tpu.memory_space<vmem>>, vector<4x4xf32>
    %cst_34 = arith.constant dense<0.000000e+00> : vector<256x4xf32>
    %84 = tpu.matmul %82, %83, %cst_34 {dimension_numbers = #tpu.dot_dimension_numbers<[1], [0], [0], [1], [0, 0, 1, 1], [], []>} : vector<256x4xf32>, vector<4x4xf32>, vector<256x4xf32> -> vector<256x4xf32>
    %85 = arith.addf %80, %84 : vector<256x4xf32>
    %86 = vector.extract_strided_slice %74 {offsets = [0, 2, 0], sizes = [16, 16, 4], strides = [1, 1, 1]} : vector<18x18x4xf32> to vector<16x16x4xf32>
    %87 = vector.shape_cast %86 : vector<16x16x4xf32> to vector<256x4xf32>
    %c8_35 = arith.constant 8 : index
    %c0_36 = arith.constant 0 : index
    %88 = vector.load %arg3[%c8_35, %c0_36] : memref<36x4xf32, #tpu.memory_space<vmem>>, vector<4x4xf32>
    %cst_37 = arith.constant dense<0.000000e+00> : vector<256x4xf32>
    %89 = tpu.matmul %87, %88, %cst_37 {dimension_numbers = #tpu.dot_dimension_numbers<[1], [0], [0], [1], [0, 0, 1, 1], [], []>} : vector<256x4xf32>, vector<4x4xf32>, vector<256x4xf32> -> vector<256x4xf32>
    %90 = arith.addf %85, %89 : vector<256x4xf32>
    %91 = vector.extract_strided_slice %74 {offsets = [1, 0, 0], sizes = [16, 16, 4], strides = [1, 1, 1]} : vector<18x18x4xf32> to vector<16x16x4xf32>
    %92 = vector.shape_cast %91 : vector<16x16x4xf32> to vector<256x4xf32>
    %c12_38 = arith.constant 12 : index
    %c0_39 = arith.constant 0 : index
    %93 = vector.load %arg3[%c12_38, %c0_39] : memref<36x4xf32, #tpu.memory_space<vmem>>, vector<4x4xf32>
    %cst_40 = arith.constant dense<0.000000e+00> : vector<256x4xf32>
    %94 = tpu.matmul %92, %93, %cst_40 {dimension_numbers = #tpu.dot_dimension_numbers<[1], [0], [0], [1], [0, 0, 1, 1], [], []>} : vector<256x4xf32>, vector<4x4xf32>, vector<256x4xf32> -> vector<256x4xf32>
    %95 = arith.addf %90, %94 : vector<256x4xf32>
    %96 = vector.extract_strided_slice %74 {offsets = [1, 1, 0], sizes = [16, 16, 4], strides = [1, 1, 1]} : vector<18x18x4xf32> to vector<16x16x4xf32>
    %97 = vector.shape_cast %96 : vector<16x16x4xf32> to vector<256x4xf32>
    %c16_41 = arith.constant 16 : index
    %c0_42 = arith.constant 0 : index
    %98 = vector.load %arg3[%c16_41, %c0_42] : memref<36x4xf32, #tpu.memory_space<vmem>>, vector<4x4xf32>
    %cst_43 = arith.constant dense<0.000000e+00> : vector<256x4xf32>
    %99 = tpu.matmul %97, %98, %cst_43 {dimension_numbers = #tpu.dot_dimension_numbers<[1], [0], [0], [1], [0, 0, 1, 1], [], []>} : vector<256x4xf32>, vector<4x4xf32>, vector<256x4xf32> -> vector<256x4xf32>
    %100 = arith.addf %95, %99 : vector<256x4xf32>
    %101 = vector.extract_strided_slice %74 {offsets = [1, 2, 0], sizes = [16, 16, 4], strides = [1, 1, 1]} : vector<18x18x4xf32> to vector<16x16x4xf32>
    %102 = vector.shape_cast %101 : vector<16x16x4xf32> to vector<256x4xf32>
    %c20_44 = arith.constant 20 : index
    %c0_45 = arith.constant 0 : index
    %103 = vector.load %arg3[%c20_44, %c0_45] : memref<36x4xf32, #tpu.memory_space<vmem>>, vector<4x4xf32>
    %cst_46 = arith.constant dense<0.000000e+00> : vector<256x4xf32>
    %104 = tpu.matmul %102, %103, %cst_46 {dimension_numbers = #tpu.dot_dimension_numbers<[1], [0], [0], [1], [0, 0, 1, 1], [], []>} : vector<256x4xf32>, vector<4x4xf32>, vector<256x4xf32> -> vector<256x4xf32>
    %105 = arith.addf %100, %104 : vector<256x4xf32>
    %106 = vector.extract_strided_slice %74 {offsets = [2, 0, 0], sizes = [16, 16, 4], strides = [1, 1, 1]} : vector<18x18x4xf32> to vector<16x16x4xf32>
    %107 = vector.shape_cast %106 : vector<16x16x4xf32> to vector<256x4xf32>
    %c24_47 = arith.constant 24 : index
    %c0_48 = arith.constant 0 : index
    %108 = vector.load %arg3[%c24_47, %c0_48] : memref<36x4xf32, #tpu.memory_space<vmem>>, vector<4x4xf32>
    %cst_49 = arith.constant dense<0.000000e+00> : vector<256x4xf32>
    %109 = tpu.matmul %107, %108, %cst_49 {dimension_numbers = #tpu.dot_dimension_numbers<[1], [0], [0], [1], [0, 0, 1, 1], [], []>} : vector<256x4xf32>, vector<4x4xf32>, vector<256x4xf32> -> vector<256x4xf32>
    %110 = arith.addf %105, %109 : vector<256x4xf32>
    %111 = vector.extract_strided_slice %74 {offsets = [2, 1, 0], sizes = [16, 16, 4], strides = [1, 1, 1]} : vector<18x18x4xf32> to vector<16x16x4xf32>
    %112 = vector.shape_cast %111 : vector<16x16x4xf32> to vector<256x4xf32>
    %c28_50 = arith.constant 28 : index
    %c0_51 = arith.constant 0 : index
    %113 = vector.load %arg3[%c28_50, %c0_51] : memref<36x4xf32, #tpu.memory_space<vmem>>, vector<4x4xf32>
    %cst_52 = arith.constant dense<0.000000e+00> : vector<256x4xf32>
    %114 = tpu.matmul %112, %113, %cst_52 {dimension_numbers = #tpu.dot_dimension_numbers<[1], [0], [0], [1], [0, 0, 1, 1], [], []>} : vector<256x4xf32>, vector<4x4xf32>, vector<256x4xf32> -> vector<256x4xf32>
    %115 = arith.addf %110, %114 : vector<256x4xf32>
    %116 = vector.extract_strided_slice %74 {offsets = [2, 2, 0], sizes = [16, 16, 4], strides = [1, 1, 1]} : vector<18x18x4xf32> to vector<16x16x4xf32>
    %117 = vector.shape_cast %116 : vector<16x16x4xf32> to vector<256x4xf32>
    %c32_53 = arith.constant 32 : index
    %c0_54 = arith.constant 0 : index
    %118 = vector.load %arg3[%c32_53, %c0_54] : memref<36x4xf32, #tpu.memory_space<vmem>>, vector<4x4xf32>
    %cst_55 = arith.constant dense<0.000000e+00> : vector<256x4xf32>
    %119 = tpu.matmul %117, %118, %cst_55 {dimension_numbers = #tpu.dot_dimension_numbers<[1], [0], [0], [1], [0, 0, 1, 1], [], []>} : vector<256x4xf32>, vector<4x4xf32>, vector<256x4xf32> -> vector<256x4xf32>
    %120 = arith.addf %115, %119 : vector<256x4xf32>
    %cst_56 = arith.constant dense<0.000000e+00> : vector<4xf32>
    %121 = vector.multi_reduction <add>, %120, %cst_56 [0] : vector<256x4xf32> to vector<4xf32>
    %122 = vector.shape_cast %121 : vector<4xf32> to vector<1x4xf32>
    %cst_57 = arith.constant 3.906250e-03 : f32
    %123 = vector.broadcast %cst_57 : f32 to vector<1x4xf32>
    %124 = arith.mulf %122, %123 : vector<1x4xf32>
    %125 = arith.mulf %120, %120 : vector<256x4xf32>
    %cst_58 = arith.constant dense<0.000000e+00> : vector<4xf32>
    %126 = vector.multi_reduction <add>, %125, %cst_58 [0] : vector<256x4xf32> to vector<4xf32>
    %127 = vector.shape_cast %126 : vector<4xf32> to vector<1x4xf32>
    %cst_59 = arith.constant 3.906250e-03 : f32
    %128 = vector.broadcast %cst_59 : f32 to vector<1x4xf32>
    %129 = arith.mulf %127, %128 : vector<1x4xf32>
    %130 = arith.mulf %124, %124 : vector<1x4xf32>
    %131 = arith.subf %129, %130 : vector<1x4xf32>
    %cst_60 = arith.constant 0.000000e+00 : f32
    %132 = vector.broadcast %cst_60 : f32 to vector<1x4xf32>
    %133 = arith.maximumf %131, %132 : vector<1x4xf32>
    %134 = vector.broadcast %124 : vector<1x4xf32> to vector<256x4xf32>
    %135 = arith.subf %120, %134 : vector<256x4xf32>
    %cst_61 = arith.constant 9.99999974E-6 : f32
    %136 = vector.broadcast %cst_61 : f32 to vector<1x4xf32>
    %137 = arith.addf %133, %136 : vector<1x4xf32>
    %138 = math.rsqrt %137 : vector<1x4xf32>
    %139 = vector.broadcast %138 : vector<1x4xf32> to vector<256x4xf32>
    %140 = arith.mulf %135, %139 : vector<256x4xf32>
    %141 = vector.extract_strided_slice %1 {offsets = [1, 1, 0], sizes = [16, 16, 4], strides = [1, 1, 1]} : vector<18x18x4xf32> to vector<16x16x4xf32>
    %142 = vector.shape_cast %141 : vector<16x16x4xf32> to vector<256x4xf32>
    %143 = arith.addf %142, %140 : vector<256x4xf32>
    %144 = vector.shape_cast %143 : vector<256x4xf32> to vector<16x16x4xf32>
    %c0_62 = arith.constant 0 : index
    %c0_63 = arith.constant 0 : index
    %c0_64 = arith.constant 0 : index
    %c0_65 = arith.constant 0 : index
    %145 = vector.load %arg4[%c0_62, %c0_63, %c0_64, %c0_65] : memref<1x16x16x4xf32, #tpu.memory_space<vmem>>, vector<1x16x16x4xf32>
    %146 = vector.shape_cast %145 : vector<1x16x16x4xf32> to vector<16x16x4xf32>
    %147 = vector.shape_cast %144 : vector<16x16x4xf32> to vector<1x16x16x4xf32>
    tpu.vector_store %arg4[%c0_62, %c0_63, %c0_64, %c0_65], %147 {strides = array<i32>} : memref<1x16x16x4xf32, #tpu.memory_space<vmem>>, vector<1x16x16x4xf32>,
    return
  }
  func.func @transform_0(%arg0: i32) -> (i32, i32, i32, i32) {
    %c0_i32 = arith.constant 0 : i32
    %c0_i32_0 = arith.constant 0 : i32
    %c0_i32_1 = arith.constant 0 : i32
    %c0_i32_2 = arith.constant 0 : i32
    return %arg0, %c0_i32, %c0_i32_0, %c0_i32_1 : i32, i32, i32, i32
  }
  func.func @transform_1(%arg0: i32) -> (i32, i32) {
    %c0_i32 = arith.constant 0 : i32
    %c0_i32_0 = arith.constant 0 : i32
    %c0_i32_1 = arith.constant 0 : i32
    return %c0_i32, %c0_i32_0 : i32, i32
  }
  func.func @transform_2(%arg0: i32) -> (i32, i32) {
    %c0_i32 = arith.constant 0 : i32
    %c0_i32_0 = arith.constant 0 : i32
    %c0_i32_1 = arith.constant 0 : i32
    return %c0_i32, %c0_i32_0 : i32, i32
  }
  func.func @transform_3(%arg0: i32) -> (i32, i32, i32, i32) {
    %c0_i32 = arith.constant 0 : i32
    %c0_i32_0 = arith.constant 0 : i32
    %c0_i32_1 = arith.constant 0 : i32
    %c0_i32_2 = arith.constant 0 : i32
    return %arg0, %c0_i32, %c0_i32_0, %c0_i32_1 : i32, i32, i32, i32
  }
}

</mosaic_0001>

<llo_original>
// kernel: tpu_custom_call.1
$region0: #{tpu_custom_call.1}
  #allocation0 [shape = 'u32[]', space=smem, size = 0x4, offset = 0x4, fixed_abs, tag = 'smem constant byte address 0x4 - core index']
  #allocation1 [shape = 'u32[144,128]{1,0:T(1,128)}', space=vmem, size = 0x12000, scoped, tag = 'internal scratch']
  %s0 = inlined_call_operand.vmem [shape: f32[2,18,18,4], index: 0, kind: input, shape index: {}]
  %s1 = inlined_call_operand.vmem [shape: f32[36,4], index: 1, kind: input, shape index: {}]
  %s2 = inlined_call_operand.vmem [shape: f32[36,4], index: 2, kind: input, shape index: {}]
  %s3 = inlined_call_operand.vmem [shape: f32[2,16,16,4], index: 3, kind: output, shape index: {}]
  %s4 = sld [smem:[#allocation0]]
  $region45: #{tpu_custom_call.1} parent=0
    _
  %s6 = ssub.s32 1, %s4
  %s7 = scalar_select 0, %s6, %s4
  loop: start=0, step=1, limit=4
  $region2: #{tpu_custom_call.1} parent=0 // loop_pre_header
    _
  $region3: #{tpu_custom_call.1} parent=0 // loop_header
    %s9 = sphi 0, %s13
    %p10 = scmp.ge.s32.totalorder %s9, 4
    %s19 = sphi 0, %s21
    %s22 = sphi 0, %s19
    %s23 = sphi 0, %s22
    %s39 = sphi 0, %s23
    %s43 = sphi 0, %s43
    %s45 = sphi 0, %s43
    %s46 = sphi 0, %s45
    %s60 = sphi 0, %s46
    %s64 = sphi 0, %s64
    %s66 = sphi 0, %s64
    %s67 = sphi 0, %s66
    %s81 = sphi 0, %s67
    %s87 = sphi 0, %s89
    %s90 = sphi 0, %s87
    %s91 = sphi 0, %s90
    %s107 = sphi 0, %s91
  $region4: #{tpu_custom_call.1} parent=0 // loop_header_branch
    %12 = sbr.rel (%p10) target = $region8
  $region5: #{tpu_custom_call.1} parent=0 // loop_body
    %s14 = ssub.s32 %s9, 1
    %s15 = ssub.s32 %s9, 2
    %s16 = sadd.s32 %s9, 1
    %s17 = ssub.s32 %s9, %s16
    %p18 = scmp.eq.s32.totalorder %s17, 0
    %s20 = sadd.s32 %s19, 1
    %s21 = scalar_select %p18, %s19, %s20
    %p24 = pneg %p18
    %p25 = scmp.eq.s32.totalorder %s9, 1
    %p26 = por %p24, %p25
    %p27 = scmp.ne.s32.totalorder %s19, %s22
    %p28 = scmp.eq.s32.totalorder %s9, 0
    %p29 = por %p27, %p28
    %p30 = scmp.ne.s32.totalorder %s19, %s22
    %p31 = scmp.eq.s32.totalorder %s14, 1
    %p32 = por %p30, %p31
    %p33 = scmp.ne.s32.totalorder %s22, %s23
    %p34 = scmp.eq.s32.totalorder %s14, 0
    %p35 = por %p33, %p34
    %p36 = scmp.ne.s32.totalorder %s22, %s23
    %p37 = scmp.eq.s32.totalorder %s15, 1
    %p38 = por %p36, %p37
    %p40 = scmp.ne.s32.totalorder %s23, %s39
    %p41 = scmp.eq.s32.totalorder %s15, 0
    %p42 = por %p40, %p41
    %s44 = sadd.s32 %s43, 1
    %p47 = scmp.eq.s32.totalorder %s9, 1
    %p48 = scmp.ne.s32.totalorder %s43, %s45
    %p49 = scmp.eq.s32.totalorder %s9, 0
    %p50 = por %p48, %p49
    %p51 = scmp.ne.s32.totalorder %s43, %s45
    %p52 = scmp.eq.s32.totalorder %s14, 1
    %p53 = por %p51, %p52
    %p54 = scmp.ne.s32.totalorder %s45, %s46
    %p55 = scmp.eq.s32.totalorder %s14, 0
    %p56 = por %p54, %p55
    %p57 = scmp.ne.s32.totalorder %s45, %s46
    %p58 = scmp.eq.s32.totalorder %s15, 1
    %p59 = por %p57, %p58
    %p61 = scmp.ne.s32.totalorder %s46, %s60
    %p62 = scmp.eq.s32.totalorder %s15, 0
    %p63 = por %p61, %p62
    %s65 = sadd.s32 %s64, 1
    %p68 = scmp.eq.s32.totalorder %s9, 1
    %p69 = scmp.ne.s32.totalorder %s64, %s66
    %p70 = scmp.eq.s32.totalorder %s9, 0
    %p71 = por %p69, %p70
    %p72 = scmp.ne.s32.totalorder %s64, %s66
    %p73 = scmp.eq.s32.totalorder %s14, 1
    %p74 = por %p72, %p73
    %p75 = scmp.ne.s32.totalorder %s66, %s67
    %p76 = scmp.eq.s32.totalorder %s14, 0
    %p77 = por %p75, %p76
    %p78 = scmp.ne.s32.totalorder %s66, %s67
    %p79 = scmp.eq.s32.totalorder %s15, 1
    %p80 = por %p78, %p79
    %p82 = scmp.ne.s32.totalorder %s67, %s81
    %p83 = scmp.eq.s32.totalorder %s15, 0
    %p84 = por %p82, %p83
    %s85 = ssub.s32 %s9, %s16
    %p86 = scmp.eq.s32.totalorder %s85, 0
    %s88 = sadd.s32 %s87, 1
    %s89 = scalar_select %p86, %s87, %s88
    %p92 = pneg %p86
    %p93 = scmp.eq.s32.totalorder %s9, 1
    %p94 = por %p92, %p93
    %p95 = scmp.ne.s32.totalorder %s87, %s90
    %p96 = scmp.eq.s32.totalorder %s9, 0
    %p97 = por %p95, %p96
    %p98 = scmp.ne.s32.totalorder %s87, %s90
    %p99 = scmp.eq.s32.totalorder %s14, 1
    %p100 = por %p98, %p99
    %p101 = scmp.ne.s32.totalorder %s90, %s91
    %p102 = scmp.eq.s32.totalorder %s14, 0
    %p103 = por %p101, %p102
    %p104 = scmp.ne.s32.totalorder %s90, %s91
    %p105 = scmp.eq.s32.totalorder %s15, 1
    %p106 = por %p104, %p105
    %p108 = scmp.ne.s32.totalorder %s91, %s107
    %p109 = scmp.eq.s32.totalorder %s15, 0
    %p110 = por %p108, %p109
    %p111 = scmp.le.s32.totalorder 1, %s9
    %p112 = scmp.lt.s32.totalorder %s9, 3
    %p113 = pnand %p111, %p112
    %p114 = pneg %p113
    // Predicated region
    $region9: #{tpu_custom_call.1} parent=5 // pred_check
      _
    $region10: #{tpu_custom_call.1} parent=5 // pred_check_branch
      %116 = sbr.rel (%p113) target = $region12
    $region11: #{tpu_custom_call.1} parent=5 // pred_region
      %s117 = ssub.s32 %s9, 1
      // Predicated region
      $region13: #{tpu_custom_call.1} parent=11 // pred_check
        %p118 = pneg %p56
      $region14: #{tpu_custom_call.1} parent=11 // pred_check_branch
        %120 = sbr.rel (%p118) target = $region16
      $region15: #{tpu_custom_call.1} parent=11 // pred_region
        _
      $region16: #{tpu_custom_call.1} parent=11 // pred_fallthru
        _
      // Predicated region
      $region17: #{tpu_custom_call.1} parent=11 // pred_check
        %p121 = pneg %p77
      $region18: #{tpu_custom_call.1} parent=11 // pred_check_branch
        %123 = sbr.rel (%p121) target = $region20
      $region19: #{tpu_custom_call.1} parent=11 // pred_region
        _
      $region20: #{tpu_custom_call.1} parent=11 // pred_fallthru
        _
    $region12: #{tpu_custom_call.1} parent=5 // pred_fallthru
      _
    %p124 = scmp.lt.s32.totalorder %s9, 2
    // Predicated region
    $region21: #{tpu_custom_call.1} parent=5 // pred_check
      %p125 = pneg %p124
    $region22: #{tpu_custom_call.1} parent=5 // pred_check_branch
      %127 = sbr.rel (%p125) target = $region24
    $region23: #{tpu_custom_call.1} parent=5 // pred_region
      // Predicated region
      $region25: #{tpu_custom_call.1} parent=23 // pred_check
        %p128 = pneg %p29
      $region26: #{tpu_custom_call.1} parent=23 // pred_check_branch
        %130 = sbr.rel (%p128) target = $region28
      $region27: #{tpu_custom_call.1} parent=23 // pred_region
        %p131 = scmp.lt.s32.totalorder %s9, 1
        %s132 = scalar_select %p131, %s9, 1
        %s133 = smul.addr %s132, 54
        %s134 = smul.addr %s133, 8
        %s135 = scalar_lea.vmem %s0, %s134
      $region28: #{tpu_custom_call.1} parent=23 // pred_fallthru
        _
    $region24: #{tpu_custom_call.1} parent=5 // pred_fallthru
      _
    %p136 = scmp.le.s32.totalorder 1, %s9
    %p137 = scmp.lt.s32.totalorder %s9, 3
    %p138 = pnand %p136, %p137
    %p139 = pneg %p138
    // Predicated region
    $region29: #{tpu_custom_call.1} parent=5 // pred_check
      _
    $region30: #{tpu_custom_call.1} parent=5 // pred_check_branch
      %141 = sbr.rel (%p138) target = $region32
    $region31: #{tpu_custom_call.1} parent=5 // pred_region
      %s142 = ssub.s32 %s9, 1
      %p143 = scmp.lt.s32.totalorder %s14, 1
      %s144 = scalar_select %p143, %s14, 1
      %s145 = smul.addr %s144, 54
      %s146 = smul.addr %s145, 8
      %s147 = scalar_lea.vmem %s0, %s146
      %p148 = pneg %p35
      %p149 = pneg %p32
      %p150 = pneg %p56
      %p151 = pneg %p53
      %p152 = pneg %p77
      %p153 = pneg %p74
      %p154 = pneg %p103
      %p155 = pneg %p100
      %p156 = scmp.lt.s32.totalorder %s14, 1
      %s157 = scalar_select %p156, %s14, 1
      %s158 = smul.addr %s157, 32
      %s159 = smul.addr %s158, 8
      %s160 = scalar_lea.vmem %s3, %s159
      %p161 = scmp.lt.s32.totalorder %s14, 1
      %s162 = scalar_select %p161, %s14, 1
      %s163 = smul.addr %s162, 54
      %s164 = smul.addr %s163, 8
      %s165 = scalar_lea.vmem %s0, %s164
      %p166 = scmp.lt.s32.totalorder %s14, 1
      %s167 = scalar_select %p166, %s14, 1
      %s168 = smul.addr %s167, 32
      %s169 = smul.addr %s168, 8
      %s170 = scalar_lea.vmem %s3, %s169
      %v171 = vld [vmem:[%s165] sm:$0xff]
      %v172 = vld [vmem:[%s165 + $0x8] sm:$0xff]
      %v173 = vld [vmem:[%s165 + $0x10] sm:$0x3]
      %v174 = vld [vmem:[%s165 + $0x18] sm:$0xff]
      %v175 = vld [vmem:[%s165 + $0x20] sm:$0xff]
      %v176 = vld [vmem:[%s165 + $0x28] sm:$0x3]
      %v177 = vld [vmem:[%s165 + $0x30] sm:$0xff]
      %v178 = vld [vmem:[%s165 + $0x38] sm:$0xff]
      %v179 = vld [vmem:[%s165 + $0x40] sm:$0x3]
      %v180 = vld [vmem:[%s165 + $0x48] sm:$0xff]
      %v181 = vld [vmem:[%s165 + $0x50] sm:$0xff]
      %v182 = vld [vmem:[%s165 + $0x58] sm:$0x3]
      %v183 = vld [vmem:[%s165 + $0x60] sm:$0xff]
      %v184 = vld [vmem:[%s165 + $0x68] sm:$0xff]
      %v185 = vld [vmem:[%s165 + $0x70] sm:$0x3]
      %v186 = vld [vmem:[%s165 + $0x78] sm:$0xff]
      %v187 = vld [vmem:[%s165 + $0x80] sm:$0xff]
      %v188 = vld [vmem:[%s165 + $0x88] sm:$0x3]
      %v189 = vld [vmem:[%s165 + $0x90] sm:$0xff]
      %v190 = vld [vmem:[%s165 + $0x98] sm:$0xff]
      %v191 = vld [vmem:[%s165 + $0xa0] sm:$0x3]
      %v192 = vld [vmem:[%s165 + $0xa8] sm:$0xff]
      %v193 = vld [vmem:[%s165 + $0xb0] sm:$0xff]
      %v194 = vld [vmem:[%s165 + $0xb8] sm:$0x3]
      %v195 = vld [vmem:[%s165 + $0xc0] sm:$0xff]
      %v196 = vld [vmem:[%s165 + $0xc8] sm:$0xff]
      %v197 = vld [vmem:[%s165 + $0xd0] sm:$0x3]
      %v198 = vld [vmem:[%s165 + $0xd8] sm:$0xff]
      %v199 = vld [vmem:[%s165 + $0xe0] sm:$0xff]
      %v200 = vld [vmem:[%s165 + $0xe8] sm:$0x3]
      %v201 = vld [vmem:[%s165 + $0xf0] sm:$0xff]
      %v202 = vld [vmem:[%s165 + $0xf8] sm:$0xff]
      %v203 = vld [vmem:[%s165 + $0x100] sm:$0x3]
      %v204 = vld [vmem:[%s165 + $0x108] sm:$0xff]
      %v205 = vld [vmem:[%s165 + $0x110] sm:$0xff]
      %v206 = vld [vmem:[%s165 + $0x118] sm:$0x3]
      %v207 = vld [vmem:[%s165 + $0x120] sm:$0xff]
      %v208 = vld [vmem:[%s165 + $0x128] sm:$0xff]
      %v209 = vld [vmem:[%s165 + $0x130] sm:$0x3]
      %v210 = vld [vmem:[%s165 + $0x138] sm:$0xff]
      %v211 = vld [vmem:[%s165 + $0x140] sm:$0xff]
      %v212 = vld [vmem:[%s165 + $0x148] sm:$0x3]
      %v213 = vld [vmem:[%s165 + $0x150] sm:$0xff]
      %v214 = vld [vmem:[%s165 + $0x158] sm:$0xff]
      %v215 = vld [vmem:[%s165 + $0x160] sm:$0x3]
      %v216 = vld [vmem:[%s165 + $0x168] sm:$0xff]
      %v217 = vld [vmem:[%s165 + $0x170] sm:$0xff]
      %v218 = vld [vmem:[%s165 + $0x178] sm:$0x3]
      %v219 = vld [vmem:[%s165 + $0x180] sm:$0xff]
      %v220 = vld [vmem:[%s165 + $0x188] sm:$0xff]
      %v221 = vld [vmem:[%s165 + $0x190] sm:$0x3]
      %v222 = vld [vmem:[%s165 + $0x198] sm:$0xff]
      %v223 = vld [vmem:[%s165 + $0x1a0] sm:$0xff]
      %v224 = vld [vmem:[%s165 + $0x1a8] sm:$0x3]
      %v225 = vld [vmem:[%s1] sm:$0xf]
      %vm274 = vcmask 1046528
      %v275 = vrot.slane %v171, 1
      %v276 = vrot.slane %v172, 1
      %v277 = vsel %vm274, %v275, %v276
      %v278 = vrot.slane %v173, 1
      %v279 = vsel %vm274, %v276, %v278
      %v280 = vrot.slane %v174, 1
      %v281 = vrot.slane %v175, 1
      %v282 = vsel %vm274, %v280, %v281
      %v283 = vrot.slane %v176, 1
      %v284 = vsel %vm274, %v281, %v283
      %v285 = vrot.slane %v177, 1
      %v286 = vrot.slane %v178, 1
      %v287 = vsel %vm274, %v285, %v286
      %v288 = vrot.slane %v179, 1
      %v289 = vsel %vm274, %v286, %v288
      %v290 = vrot.slane %v180, 1
      %v291 = vrot.slane %v181, 1
      %v292 = vsel %vm274, %v290, %v291
      %v293 = vrot.slane %v182, 1
      %v294 = vsel %vm274, %v291, %v293
      %v295 = vrot.slane %v183, 1
      %v296 = vrot.slane %v184, 1
      %v297 = vsel %vm274, %v295, %v296
      %v298 = vrot.slane %v185, 1
      %v299 = vsel %vm274, %v296, %v298
      %v300 = vrot.slane %v186, 1
      %v301 = vrot.slane %v187, 1
      %v302 = vsel %vm274, %v300, %v301
      %v303 = vrot.slane %v188, 1
      %v304 = vsel %vm274, %v301, %v303
      %v305 = vrot.slane %v189, 1
      %v306 = vrot.slane %v190, 1
      %v307 = vsel %vm274, %v305, %v306
      %v308 = vrot.slane %v191, 1
      %v309 = vsel %vm274, %v306, %v308
      %v310 = vrot.slane %v192, 1
      %v311 = vrot.slane %v193, 1
      %v312 = vsel %vm274, %v310, %v311
      %v313 = vrot.slane %v194, 1
      %v314 = vsel %vm274, %v311, %v313
      %v315 = vrot.slane %v195, 1
      %v316 = vrot.slane %v196, 1
      %v317 = vsel %vm274, %v315, %v316
      %v318 = vrot.slane %v197, 1
      %v319 = vsel %vm274, %v316, %v318
      %v320 = vrot.slane %v198, 1
      %v321 = vrot.slane %v199, 1
      %v322 = vsel %vm274, %v320, %v321
      %v323 = vrot.slane %v200, 1
      %v324 = vsel %vm274, %v321, %v323
      %v325 = vrot.slane %v201, 1
      %v326 = vrot.slane %v202, 1
      %v327 = vsel %vm274, %v325, %v326
      %v328 = vrot.slane %v203, 1
      %v329 = vsel %vm274, %v326, %v328
      %v330 = vrot.slane %v204, 1
      %v331 = vrot.slane %v205, 1
      %v332 = vsel %vm274, %v330, %v331
      %v333 = vrot.slane %v206, 1
      %v334 = vsel %vm274, %v331, %v333
      %v335 = vrot.slane %v207, 1
      %v336 = vrot.slane %v208, 1
      %v337 = vsel %vm274, %v335, %v336
      %v338 = vrot.slane %v209, 1
      %v339 = vsel %vm274, %v336, %v338
      %v340 = vrot.slane %v210, 1
      %v341 = vrot.slane %v211, 1
      %v342 = vsel %vm274, %v340, %v341
      %v343 = vrot.slane %v212, 1
      %v344 = vsel %vm274, %v341, %v343
      %v345 = vrot.slane %v213, 1
      %v346 = vrot.slane %v214, 1
      %v347 = vsel %vm274, %v345, %v346
      %v348 = vrot.slane %v215, 1
      %v349 = vsel %vm274, %v346, %v348
      %v350 = vrot.slane %v216, 1
      %v351 = vrot.slane %v217, 1
      %v352 = vsel %vm274, %v350, %v351
      %v353 = vrot.slane %v218, 1
      %v354 = vsel %vm274, %v351, %v353
      %v355 = vld [vmem:[%s1 + $0x4] sm:$0xf]
      %vm356 = vcmask 31744
      %v357 = vsel %vm356, %v277, 0
      %v359 = vsel %vm356, %v279, 0
      %v361 = vsel %vm356, %v282, 0
      %v363 = vsel %vm356, %v284, 0
      %v365 = vsel %vm356, %v287, 0
      %v367 = vsel %vm356, %v289, 0
      %v369 = vsel %vm356, %v292, 0
      %v371 = vsel %vm356, %v294, 0
      %v373 = vsel %vm356, %v297, 0
      %v375 = vsel %vm356, %v299, 0
      %v377 = vsel %vm356, %v302, 0
      %v379 = vsel %vm356, %v304, 0
      %v381 = vsel %vm356, %v307, 0
      %v383 = vsel %vm356, %v309, 0
      %v385 = vsel %vm356, %v312, 0
      %v387 = vsel %vm356, %v314, 0
      %v389 = vsel %vm356, %v317, 0
      %v391 = vsel %vm356, %v319, 0
      %v393 = vsel %vm356, %v322, 0
      %v395 = vsel %vm356, %v324, 0
      %v397 = vsel %vm356, %v327, 0
      %v399 = vsel %vm356, %v329, 0
      %v401 = vsel %vm356, %v332, 0
      %v403 = vsel %vm356, %v334, 0
      %v405 = vsel %vm356, %v337, 0
      %v407 = vsel %vm356, %v339, 0
      %v409 = vsel %vm356, %v342, 0
      %v411 = vsel %vm356, %v344, 0
      %v413 = vsel %vm356, %v347, 0
      %v415 = vsel %vm356, %v349, 0
      %v417 = vsel %vm356, %v352, 0
      %v419 = vsel %vm356, %v354, 0
      %vm421 = vcmask 1043456
      %v423 = vsel %vm421, %v355, 0
      %425 = vmatprep.subr.mxu0 0.0
      %426 = vmatpush1.msra.mxu0 0.0
      %427 = vmatprep.subr.mxu0 0.0
      %428 = vmatpush1.msra.mxu0 0.0
      %429 = vmatprep.subr.mxu0 0.0
      %430 = vmatpush1.msra.mxu0 0.0
      %431 = vmatprep.subr.mxu0 0.0
      %432 = vmatpush1.msra.mxu0 0.0
      %433 = vmatprep.subr.mxu0 0.0
      %434 = vmatpush1.msra.mxu0 0.0
      %435 = vmatprep.subr.mxu0 0.0
      %436 = vmatpush1.msra.mxu0 0.0
      %437 = vmatprep.subr.mxu0 0.0
      %438 = vmatpush1.msra.mxu0 0.0
      %439 = vmatprep.subr.mxu0 0.0
      %440 = vmatpush1.msra.mxu0 0.0
      %441 = vmatprep.subr.mxu0 0.0
      %442 = vmatpush1.msra.mxu0 0.0
      %443 = vmatprep.subr.mxu0 0.0
      %444 = vmatpush1.msra.mxu0 0.0
      %445 = vmatprep.subr.mxu0 0.0
      %446 = vmatpush1.msra.mxu0 0.0
      %447 = vmatprep.subr.mxu0 0.0
      %448 = vmatpush1.msra.mxu0 0.0
      %449 = vmatprep.subr.mxu0 0.0
      %450 = vmatpush1.msra.mxu0 0.0
      %451 = vmatprep.subr.mxu0 0.0
      %452 = vmatpush1.msra.mxu0 0.0
      %453 = vmatprep.subr.mxu0 0.0
      %454 = vmatpush1.msra.mxu0 0.0
      %455 = vmatprep.subr.mxu0 0.0
      %456 = vmatpush1.msra.mxu0 %v423
      %457 = vmatprep.subr.mxu0 0.0
      %458 = vmatpush2.msra.mxu0 0.0
      %459 = vmatprep.subr.mxu0 0.0
      %460 = vmatpush2.msra.mxu0 0.0
      %461 = vmatprep.subr.mxu0 0.0
      %462 = vmatpush2.msra.mxu0 0.0
      %463 = vmatprep.subr.mxu0 0.0
      %464 = vmatpush2.msra.mxu0 0.0
      %465 = vmatprep.subr.mxu0 0.0
      %466 = vmatpush2.msra.mxu0 0.0
      %467 = vmatprep.subr.mxu0 0.0
      %468 = vmatpush2.msra.mxu0 0.0
      %469 = vmatprep.subr.mxu0 0.0
      %470 = vmatpush2.msra.mxu0 0.0
      %471 = vmatprep.subr.mxu0 0.0
      %472 = vmatpush2.msra.mxu0 0.0
      %473 = vmatprep.subr.mxu0 0.0
      %474 = vmatpush2.msra.mxu0 0.0
      %475 = vmatprep.subr.mxu0 0.0
      %476 = vmatpush2.msra.mxu0 0.0
      %477 = vmatprep.subr.mxu0 0.0
      %478 = vmatpush2.msra.mxu0 0.0
      %479 = vmatprep.subr.mxu0 0.0
      %480 = vmatpush2.msra.mxu0 0.0
      %481 = vmatprep.subr.mxu0 0.0
      %482 = vmatpush2.msra.mxu0 0.0
      %483 = vmatprep.subr.mxu0 0.0
      %484 = vmatpush2.msra.mxu0 0.0
      %485 = vmatprep.subr.mxu0 0.0
      %486 = vmatpush2.msra.mxu0 0.0
      %487 = vmatprep.subr.mxu0 0.0
      %488 = vmatpush2.msra.mxu0 0.0
      %489 = vmatprep.mubr.f32.mxu0 0.0
      %490 = vmatmul.mubr.f32.gmra.mxu0 %v357
      %v491 = vpop.f32.mrf.mxu0
      %v492 = vadd.f32 0.0, %v491
      %v493 = vpop.f32.mrf.mxu0
      %494 = vmatprep.mubr.f32.mxu0 0.0
      %495 = vmatmul.mubr.f32.gmra.mxu0 %v359
      %v496 = vpop.f32.mrf.mxu0
      %v497 = vadd.f32 0.0, %v496
      %v498 = vpop.f32.mrf.mxu0
      %499 = vmatprep.mubr.f32.mxu0 0.0
      %500 = vmatmul.mubr.f32.gmra.mxu0 %v361
      %v501 = vpop.f32.mrf.mxu0
      %v502 = vadd.f32 0.0, %v501
      %v503 = vpop.f32.mrf.mxu0
      %504 = vmatprep.mubr.f32.mxu0 0.0
      %505 = vmatmul.mubr.f32.gmra.mxu0 %v363
      %v506 = vpop.f32.mrf.mxu0
      %v507 = vadd.f32 0.0, %v506
      %v508 = vpop.f32.mrf.mxu0
      %509 = vmatprep.mubr.f32.mxu0 0.0
      %510 = vmatmul.mubr.f32.gmra.mxu0 %v365
      %v511 = vpop.f32.mrf.mxu0
      %v512 = vadd.f32 0.0, %v511
      %v513 = vpop.f32.mrf.mxu0
      %514 = vmatprep.mubr.f32.mxu0 0.0
      %515 = vmatmul.mubr.f32.gmra.mxu0 %v367
      %v516 = vpop.f32.mrf.mxu0
      %v517 = vadd.f32 0.0, %v516
      %v518 = vpop.f32.mrf.mxu0
      %519 = vmatprep.mubr.f32.mxu0 0.0
      %520 = vmatmul.mubr.f32.gmra.mxu0 %v369
      %v521 = vpop.f32.mrf.mxu0
      %v522 = vadd.f32 0.0, %v521
      %v523 = vpop.f32.mrf.mxu0
      %524 = vmatprep.mubr.f32.mxu0 0.0
      %525 = vmatmul.mubr.f32.gmra.mxu0 %v371
      %v526 = vpop.f32.mrf.mxu0
      %v527 = vadd.f32 0.0, %v526
      %v528 = vpop.f32.mrf.mxu0
      %529 = vmatprep.mubr.f32.mxu0 0.0
      %530 = vmatmul.mubr.f32.gmra.mxu0 %v373
      %v531 = vpop.f32.mrf.mxu0
      %v532 = vadd.f32 0.0, %v531
      %v533 = vpop.f32.mrf.mxu0
      %534 = vmatprep.mubr.f32.mxu0 0.0
      %535 = vmatmul.mubr.f32.gmra.mxu0 %v375
      %v536 = vpop.f32.mrf.mxu0
      %v537 = vadd.f32 0.0, %v536
      %v538 = vpop.f32.mrf.mxu0
      %539 = vmatprep.mubr.f32.mxu0 0.0
      %540 = vmatmul.mubr.f32.gmra.mxu0 %v377
      %v541 = vpop.f32.mrf.mxu0
      %v542 = vadd.f32 0.0, %v541
      %v543 = vpop.f32.mrf.mxu0
      %544 = vmatprep.mubr.f32.mxu0 0.0
      %545 = vmatmul.mubr.f32.gmra.mxu0 %v379
      %v546 = vpop.f32.mrf.mxu0
      %v547 = vadd.f32 0.0, %v546
      %v548 = vpop.f32.mrf.mxu0
      %549 = vmatprep.mubr.f32.mxu0 0.0
      %550 = vmatmul.mubr.f32.gmra.mxu0 %v381
      %v551 = vpop.f32.mrf.mxu0
      %v552 = vadd.f32 0.0, %v551
      %v553 = vpop.f32.mrf.mxu0
      %554 = vmatprep.mubr.f32.mxu0 0.0
      %555 = vmatmul.mubr.f32.gmra.mxu0 %v383
      %v556 = vpop.f32.mrf.mxu0
      %v557 = vadd.f32 0.0, %v556
      %v558 = vpop.f32.mrf.mxu0
      %559 = vmatprep.mubr.f32.mxu0 0.0
      %560 = vmatmul.mubr.f32.gmra.mxu0 %v385
      %v561 = vpop.f32.mrf.mxu0
      %v562 = vadd.f32 0.0, %v561
      %v563 = vpop.f32.mrf.mxu0
      %564 = vmatprep.mubr.f32.mxu0 0.0
      %565 = vmatmul.mubr.f32.gmra.mxu0 %v387
      %v566 = vpop.f32.mrf.mxu0
      %v567 = vadd.f32 0.0, %v566
      %v568 = vpop.f32.mrf.mxu0
      %569 = vmatprep.mubr.f32.mxu0 0.0
      %570 = vmatmul.mubr.f32.gmra.mxu0 %v389
      %v571 = vpop.f32.mrf.mxu0
      %v572 = vadd.f32 0.0, %v571
      %v573 = vpop.f32.mrf.mxu0
      %574 = vmatprep.mubr.f32.mxu0 0.0
      %575 = vmatmul.mubr.f32.gmra.mxu0 %v391
      %v576 = vpop.f32.mrf.mxu0
      %v577 = vadd.f32 0.0, %v576
      %v578 = vpop.f32.mrf.mxu0
      %579 = vmatprep.mubr.f32.mxu0 0.0
      %580 = vmatmul.mubr.f32.gmra.mxu0 %v393
      %v581 = vpop.f32.mrf.mxu0
      %v582 = vadd.f32 0.0, %v581
      %v583 = vpop.f32.mrf.mxu0
      %584 = vmatprep.mubr.f32.mxu0 0.0
      %585 = vmatmul.mubr.f32.gmra.mxu0 %v395
      %v586 = vpop.f32.mrf.mxu0
      %v587 = vadd.f32 0.0, %v586
      %v588 = vpop.f32.mrf.mxu0
      %589 = vmatprep.mubr.f32.mxu0 0.0
      %590 = vmatmul.mubr.f32.gmra.mxu0 %v397
      %v591 = vpop.f32.mrf.mxu0
      %v592 = vadd.f32 0.0, %v591
      %v593 = vpop.f32.mrf.mxu0
      %594 = vmatprep.mubr.f32.mxu0 0.0
      %595 = vmatmul.mubr.f32.gmra.mxu0 %v399
      %v596 = vpop.f32.mrf.mxu0
      %v597 = vadd.f32 0.0, %v596
      %v598 = vpop.f32.mrf.mxu0
      %599 = vmatprep.mubr.f32.mxu0 0.0
      %600 = vmatmul.mubr.f32.gmra.mxu0 %v401
      %v601 = vpop.f32.mrf.mxu0
      %v602 = vadd.f32 0.0, %v601
      %v603 = vpop.f32.mrf.mxu0
      %604 = vmatprep.mubr.f32.mxu0 0.0
      %605 = vmatmul.mubr.f32.gmra.mxu0 %v403
      %v606 = vpop.f32.mrf.mxu0
      %v607 = vadd.f32 0.0, %v606
      %v608 = vpop.f32.mrf.mxu0
      %609 = vmatprep.mubr.f32.mxu0 0.0
      %610 = vmatmul.mubr.f32.gmra.mxu0 %v405
      %v611 = vpop.f32.mrf.mxu0
      %v612 = vadd.f32 0.0, %v611
      %v613 = vpop.f32.mrf.mxu0
      %614 = vmatprep.mubr.f32.mxu0 0.0
      %615 = vmatmul.mubr.f32.gmra.mxu0 %v407
      %v616 = vpop.f32.mrf.mxu0
      %v617 = vadd.f32 0.0, %v616
      %v618 = vpop.f32.mrf.mxu0
      %619 = vmatprep.mubr.f32.mxu0 0.0
      %620 = vmatmul.mubr.f32.gmra.mxu0 %v409
      %v621 = vpop.f32.mrf.mxu0
      %v622 = vadd.f32 0.0, %v621
      %v623 = vpop.f32.mrf.mxu0
      %624 = vmatprep.mubr.f32.mxu0 0.0
      %625 = vmatmul.mubr.f32.gmra.mxu0 %v411
      %v626 = vpop.f32.mrf.mxu0
      %v627 = vadd.f32 0.0, %v626
      %v628 = vpop.f32.mrf.mxu0
      %629 = vmatprep.mubr.f32.mxu0 0.0
      %630 = vmatmul.mubr.f32.gmra.mxu0 %v413
      %v631 = vpop.f32.mrf.mxu0
      %v632 = vadd.f32 0.0, %v631
      %v633 = vpop.f32.mrf.mxu0
      %634 = vmatprep.mubr.f32.mxu0 0.0
      %635 = vmatmul.mubr.f32.gmra.mxu0 %v415
      %v636 = vpop.f32.mrf.mxu0
      %v637 = vadd.f32 0.0, %v636
      %v638 = vpop.f32.mrf.mxu0
      %639 = vmatprep.mubr.f32.mxu0 0.0
      %640 = vmatmul.mubr.f32.gmra.mxu0 %v417
      %v641 = vpop.f32.mrf.mxu0
      %v642 = vadd.f32 0.0, %v641
      %v643 = vpop.f32.mrf.mxu0
      %644 = vmatprep.mubr.f32.mxu0 0.0
      %645 = vmatmul.mubr.f32.gmra.mxu0 %v419
      %v646 = vpop.f32.mrf.mxu0
      %v647 = vadd.f32 0.0, %v646
      %v648 = vpop.f32.mrf.mxu0
      %649 = vdwg.mxu0
      %v650 = vsel %vm356, %v171, 0
      %v652 = vsel %vm356, %v172, 0
      %v654 = vsel %vm356, %v174, 0
      %v656 = vsel %vm356, %v175, 0
      %v658 = vsel %vm356, %v177, 0
      %v660 = vsel %vm356, %v178, 0
      %v662 = vsel %vm356, %v180, 0
      %v664 = vsel %vm356, %v181, 0
      %v666 = vsel %vm356, %v183, 0
      %v668 = vsel %vm356, %v184, 0
      %v670 = vsel %vm356, %v186, 0
      %v672 = vsel %vm356, %v187, 0
      %v674 = vsel %vm356, %v189, 0
      %v676 = vsel %vm356, %v190, 0
      %v678 = vsel %vm356, %v192, 0
      %v680 = vsel %vm356, %v193, 0
      %v682 = vsel %vm356, %v195, 0
      %v684 = vsel %vm356, %v196, 0
      %v686 = vsel %vm356, %v198, 0
      %v688 = vsel %vm356, %v199, 0
      %v690 = vsel %vm356, %v201, 0
      %v692 = vsel %vm356, %v202, 0
      %v694 = vsel %vm356, %v204, 0
      %v696 = vsel %vm356, %v205, 0
      %v698 = vsel %vm356, %v207, 0
      %v700 = vsel %vm356, %v208, 0
      %v702 = vsel %vm356, %v210, 0
      %v704 = vsel %vm356, %v211, 0
      %v706 = vsel %vm356, %v213, 0
      %v708 = vsel %vm356, %v214, 0
      %v710 = vsel %vm356, %v216, 0
      %v712 = vsel %vm356, %v217, 0
      %v715 = vsel %vm421, %v225, 0
      %717 = vmatprep.subr.mxu0 0.0
      %718 = vmatpush1.msra.mxu0 0.0
      %719 = vmatprep.subr.mxu0 0.0
      %720 = vmatpush1.msra.mxu0 0.0
      %721 = vmatprep.subr.mxu0 0.0
      %722 = vmatpush1.msra.mxu0 0.0
      %723 = vmatprep.subr.mxu0 0.0
      %724 = vmatpush1.msra.mxu0 0.0
      %725 = vmatprep.subr.mxu0 0.0
      %726 = vmatpush1.msra.mxu0 0.0
      %727 = vmatprep.subr.mxu0 0.0
      %728 = vmatpush1.msra.mxu0 0.0
      %729 = vmatprep.subr.mxu0 0.0
      %730 = vmatpush1.msra.mxu0 0.0
      %731 = vmatprep.subr.mxu0 0.0
      %732 = vmatpush1.msra.mxu0 0.0
      %733 = vmatprep.subr.mxu0 0.0
      %734 = vmatpush1.msra.mxu0 0.0
      %735 = vmatprep.subr.mxu0 0.0
      %736 = vmatpush1.msra.mxu0 0.0
      %737 = vmatprep.subr.mxu0 0.0
      %738 = vmatpush1.msra.mxu0 0.0
      %739 = vmatprep.subr.mxu0 0.0
      %740 = vmatpush1.msra.mxu0 0.0
      %741 = vmatprep.subr.mxu0 0.0
      %742 = vmatpush1.msra.mxu0 0.0
      %743 = vmatprep.subr.mxu0 0.0
      %744 = vmatpush1.msra.mxu0 0.0
      %745 = vmatprep.subr.mxu0 0.0
      %746 = vmatpush1.msra.mxu0 0.0
      %747 = vmatprep.subr.mxu0 0.0
      %748 = vmatpush1.msra.mxu0 %v715
      %749 = vmatprep.subr.mxu0 0.0
      %750 = vmatpush2.msra.mxu0 0.0
      %751 = vmatprep.subr.mxu0 0.0
      %752 = vmatpush2.msra.mxu0 0.0
      %753 = vmatprep.subr.mxu0 0.0
      %754 = vmatpush2.msra.mxu0 0.0
      %755 = vmatprep.subr.mxu0 0.0
      %756 = vmatpush2.msra.mxu0 0.0
      %757 = vmatprep.subr.mxu0 0.0
      %758 = vmatpush2.msra.mxu0 0.0
      %759 = vmatprep.subr.mxu0 0.0
      %760 = vmatpush2.msra.mxu0 0.0
      %761 = vmatprep.subr.mxu0 0.0
      %762 = vmatpush2.msra.mxu0 0.0
      %763 = vmatprep.subr.mxu0 0.0
      %764 = vmatpush2.msra.mxu0 0.0
      %765 = vmatprep.subr.mxu0 0.0
      %766 = vmatpush2.msra.mxu0 0.0
      %767 = vmatprep.subr.mxu0 0.0
      %768 = vmatpush2.msra.mxu0 0.0
      %769 = vmatprep.subr.mxu0 0.0
      %770 = vmatpush2.msra.mxu0 0.0
      %771 = vmatprep.subr.mxu0 0.0
      %772 = vmatpush2.msra.mxu0 0.0
      %773 = vmatprep.subr.mxu0 0.0
      %774 = vmatpush2.msra.mxu0 0.0
      %775 = vmatprep.subr.mxu0 0.0
      %776 = vmatpush2.msra.mxu0 0.0
      %777 = vmatprep.subr.mxu0 0.0
      %778 = vmatpush2.msra.mxu0 0.0
      %779 = vmatprep.subr.mxu0 0.0
      %780 = vmatpush2.msra.mxu0 0.0
      %781 = vmatprep.mubr.f32.mxu0 0.0
      %782 = vmatmul.mubr.f32.gmra.mxu0 %v650
      %v783 = vpop.f32.mrf.mxu0
      %v784 = vadd.f32 %v492, %v783
      %v785 = vpop.f32.mrf.mxu0
      %786 = vmatprep.mubr.f32.mxu0 0.0
      %787 = vmatmul.mubr.f32.gmra.mxu0 %v652
      %v788 = vpop.f32.mrf.mxu0
      %v789 = vadd.f32 %v497, %v788
      %v790 = vpop.f32.mrf.mxu0
      %791 = vmatprep.mubr.f32.mxu0 0.0
      %792 = vmatmul.mubr.f32.gmra.mxu0 %v654
      %v793 = vpop.f32.mrf.mxu0
      %v794 = vadd.f32 %v502, %v793
      %v795 = vpop.f32.mrf.mxu0
      %796 = vmatprep.mubr.f32.mxu0 0.0
      %797 = vmatmul.mubr.f32.gmra.mxu0 %v656
      %v798 = vpop.f32.mrf.mxu0
      %v799 = vadd.f32 %v507, %v798
      %v800 = vpop.f32.mrf.mxu0
      %801 = vmatprep.mubr.f32.mxu0 0.0
      %802 = vmatmul.mubr.f32.gmra.mxu0 %v658
      %v803 = vpop.f32.mrf.mxu0
      %v804 = vadd.f32 %v512, %v803
      %v805 = vpop.f32.mrf.mxu0
      %806 = vmatprep.mubr.f32.mxu0 0.0
      %807 = vmatmul.mubr.f32.gmra.mxu0 %v660
      %v808 = vpop.f32.mrf.mxu0
      %v809 = vadd.f32 %v517, %v808
      %v810 = vpop.f32.mrf.mxu0
      %811 = vmatprep.mubr.f32.mxu0 0.0
      %812 = vmatmul.mubr.f32.gmra.mxu0 %v662
      %v813 = vpop.f32.mrf.mxu0
      %v814 = vadd.f32 %v522, %v813
      %v815 = vpop.f32.mrf.mxu0
      %816 = vmatprep.mubr.f32.mxu0 0.0
      %817 = vmatmul.mubr.f32.gmra.mxu0 %v664
      %v818 = vpop.f32.mrf.mxu0
      %v819 = vadd.f32 %v527, %v818
      %v820 = vpop.f32.mrf.mxu0
      %821 = vmatprep.mubr.f32.mxu0 0.0
      %822 = vmatmul.mubr.f32.gmra.mxu0 %v666
      %v823 = vpop.f32.mrf.mxu0
      %v824 = vadd.f32 %v532, %v823
      %v825 = vpop.f32.mrf.mxu0
      %826 = vmatprep.mubr.f32.mxu0 0.0
      %827 = vmatmul.mubr.f32.gmra.mxu0 %v668
      %v828 = vpop.f32.mrf.mxu0
      %v829 = vadd.f32 %v537, %v828
      %v830 = vpop.f32.mrf.mxu0
      %831 = vmatprep.mubr.f32.mxu0 0.0
      %832 = vmatmul.mubr.f32.gmra.mxu0 %v670
      %v833 = vpop.f32.mrf.mxu0
      %v834 = vadd.f32 %v542, %v833
      %v835 = vpop.f32.mrf.mxu0
      %836 = vmatprep.mubr.f32.mxu0 0.0
      %837 = vmatmul.mubr.f32.gmra.mxu0 %v672
      %v838 = vpop.f32.mrf.mxu0
      %v839 = vadd.f32 %v547, %v838
      %v840 = vpop.f32.mrf.mxu0
      %841 = vmatprep.mubr.f32.mxu0 0.0
      %842 = vmatmul.mubr.f32.gmra.mxu0 %v674
      %v843 = vpop.f32.mrf.mxu0
      %v844 = vadd.f32 %v552, %v843
      %v845 = vpop.f32.mrf.mxu0
      %846 = vmatprep.mubr.f32.mxu0 0.0
      %847 = vmatmul.mubr.f32.gmra.mxu0 %v676
      %v848 = vpop.f32.mrf.mxu0
      %v849 = vadd.f32 %v557, %v848
      %v850 = vpop.f32.mrf.mxu0
      %851 = vmatprep.mubr.f32.mxu0 0.0
      %852 = vmatmul.mubr.f32.gmra.mxu0 %v678
      %v853 = vpop.f32.mrf.mxu0
      %v854 = vadd.f32 %v562, %v853
      %v855 = vpop.f32.mrf.mxu0
      %856 = vmatprep.mubr.f32.mxu0 0.0
      %857 = vmatmul.mubr.f32.gmra.mxu0 %v680
      %v858 = vpop.f32.mrf.mxu0
      %v859 = vadd.f32 %v567, %v858
      %v860 = vpop.f32.mrf.mxu0
      %861 = vmatprep.mubr.f32.mxu0 0.0
      %862 = vmatmul.mubr.f32.gmra.mxu0 %v682
      %v863 = vpop.f32.mrf.mxu0
      %v864 = vadd.f32 %v572, %v863
      %v865 = vpop.f32.mrf.mxu0
      %866 = vmatprep.mubr.f32.mxu0 0.0
      %867 = vmatmul.mubr.f32.gmra.mxu0 %v684
      %v868 = vpop.f32.mrf.mxu0
      %v869 = vadd.f32 %v577, %v868
      %v870 = vpop.f32.mrf.mxu0
      %871 = vmatprep.mubr.f32.mxu0 0.0
      %872 = vmatmul.mubr.f32.gmra.mxu0 %v686
      %v873 = vpop.f32.mrf.mxu0
      %v874 = vadd.f32 %v582, %v873
      %v875 = vpop.f32.mrf.mxu0
      %876 = vmatprep.mubr.f32.mxu0 0.0
      %877 = vmatmul.mubr.f32.gmra.mxu0 %v688
      %v878 = vpop.f32.mrf.mxu0
      %v879 = vadd.f32 %v587, %v878
      %v880 = vpop.f32.mrf.mxu0
      %881 = vmatprep.mubr.f32.mxu0 0.0
      %882 = vmatmul.mubr.f32.gmra.mxu0 %v690
      %v883 = vpop.f32.mrf.mxu0
      %v884 = vadd.f32 %v592, %v883
      %v885 = vpop.f32.mrf.mxu0
      %886 = vmatprep.mubr.f32.mxu0 0.0
      %887 = vmatmul.mubr.f32.gmra.mxu0 %v692
      %v888 = vpop.f32.mrf.mxu0
      %v889 = vadd.f32 %v597, %v888
      %v890 = vpop.f32.mrf.mxu0
      %891 = vmatprep.mubr.f32.mxu0 0.0
      %892 = vmatmul.mubr.f32.gmra.mxu0 %v694
      %v893 = vpop.f32.mrf.mxu0
      %v894 = vadd.f32 %v602, %v893
      %v895 = vpop.f32.mrf.mxu0
      %896 = vmatprep.mubr.f32.mxu0 0.0
      %897 = vmatmul.mubr.f32.gmra.mxu0 %v696
      %v898 = vpop.f32.mrf.mxu0
      %v899 = vadd.f32 %v607, %v898
      %v900 = vpop.f32.mrf.mxu0
      %901 = vmatprep.mubr.f32.mxu0 0.0
      %902 = vmatmul.mubr.f32.gmra.mxu0 %v698
      %v903 = vpop.f32.mrf.mxu0
      %v904 = vadd.f32 %v612, %v903
      %v905 = vpop.f32.mrf.mxu0
      %906 = vmatprep.mubr.f32.mxu0 0.0
      %907 = vmatmul.mubr.f32.gmra.mxu0 %v700
      %v908 = vpop.f32.mrf.mxu0
      %v909 = vadd.f32 %v617, %v908
      %v910 = vpop.f32.mrf.mxu0
      %911 = vmatprep.mubr.f32.mxu0 0.0
      %912 = vmatmul.mubr.f32.gmra.mxu0 %v702
      %v913 = vpop.f32.mrf.mxu0
      %v914 = vadd.f32 %v622, %v913
      %v915 = vpop.f32.mrf.mxu0
      %916 = vmatprep.mubr.f32.mxu0 0.0
      %917 = vmatmul.mubr.f32.gmra.mxu0 %v704
      %v918 = vpop.f32.mrf.mxu0
      %v919 = vadd.f32 %v627, %v918
      %v920 = vpop.f32.mrf.mxu0
      %921 = vmatprep.mubr.f32.mxu0 0.0
      %922 = vmatmul.mubr.f32.gmra.mxu0 %v706
      %v923 = vpop.f32.mrf.mxu0
      %v924 = vadd.f32 %v632, %v923
      %v925 = vpop.f32.mrf.mxu0
      %926 = vmatprep.mubr.f32.mxu0 0.0
      %927 = vmatmul.mubr.f32.gmra.mxu0 %v708
      %v928 = vpop.f32.mrf.mxu0
      %v929 = vadd.f32 %v637, %v928
      %v930 = vpop.f32.mrf.mxu0
      %931 = vmatprep.mubr.f32.mxu0 0.0
      %932 = vmatmul.mubr.f32.gmra.mxu0 %v710
      %v933 = vpop.f32.mrf.mxu0
      %v934 = vadd.f32 %v642, %v933
      %v935 = vpop.f32.mrf.mxu0
      %936 = vmatprep.mubr.f32.mxu0 0.0
      %937 = vmatmul.mubr.f32.gmra.mxu0 %v712
      %v938 = vpop.f32.mrf.mxu0
      %v939 = vadd.f32 %v647, %v938
      %v940 = vpop.f32.mrf.mxu0
      %941 = vdwg.mxu0
      %vm942 = vcmask 1045504
      %v943 = vrot.slane %v171, 2
      %v944 = vrot.slane %v172, 2
      %v945 = vsel %vm942, %v943, %v944
      %v946 = vrot.slane %v173, 2
      %v947 = vsel %vm942, %v944, %v946
      %v948 = vrot.slane %v174, 2
      %v949 = vrot.slane %v175, 2
      %v950 = vsel %vm942, %v948, %v949
      %v951 = vrot.slane %v176, 2
      %v952 = vsel %vm942, %v949, %v951
      %v953 = vrot.slane %v177, 2
      %v954 = vrot.slane %v178, 2
      %v955 = vsel %vm942, %v953, %v954
      %v956 = vrot.slane %v179, 2
      %v957 = vsel %vm942, %v954, %v956
      %v958 = vrot.slane %v180, 2
      %v959 = vrot.slane %v181, 2
      %v960 = vsel %vm942, %v958, %v959
      %v961 = vrot.slane %v182, 2
      %v962 = vsel %vm942, %v959, %v961
      %v963 = vrot.slane %v183, 2
      %v964 = vrot.slane %v184, 2
      %v965 = vsel %vm942, %v963, %v964
      %v966 = vrot.slane %v185, 2
      %v967 = vsel %vm942, %v964, %v966
      %v968 = vrot.slane %v186, 2
      %v969 = vrot.slane %v187, 2
      %v970 = vsel %vm942, %v968, %v969
      %v971 = vrot.slane %v188, 2
      %v972 = vsel %vm942, %v969, %v971
      %v973 = vrot.slane %v189, 2
      %v974 = vrot.slane %v190, 2
      %v975 = vsel %vm942, %v973, %v974
      %v976 = vrot.slane %v191, 2
      %v977 = vsel %vm942, %v974, %v976
      %v978 = vrot.slane %v192, 2
      %v979 = vrot.slane %v193, 2
      %v980 = vsel %vm942, %v978, %v979
      %v981 = vrot.slane %v194, 2
      %v982 = vsel %vm942, %v979, %v981
      %v983 = vrot.slane %v195, 2
      %v984 = vrot.slane %v196, 2
      %v985 = vsel %vm942, %v983, %v984
      %v986 = vrot.slane %v197, 2
      %v987 = vsel %vm942, %v984, %v986
      %v988 = vrot.slane %v198, 2
      %v989 = vrot.slane %v199, 2
      %v990 = vsel %vm942, %v988, %v989
      %v991 = vrot.slane %v200, 2
      %v992 = vsel %vm942, %v989, %v991
      %v993 = vrot.slane %v201, 2
      %v994 = vrot.slane %v202, 2
      %v995 = vsel %vm942, %v993, %v994
      %v996 = vrot.slane %v203, 2
      %v997 = vsel %vm942, %v994, %v996
      %v998 = vrot.slane %v204, 2
      %v999 = vrot.slane %v205, 2
      %v1000 = vsel %vm942, %v998, %v999
      %v1001 = vrot.slane %v206, 2
      %v1002 = vsel %vm942, %v999, %v1001
      %v1003 = vrot.slane %v207, 2
      %v1004 = vrot.slane %v208, 2
      %v1005 = vsel %vm942, %v1003, %v1004
      %v1006 = vrot.slane %v209, 2
      %v1007 = vsel %vm942, %v1004, %v1006
      %v1008 = vrot.slane %v210, 2
      %v1009 = vrot.slane %v211, 2
      %v1010 = vsel %vm942, %v1008, %v1009
      %v1011 = vrot.slane %v212, 2
      %v1012 = vsel %vm942, %v1009, %v1011
      %v1013 = vrot.slane %v213, 2
      %v1014 = vrot.slane %v214, 2
      %v1015 = vsel %vm942, %v1013, %v1014
      %v1016 = vrot.slane %v215, 2
      %v1017 = vsel %vm942, %v1014, %v1016
      %v1018 = vrot.slane %v216, 2
      %v1019 = vrot.slane %v217, 2
      %v1020 = vsel %vm942, %v1018, %v1019
      %v1021 = vrot.slane %v218, 2
      %v1022 = vsel %vm942, %v1019, %v1021
      %v1023 = vld [vmem:[%s1 + $0x8] sm:$0xf]
      %v1024 = vsel %vm356, %v945, 0
      %v1026 = vsel %vm356, %v947, 0
      %v1028 = vsel %vm356, %v950, 0
      %v1030 = vsel %vm356, %v952, 0
      %v1032 = vsel %vm356, %v955, 0
      %v1034 = vsel %vm356, %v957, 0
      %v1036 = vsel %vm356, %v960, 0
      %v1038 = vsel %vm356, %v962, 0
      %v1040 = vsel %vm356, %v965, 0
      %v1042 = vsel %vm356, %v967, 0
      %v1044 = vsel %vm356, %v970, 0
      %v1046 = vsel %vm356, %v972, 0
      %v1048 = vsel %vm356, %v975, 0
      %v1050 = vsel %vm356, %v977, 0
      %v1052 = vsel %vm356, %v980, 0
      %v1054 = vsel %vm356, %v982, 0
      %v1056 = vsel %vm356, %v985, 0
      %v1058 = vsel %vm356, %v987, 0
      %v1060 = vsel %vm356, %v990, 0
      %v1062 = vsel %vm356, %v992, 0
      %v1064 = vsel %vm356, %v995, 0
      %v1066 = vsel %vm356, %v997, 0
      %v1068 = vsel %vm356, %v1000, 0
      %v1070 = vsel %vm356, %v1002, 0
      %v1072 = vsel %vm356, %v1005, 0
      %v1074 = vsel %vm356, %v1007, 0
      %v1076 = vsel %vm356, %v1010, 0
      %v1078 = vsel %vm356, %v1012, 0
      %v1080 = vsel %vm356, %v1015, 0
      %v1082 = vsel %vm356, %v1017, 0
      %v1084 = vsel %vm356, %v1020, 0
      %v1086 = vsel %vm356, %v1022, 0
      %v1089 = vsel %vm421, %v1023, 0
      %1091 = vmatprep.subr.mxu0 0.0
      %1092 = vmatpush1.msra.mxu0 0.0
      %1093 = vmatprep.subr.mxu0 0.0
      %1094 = vmatpush1.msra.mxu0 0.0
      %1095 = vmatprep.subr.mxu0 0.0
      %1096 = vmatpush1.msra.mxu0 0.0
      %1097 = vmatprep.subr.mxu0 0.0
      %1098 = vmatpush1.msra.mxu0 0.0
      %1099 = vmatprep.subr.mxu0 0.0
      %1100 = vmatpush1.msra.mxu0 0.0
      %1101 = vmatprep.subr.mxu0 0.0
      %1102 = vmatpush1.msra.mxu0 0.0
      %1103 = vmatprep.subr.mxu0 0.0
      %1104 = vmatpush1.msra.mxu0 0.0
      %1105 = vmatprep.subr.mxu0 0.0
      %1106 = vmatpush1.msra.mxu0 0.0
      %1107 = vmatprep.subr.mxu0 0.0
      %1108 = vmatpush1.msra.mxu0 0.0
      %1109 = vmatprep.subr.mxu0 0.0
      %1110 = vmatpush1.msra.mxu0 0.0
      %1111 = vmatprep.subr.mxu0 0.0
      %1112 = vmatpush1.msra.mxu0 0.0
      %1113 = vmatprep.subr.mxu0 0.0
      %1114 = vmatpush1.msra.mxu0 0.0
      %1115 = vmatprep.subr.mxu0 0.0
      %1116 = vmatpush1.msra.mxu0 0.0
      %1117 = vmatprep.subr.mxu0 0.0
      %1118 = vmatpush1.msra.mxu0 0.0
      %1119 = vmatprep.subr.mxu0 0.0
      %1120 = vmatpush1.msra.mxu0 0.0
      %1121 = vmatprep.subr.mxu0 0.0
      %1122 = vmatpush1.msra.mxu0 %v1089
      %1123 = vmatprep.subr.mxu0 0.0
      %1124 = vmatpush2.msra.mxu0 0.0
      %1125 = vmatprep.subr.mxu0 0.0
      %1126 = vmatpush2.msra.mxu0 0.0
      %1127 = vmatprep.subr.mxu0 0.0
      %1128 = vmatpush2.msra.mxu0 0.0
      %1129 = vmatprep.subr.mxu0 0.0
      %1130 = vmatpush2.msra.mxu0 0.0
      %1131 = vmatprep.subr.mxu0 0.0
      %1132 = vmatpush2.msra.mxu0 0.0
      %1133 = vmatprep.subr.mxu0 0.0
      %1134 = vmatpush2.msra.mxu0 0.0
      %1135 = vmatprep.subr.mxu0 0.0
      %1136 = vmatpush2.msra.mxu0 0.0
      %1137 = vmatprep.subr.mxu0 0.0
      %1138 = vmatpush2.msra.mxu0 0.0
      %1139 = vmatprep.subr.mxu0 0.0
      %1140 = vmatpush2.msra.mxu0 0.0
      %1141 = vmatprep.subr.mxu0 0.0
      %1142 = vmatpush2.msra.mxu0 0.0
      %1143 = vmatprep.subr.mxu0 0.0
      %1144 = vmatpush2.msra.mxu0 0.0
      %1145 = vmatprep.subr.mxu0 0.0
      %1146 = vmatpush2.msra.mxu0 0.0
      %1147 = vmatprep.subr.mxu0 0.0
      %1148 = vmatpush2.msra.mxu0 0.0
      %1149 = vmatprep.subr.mxu0 0.0
      %1150 = vmatpush2.msra.mxu0 0.0
      %1151 = vmatprep.subr.mxu0 0.0
      %1152 = vmatpush2.msra.mxu0 0.0
      %1153 = vmatprep.subr.mxu0 0.0
      %1154 = vmatpush2.msra.mxu0 0.0
      %1155 = vmatprep.mubr.f32.mxu0 0.0
      %1156 = vmatmul.mubr.f32.gmra.mxu0 %v1024
      %v1157 = vpop.f32.mrf.mxu0
      %v1158 = vadd.f32 0.0, %v1157
      %v1159 = vpop.f32.mrf.mxu0
      %1160 = vmatprep.mubr.f32.mxu0 0.0
      %1161 = vmatmul.mubr.f32.gmra.mxu0 %v1026
      %v1162 = vpop.f32.mrf.mxu0
      %v1163 = vadd.f32 0.0, %v1162
      %v1164 = vpop.f32.mrf.mxu0
      %1165 = vmatprep.mubr.f32.mxu0 0.0
      %1166 = vmatmul.mubr.f32.gmra.mxu0 %v1028
      %v1167 = vpop.f32.mrf.mxu0
      %v1168 = vadd.f32 0.0, %v1167
      %v1169 = vpop.f32.mrf.mxu0
      %1170 = vmatprep.mubr.f32.mxu0 0.0
      %1171 = vmatmul.mubr.f32.gmra.mxu0 %v1030
      %v1172 = vpop.f32.mrf.mxu0
      %v1173 = vadd.f32 0.0, %v1172
      %v1174 = vpop.f32.mrf.mxu0
      %1175 = vmatprep.mubr.f32.mxu0 0.0
      %1176 = vmatmul.mubr.f32.gmra.mxu0 %v1032
      %v1177 = vpop.f32.mrf.mxu0
      %v1178 = vadd.f32 0.0, %v1177
      %v1179 = vpop.f32.mrf.mxu0
      %1180 = vmatprep.mubr.f32.mxu0 0.0
      %1181 = vmatmul.mubr.f32.gmra.mxu0 %v1034
      %v1182 = vpop.f32.mrf.mxu0
      %v1183 = vadd.f32 0.0, %v1182
      %v1184 = vpop.f32.mrf.mxu0
      %1185 = vmatprep.mubr.f32.mxu0 0.0
      %1186 = vmatmul.mubr.f32.gmra.mxu0 %v1036
      %v1187 = vpop.f32.mrf.mxu0
      %v1188 = vadd.f32 0.0, %v1187
      %v1189 = vpop.f32.mrf.mxu0
      %1190 = vmatprep.mubr.f32.mxu0 0.0
      %1191 = vmatmul.mubr.f32.gmra.mxu0 %v1038
      %v1192 = vpop.f32.mrf.mxu0
      %v1193 = vadd.f32 0.0, %v1192
      %v1194 = vpop.f32.mrf.mxu0
      %1195 = vmatprep.mubr.f32.mxu0 0.0
      %1196 = vmatmul.mubr.f32.gmra.mxu0 %v1040
      %v1197 = vpop.f32.mrf.mxu0
      %v1198 = vadd.f32 0.0, %v1197
      %v1199 = vpop.f32.mrf.mxu0
      %1200 = vmatprep.mubr.f32.mxu0 0.0
      %1201 = vmatmul.mubr.f32.gmra.mxu0 %v1042
      %v1202 = vpop.f32.mrf.mxu0
      %v1203 = vadd.f32 0.0, %v1202
      %v1204 = vpop.f32.mrf.mxu0
      %1205 = vmatprep.mubr.f32.mxu0 0.0
      %1206 = vmatmul.mubr.f32.gmra.mxu0 %v1044
      %v1207 = vpop.f32.mrf.mxu0
      %v1208 = vadd.f32 0.0, %v1207
      %v1209 = vpop.f32.mrf.mxu0
      %1210 = vmatprep.mubr.f32.mxu0 0.0
      %1211 = vmatmul.mubr.f32.gmra.mxu0 %v1046
      %v1212 = vpop.f32.mrf.mxu0
      %v1213 = vadd.f32 0.0, %v1212
      %v1214 = vpop.f32.mrf.mxu0
      %1215 = vmatprep.mubr.f32.mxu0 0.0
      %1216 = vmatmul.mubr.f32.gmra.mxu0 %v1048
      %v1217 = vpop.f32.mrf.mxu0
      %v1218 = vadd.f32 0.0, %v1217
      %v1219 = vpop.f32.mrf.mxu0
      %1220 = vmatprep.mubr.f32.mxu0 0.0
      %1221 = vmatmul.mubr.f32.gmra.mxu0 %v1050
      %v1222 = vpop.f32.mrf.mxu0
      %v1223 = vadd.f32 0.0, %v1222
      %v1224 = vpop.f32.mrf.mxu0
      %1225 = vmatprep.mubr.f32.mxu0 0.0
      %1226 = vmatmul.mubr.f32.gmra.mxu0 %v1052
      %v1227 = vpop.f32.mrf.mxu0
      %v1228 = vadd.f32 0.0, %v1227
      %v1229 = vpop.f32.mrf.mxu0
      %1230 = vmatprep.mubr.f32.mxu0 0.0
      %1231 = vmatmul.mubr.f32.gmra.mxu0 %v1054
      %v1232 = vpop.f32.mrf.mxu0
      %v1233 = vadd.f32 0.0, %v1232
      %v1234 = vpop.f32.mrf.mxu0
      %1235 = vmatprep.mubr.f32.mxu0 0.0
      %1236 = vmatmul.mubr.f32.gmra.mxu0 %v1056
      %v1237 = vpop.f32.mrf.mxu0
      %v1238 = vadd.f32 0.0, %v1237
      %v1239 = vpop.f32.mrf.mxu0
      %1240 = vmatprep.mubr.f32.mxu0 0.0
      %1241 = vmatmul.mubr.f32.gmra.mxu0 %v1058
      %v1242 = vpop.f32.mrf.mxu0
      %v1243 = vadd.f32 0.0, %v1242
      %v1244 = vpop.f32.mrf.mxu0
      %1245 = vmatprep.mubr.f32.mxu0 0.0
      %1246 = vmatmul.mubr.f32.gmra.mxu0 %v1060
      %v1247 = vpop.f32.mrf.mxu0
      %v1248 = vadd.f32 0.0, %v1247
      %v1249 = vpop.f32.mrf.mxu0
      %1250 = vmatprep.mubr.f32.mxu0 0.0
      %1251 = vmatmul.mubr.f32.gmra.mxu0 %v1062
      %v1252 = vpop.f32.mrf.mxu0
      %v1253 = vadd.f32 0.0, %v1252
      %v1254 = vpop.f32.mrf.mxu0
      %1255 = vmatprep.mubr.f32.mxu0 0.0
      %1256 = vmatmul.mubr.f32.gmra.mxu0 %v1064
      %v1257 = vpop.f32.mrf.mxu0
      %v1258 = vadd.f32 0.0, %v1257
      %v1259 = vpop.f32.mrf.mxu0
      %1260 = vmatprep.mubr.f32.mxu0 0.0
      %1261 = vmatmul.mubr.f32.gmra.mxu0 %v1066
      %v1262 = vpop.f32.mrf.mxu0
      %v1263 = vadd.f32 0.0, %v1262
      %v1264 = vpop.f32.mrf.mxu0
      %1265 = vmatprep.mubr.f32.mxu0 0.0
      %1266 = vmatmul.mubr.f32.gmra.mxu0 %v1068
      %v1267 = vpop.f32.mrf.mxu0
      %v1268 = vadd.f32 0.0, %v1267
      %v1269 = vpop.f32.mrf.mxu0
      %1270 = vmatprep.mubr.f32.mxu0 0.0
      %1271 = vmatmul.mubr.f32.gmra.mxu0 %v1070
      %v1272 = vpop.f32.mrf.mxu0
      %v1273 = vadd.f32 0.0, %v1272
      %v1274 = vpop.f32.mrf.mxu0
      %1275 = vmatprep.mubr.f32.mxu0 0.0
      %1276 = vmatmul.mubr.f32.gmra.mxu0 %v1072
      %v1277 = vpop.f32.mrf.mxu0
      %v1278 = vadd.f32 0.0, %v1277
      %v1279 = vpop.f32.mrf.mxu0
      %1280 = vmatprep.mubr.f32.mxu0 0.0
      %1281 = vmatmul.mubr.f32.gmra.mxu0 %v1074
      %v1282 = vpop.f32.mrf.mxu0
      %v1283 = vadd.f32 0.0, %v1282
      %v1284 = vpop.f32.mrf.mxu0
      %1285 = vmatprep.mubr.f32.mxu0 0.0
      %1286 = vmatmul.mubr.f32.gmra.mxu0 %v1076
      %v1287 = vpop.f32.mrf.mxu0
      %v1288 = vadd.f32 0.0, %v1287
      %v1289 = vpop.f32.mrf.mxu0
      %1290 = vmatprep.mubr.f32.mxu0 0.0
      %1291 = vmatmul.mubr.f32.gmra.mxu0 %v1078
      %v1292 = vpop.f32.mrf.mxu0
      %v1293 = vadd.f32 0.0, %v1292
      %v1294 = vpop.f32.mrf.mxu0
      %1295 = vmatprep.mubr.f32.mxu0 0.0
      %1296 = vmatmul.mubr.f32.gmra.mxu0 %v1080
      %v1297 = vpop.f32.mrf.mxu0
      %v1298 = vadd.f32 0.0, %v1297
      %v1299 = vpop.f32.mrf.mxu0
      %1300 = vmatprep.mubr.f32.mxu0 0.0
      %1301 = vmatmul.mubr.f32.gmra.mxu0 %v1082
      %v1302 = vpop.f32.mrf.mxu0
      %v1303 = vadd.f32 0.0, %v1302
      %v1304 = vpop.f32.mrf.mxu0
      %1305 = vmatprep.mubr.f32.mxu0 0.0
      %1306 = vmatmul.mubr.f32.gmra.mxu0 %v1084
      %v1307 = vpop.f32.mrf.mxu0
      %v1308 = vadd.f32 0.0, %v1307
      %v1309 = vpop.f32.mrf.mxu0
      %1310 = vmatprep.mubr.f32.mxu0 0.0
      %1311 = vmatmul.mubr.f32.gmra.mxu0 %v1086
      %v1312 = vpop.f32.mrf.mxu0
      %v1313 = vadd.f32 0.0, %v1312
      %v1314 = vpop.f32.mrf.mxu0
      %1315 = vdwg.mxu0
      %v1316 = vadd.f32 %v784, %v1158
      %v1317 = vadd.f32 %v789, %v1163
      %v1318 = vadd.f32 %v794, %v1168
      %v1319 = vadd.f32 %v799, %v1173
      %v1320 = vadd.f32 %v804, %v1178
      %v1321 = vadd.f32 %v809, %v1183
      %v1322 = vadd.f32 %v814, %v1188
      %v1323 = vadd.f32 %v819, %v1193
      %v1324 = vadd.f32 %v824, %v1198
      %v1325 = vadd.f32 %v829, %v1203
      %v1326 = vadd.f32 %v834, %v1208
      %v1327 = vadd.f32 %v839, %v1213
      %v1328 = vadd.f32 %v844, %v1218
      %v1329 = vadd.f32 %v849, %v1223
      %v1330 = vadd.f32 %v854, %v1228
      %v1331 = vadd.f32 %v859, %v1233
      %v1332 = vadd.f32 %v864, %v1238
      %v1333 = vadd.f32 %v869, %v1243
      %v1334 = vadd.f32 %v874, %v1248
      %v1335 = vadd.f32 %v879, %v1253
      %v1336 = vadd.f32 %v884, %v1258
      %v1337 = vadd.f32 %v889, %v1263
      %v1338 = vadd.f32 %v894, %v1268
      %v1339 = vadd.f32 %v899, %v1273
      %v1340 = vadd.f32 %v904, %v1278
      %v1341 = vadd.f32 %v909, %v1283
      %v1342 = vadd.f32 %v914, %v1288
      %v1343 = vadd.f32 %v919, %v1293
      %v1344 = vadd.f32 %v924, %v1298
      %v1345 = vadd.f32 %v929, %v1303
      %v1346 = vadd.f32 %v934, %v1308
      %v1347 = vadd.f32 %v939, %v1313
      %v1348 = vld [vmem:[%s1 + $0xc] sm:$0xf]
      %v1350 = vsel %vm356, %v219, 0
      %v1353 = vsel %vm356, %v220, 0
      %v1356 = vsel %vm421, %v1348, 0
      %1358 = vmatprep.subr.mxu0 0.0
      %1359 = vmatpush1.msra.mxu0 0.0
      %1360 = vmatprep.subr.mxu0 0.0
      %1361 = vmatpush1.msra.mxu0 0.0
      %1362 = vmatprep.subr.mxu0 0.0
      %1363 = vmatpush1.msra.mxu0 0.0
      %1364 = vmatprep.subr.mxu0 0.0
      %1365 = vmatpush1.msra.mxu0 0.0
      %1366 = vmatprep.subr.mxu0 0.0
      %1367 = vmatpush1.msra.mxu0 0.0
      %1368 = vmatprep.subr.mxu0 0.0
      %1369 = vmatpush1.msra.mxu0 0.0
      %1370 = vmatprep.subr.mxu0 0.0
      %1371 = vmatpush1.msra.mxu0 0.0
      %1372 = vmatprep.subr.mxu0 0.0
      %1373 = vmatpush1.msra.mxu0 0.0
      %1374 = vmatprep.subr.mxu0 0.0
      %1375 = vmatpush1.msra.mxu0 0.0
      %1376 = vmatprep.subr.mxu0 0.0
      %1377 = vmatpush1.msra.mxu0 0.0
      %1378 = vmatprep.subr.mxu0 0.0
      %1379 = vmatpush1.msra.mxu0 0.0
      %1380 = vmatprep.subr.mxu0 0.0
      %1381 = vmatpush1.msra.mxu0 0.0
      %1382 = vmatprep.subr.mxu0 0.0
      %1383 = vmatpush1.msra.mxu0 0.0
      %1384 = vmatprep.subr.mxu0 0.0
      %1385 = vmatpush1.msra.mxu0 0.0
      %1386 = vmatprep.subr.mxu0 0.0
      %1387 = vmatpush1.msra.mxu0 0.0
      %1388 = vmatprep.subr.mxu0 0.0
      %1389 = vmatpush1.msra.mxu0 %v1356
      %1390 = vmatprep.subr.mxu0 0.0
      %1391 = vmatpush2.msra.mxu0 0.0
      %1392 = vmatprep.subr.mxu0 0.0
      %1393 = vmatpush2.msra.mxu0 0.0
      %1394 = vmatprep.subr.mxu0 0.0
      %1395 = vmatpush2.msra.mxu0 0.0
      %1396 = vmatprep.subr.mxu0 0.0
      %1397 = vmatpush2.msra.mxu0 0.0
      %1398 = vmatprep.subr.mxu0 0.0
      %1399 = vmatpush2.msra.mxu0 0.0
      %1400 = vmatprep.subr.mxu0 0.0
      %1401 = vmatpush2.msra.mxu0 0.0
      %1402 = vmatprep.subr.mxu0 0.0
      %1403 = vmatpush2.msra.mxu0 0.0
      %1404 = vmatprep.subr.mxu0 0.0
      %1405 = vmatpush2.msra.mxu0 0.0
      %1406 = vmatprep.subr.mxu0 0.0
      %1407 = vmatpush2.msra.mxu0 0.0
      %1408 = vmatprep.subr.mxu0 0.0
      %1409 = vmatpush2.msra.mxu0 0.0
      %1410 = vmatprep.subr.mxu0 0.0
      %1411 = vmatpush2.msra.mxu0 0.0
      %1412 = vmatprep.subr.mxu0 0.0
      %1413 = vmatpush2.msra.mxu0 0.0
      %1414 = vmatprep.subr.mxu0 0.0
      %1415 = vmatpush2.msra.mxu0 0.0
      %1416 = vmatprep.subr.mxu0 0.0
      %1417 = vmatpush2.msra.mxu0 0.0
      %1418 = vmatprep.subr.mxu0 0.0
      %1419 = vmatpush2.msra.mxu0 0.0
      %1420 = vmatprep.subr.mxu0 0.0
      %1421 = vmatpush2.msra.mxu0 0.0
      %1422 = vmatprep.mubr.f32.mxu0 0.0
      %1423 = vmatmul.mubr.f32.gmra.mxu0 %v654
      %v1424 = vpop.f32.mrf.mxu0
      %v1425 = vadd.f32 0.0, %v1424
      %v1426 = vpop.f32.mrf.mxu0
      %1427 = vmatprep.mubr.f32.mxu0 0.0
      %1428 = vmatmul.mubr.f32.gmra.mxu0 %v656
      %v1429 = vpop.f32.mrf.mxu0
      %v1430 = vadd.f32 0.0, %v1429
      %v1431 = vpop.f32.mrf.mxu0
      %1432 = vmatprep.mubr.f32.mxu0 0.0
      %1433 = vmatmul.mubr.f32.gmra.mxu0 %v658
      %v1434 = vpop.f32.mrf.mxu0
      %v1435 = vadd.f32 0.0, %v1434
      %v1436 = vpop.f32.mrf.mxu0
      %1437 = vmatprep.mubr.f32.mxu0 0.0
      %1438 = vmatmul.mubr.f32.gmra.mxu0 %v660
      %v1439 = vpop.f32.mrf.mxu0
      %v1440 = vadd.f32 0.0, %v1439
      %v1441 = vpop.f32.mrf.mxu0
      %1442 = vmatprep.mubr.f32.mxu0 0.0
      %1443 = vmatmul.mubr.f32.gmra.mxu0 %v662
      %v1444 = vpop.f32.mrf.mxu0
      %v1445 = vadd.f32 0.0, %v1444
      %v1446 = vpop.f32.mrf.mxu0
      %1447 = vmatprep.mubr.f32.mxu0 0.0
      %1448 = vmatmul.mubr.f32.gmra.mxu0 %v664
      %v1449 = vpop.f32.mrf.mxu0
      %v1450 = vadd.f32 0.0, %v1449
      %v1451 = vpop.f32.mrf.mxu0
      %1452 = vmatprep.mubr.f32.mxu0 0.0
      %1453 = vmatmul.mubr.f32.gmra.mxu0 %v666
      %v1454 = vpop.f32.mrf.mxu0
      %v1455 = vadd.f32 0.0, %v1454
      %v1456 = vpop.f32.mrf.mxu0
      %1457 = vmatprep.mubr.f32.mxu0 0.0
      %1458 = vmatmul.mubr.f32.gmra.mxu0 %v668
      %v1459 = vpop.f32.mrf.mxu0
      %v1460 = vadd.f32 0.0, %v1459
      %v1461 = vpop.f32.mrf.mxu0
      %1462 = vmatprep.mubr.f32.mxu0 0.0
      %1463 = vmatmul.mubr.f32.gmra.mxu0 %v670
      %v1464 = vpop.f32.mrf.mxu0
      %v1465 = vadd.f32 0.0, %v1464
      %v1466 = vpop.f32.mrf.mxu0
      %1467 = vmatprep.mubr.f32.mxu0 0.0
      %1468 = vmatmul.mubr.f32.gmra.mxu0 %v672
      %v1469 = vpop.f32.mrf.mxu0
      %v1470 = vadd.f32 0.0, %v1469
      %v1471 = vpop.f32.mrf.mxu0
      %1472 = vmatprep.mubr.f32.mxu0 0.0
      %1473 = vmatmul.mubr.f32.gmra.mxu0 %v674
      %v1474 = vpop.f32.mrf.mxu0
      %v1475 = vadd.f32 0.0, %v1474
      %v1476 = vpop.f32.mrf.mxu0
      %1477 = vmatprep.mubr.f32.mxu0 0.0
      %1478 = vmatmul.mubr.f32.gmra.mxu0 %v676
      %v1479 = vpop.f32.mrf.mxu0
      %v1480 = vadd.f32 0.0, %v1479
      %v1481 = vpop.f32.mrf.mxu0
      %1482 = vmatprep.mubr.f32.mxu0 0.0
      %1483 = vmatmul.mubr.f32.gmra.mxu0 %v678
      %v1484 = vpop.f32.mrf.mxu0
      %v1485 = vadd.f32 0.0, %v1484
      %v1486 = vpop.f32.mrf.mxu0
      %1487 = vmatprep.mubr.f32.mxu0 0.0
      %1488 = vmatmul.mubr.f32.gmra.mxu0 %v680
      %v1489 = vpop.f32.mrf.mxu0
      %v1490 = vadd.f32 0.0, %v1489
      %v1491 = vpop.f32.mrf.mxu0
      %1492 = vmatprep.mubr.f32.mxu0 0.0
      %1493 = vmatmul.mubr.f32.gmra.mxu0 %v682
      %v1494 = vpop.f32.mrf.mxu0
      %v1495 = vadd.f32 0.0, %v1494
      %v1496 = vpop.f32.mrf.mxu0
      %1497 = vmatprep.mubr.f32.mxu0 0.0
      %1498 = vmatmul.mubr.f32.gmra.mxu0 %v684
      %v1499 = vpop.f32.mrf.mxu0
      %v1500 = vadd.f32 0.0, %v1499
      %v1501 = vpop.f32.mrf.mxu0
      %1502 = vmatprep.mubr.f32.mxu0 0.0
      %1503 = vmatmul.mubr.f32.gmra.mxu0 %v686
      %v1504 = vpop.f32.mrf.mxu0
      %v1505 = vadd.f32 0.0, %v1504
      %v1506 = vpop.f32.mrf.mxu0
      %1507 = vmatprep.mubr.f32.mxu0 0.0
      %1508 = vmatmul.mubr.f32.gmra.mxu0 %v688
      %v1509 = vpop.f32.mrf.mxu0
      %v1510 = vadd.f32 0.0, %v1509
      %v1511 = vpop.f32.mrf.mxu0
      %1512 = vmatprep.mubr.f32.mxu0 0.0
      %1513 = vmatmul.mubr.f32.gmra.mxu0 %v690
      %v1514 = vpop.f32.mrf.mxu0
      %v1515 = vadd.f32 0.0, %v1514
      %v1516 = vpop.f32.mrf.mxu0
      %1517 = vmatprep.mubr.f32.mxu0 0.0
      %1518 = vmatmul.mubr.f32.gmra.mxu0 %v692
      %v1519 = vpop.f32.mrf.mxu0
      %v1520 = vadd.f32 0.0, %v1519
      %v1521 = vpop.f32.mrf.mxu0
      %1522 = vmatprep.mubr.f32.mxu0 0.0
      %1523 = vmatmul.mubr.f32.gmra.mxu0 %v694
      %v1524 = vpop.f32.mrf.mxu0
      %v1525 = vadd.f32 0.0, %v1524
      %v1526 = vpop.f32.mrf.mxu0
      %1527 = vmatprep.mubr.f32.mxu0 0.0
      %1528 = vmatmul.mubr.f32.gmra.mxu0 %v696
      %v1529 = vpop.f32.mrf.mxu0
      %v1530 = vadd.f32 0.0, %v1529
      %v1531 = vpop.f32.mrf.mxu0
      %1532 = vmatprep.mubr.f32.mxu0 0.0
      %1533 = vmatmul.mubr.f32.gmra.mxu0 %v698
      %v1534 = vpop.f32.mrf.mxu0
      %v1535 = vadd.f32 0.0, %v1534
      %v1536 = vpop.f32.mrf.mxu0
      %1537 = vmatprep.mubr.f32.mxu0 0.0
      %1538 = vmatmul.mubr.f32.gmra.mxu0 %v700
      %v1539 = vpop.f32.mrf.mxu0
      %v1540 = vadd.f32 0.0, %v1539
      %v1541 = vpop.f32.mrf.mxu0
      %1542 = vmatprep.mubr.f32.mxu0 0.0
      %1543 = vmatmul.mubr.f32.gmra.mxu0 %v702
      %v1544 = vpop.f32.mrf.mxu0
      %v1545 = vadd.f32 0.0, %v1544
      %v1546 = vpop.f32.mrf.mxu0
      %1547 = vmatprep.mubr.f32.mxu0 0.0
      %1548 = vmatmul.mubr.f32.gmra.mxu0 %v704
      %v1549 = vpop.f32.mrf.mxu0
      %v1550 = vadd.f32 0.0, %v1549
      %v1551 = vpop.f32.mrf.mxu0
      %1552 = vmatprep.mubr.f32.mxu0 0.0
      %1553 = vmatmul.mubr.f32.gmra.mxu0 %v706
      %v1554 = vpop.f32.mrf.mxu0
      %v1555 = vadd.f32 0.0, %v1554
      %v1556 = vpop.f32.mrf.mxu0
      %1557 = vmatprep.mubr.f32.mxu0 0.0
      %1558 = vmatmul.mubr.f32.gmra.mxu0 %v708
      %v1559 = vpop.f32.mrf.mxu0
      %v1560 = vadd.f32 0.0, %v1559
      %v1561 = vpop.f32.mrf.mxu0
      %1562 = vmatprep.mubr.f32.mxu0 0.0
      %1563 = vmatmul.mubr.f32.gmra.mxu0 %v710
      %v1564 = vpop.f32.mrf.mxu0
      %v1565 = vadd.f32 0.0, %v1564
      %v1566 = vpop.f32.mrf.mxu0
      %1567 = vmatprep.mubr.f32.mxu0 0.0
      %1568 = vmatmul.mubr.f32.gmra.mxu0 %v712
      %v1569 = vpop.f32.mrf.mxu0
      %v1570 = vadd.f32 0.0, %v1569
      %v1571 = vpop.f32.mrf.mxu0
      %1572 = vmatprep.mubr.f32.mxu0 0.0
      %1573 = vmatmul.mubr.f32.gmra.mxu0 %v1350
      %v1574 = vpop.f32.mrf.mxu0
      %v1575 = vadd.f32 0.0, %v1574
      %v1576 = vpop.f32.mrf.mxu0
      %1577 = vmatprep.mubr.f32.mxu0 0.0
      %1578 = vmatmul.mubr.f32.gmra.mxu0 %v1353
      %v1579 = vpop.f32.mrf.mxu0
      %v1580 = vadd.f32 0.0, %v1579
      %v1581 = vpop.f32.mrf.mxu0
      %1582 = vdwg.mxu0
      %v1583 = vadd.f32 %v1316, %v1425
      %v1584 = vadd.f32 %v1317, %v1430
      %v1585 = vadd.f32 %v1318, %v1435
      %v1586 = vadd.f32 %v1319, %v1440
      %v1587 = vadd.f32 %v1320, %v1445
      %v1588 = vadd.f32 %v1321, %v1450
      %v1589 = vadd.f32 %v1322, %v1455
      %v1590 = vadd.f32 %v1323, %v1460
      %v1591 = vadd.f32 %v1324, %v1465
      %v1592 = vadd.f32 %v1325, %v1470
      %v1593 = vadd.f32 %v1326, %v1475
      %v1594 = vadd.f32 %v1327, %v1480
      %v1595 = vadd.f32 %v1328, %v1485
      %v1596 = vadd.f32 %v1329, %v1490
      %v1597 = vadd.f32 %v1330, %v1495
      %v1598 = vadd.f32 %v1331, %v1500
      %v1599 = vadd.f32 %v1332, %v1505
      %v1600 = vadd.f32 %v1333, %v1510
      %v1601 = vadd.f32 %v1334, %v1515
      %v1602 = vadd.f32 %v1335, %v1520
      %v1603 = vadd.f32 %v1336, %v1525
      %v1604 = vadd.f32 %v1337, %v1530
      %v1605 = vadd.f32 %v1338, %v1535
      %v1606 = vadd.f32 %v1339, %v1540
      %v1607 = vadd.f32 %v1340, %v1545
      %v1608 = vadd.f32 %v1341, %v1550
      %v1609 = vadd.f32 %v1342, %v1555
      %v1610 = vadd.f32 %v1343, %v1560
      %v1611 = vadd.f32 %v1344, %v1565
      %v1612 = vadd.f32 %v1345, %v1570
      %v1613 = vadd.f32 %v1346, %v1575
      %v1614 = vadd.f32 %v1347, %v1580
      %v1616 = vrot.slane %v219, 1
      %v1617 = vrot.slane %v220, 1
      %v1618 = vsel %vm274, %v1616, %v1617
      %v1619 = vrot.slane %v221, 1
      %v1620 = vsel %vm274, %v1617, %v1619
      %v1653 = vld [vmem:[%s1 + $0x10] sm:$0xf]
      %v1654 = vsel %vm356, %v1618, 0
      %v1656 = vsel %vm356, %v1620, 0
      %v1659 = vsel %vm421, %v1653, 0
      %1661 = vmatprep.subr.mxu0 0.0
      %1662 = vmatpush1.msra.mxu0 0.0
      %1663 = vmatprep.subr.mxu0 0.0
      %1664 = vmatpush1.msra.mxu0 0.0
      %1665 = vmatprep.subr.mxu0 0.0
      %1666 = vmatpush1.msra.mxu0 0.0
      %1667 = vmatprep.subr.mxu0 0.0
      %1668 = vmatpush1.msra.mxu0 0.0
      %1669 = vmatprep.subr.mxu0 0.0
      %1670 = vmatpush1.msra.mxu0 0.0
      %1671 = vmatprep.subr.mxu0 0.0
      %1672 = vmatpush1.msra.mxu0 0.0
      %1673 = vmatprep.subr.mxu0 0.0
      %1674 = vmatpush1.msra.mxu0 0.0
      %1675 = vmatprep.subr.mxu0 0.0
      %1676 = vmatpush1.msra.mxu0 0.0
      %1677 = vmatprep.subr.mxu0 0.0
      %1678 = vmatpush1.msra.mxu0 0.0
      %1679 = vmatprep.subr.mxu0 0.0
      %1680 = vmatpush1.msra.mxu0 0.0
      %1681 = vmatprep.subr.mxu0 0.0
      %1682 = vmatpush1.msra.mxu0 0.0
      %1683 = vmatprep.subr.mxu0 0.0
      %1684 = vmatpush1.msra.mxu0 0.0
      %1685 = vmatprep.subr.mxu0 0.0
      %1686 = vmatpush1.msra.mxu0 0.0
      %1687 = vmatprep.subr.mxu0 0.0
      %1688 = vmatpush1.msra.mxu0 0.0
      %1689 = vmatprep.subr.mxu0 0.0
      %1690 = vmatpush1.msra.mxu0 0.0
      %1691 = vmatprep.subr.mxu0 0.0
      %1692 = vmatpush1.msra.mxu0 %v1659
      %1693 = vmatprep.subr.mxu0 0.0
      %1694 = vmatpush2.msra.mxu0 0.0
      %1695 = vmatprep.subr.mxu0 0.0
      %1696 = vmatpush2.msra.mxu0 0.0
      %1697 = vmatprep.subr.mxu0 0.0
      %1698 = vmatpush2.msra.mxu0 0.0
      %1699 = vmatprep.subr.mxu0 0.0
      %1700 = vmatpush2.msra.mxu0 0.0
      %1701 = vmatprep.subr.mxu0 0.0
      %1702 = vmatpush2.msra.mxu0 0.0
      %1703 = vmatprep.subr.mxu0 0.0
      %1704 = vmatpush2.msra.mxu0 0.0
      %1705 = vmatprep.subr.mxu0 0.0
      %1706 = vmatpush2.msra.mxu0 0.0
      %1707 = vmatprep.subr.mxu0 0.0
      %1708 = vmatpush2.msra.mxu0 0.0
      %1709 = vmatprep.subr.mxu0 0.0
      %1710 = vmatpush2.msra.mxu0 0.0
      %1711 = vmatprep.subr.mxu0 0.0
      %1712 = vmatpush2.msra.mxu0 0.0
      %1713 = vmatprep.subr.mxu0 0.0
      %1714 = vmatpush2.msra.mxu0 0.0
      %1715 = vmatprep.subr.mxu0 0.0
      %1716 = vmatpush2.msra.mxu0 0.0
      %1717 = vmatprep.subr.mxu0 0.0
      %1718 = vmatpush2.msra.mxu0 0.0
      %1719 = vmatprep.subr.mxu0 0.0
      %1720 = vmatpush2.msra.mxu0 0.0
      %1721 = vmatprep.subr.mxu0 0.0
      %1722 = vmatpush2.msra.mxu0 0.0
      %1723 = vmatprep.subr.mxu0 0.0
      %1724 = vmatpush2.msra.mxu0 0.0
      %1725 = vmatprep.mubr.f32.mxu0 0.0
      %1726 = vmatmul.mubr.f32.gmra.mxu0 %v361
      %v1727 = vpop.f32.mrf.mxu0
      %v1728 = vadd.f32 0.0, %v1727
      %v1729 = vpop.f32.mrf.mxu0
      %1730 = vmatprep.mubr.f32.mxu0 0.0
      %1731 = vmatmul.mubr.f32.gmra.mxu0 %v363
      %v1732 = vpop.f32.mrf.mxu0
      %v1733 = vadd.f32 0.0, %v1732
      %v1734 = vpop.f32.mrf.mxu0
      %1735 = vmatprep.mubr.f32.mxu0 0.0
      %1736 = vmatmul.mubr.f32.gmra.mxu0 %v365
      %v1737 = vpop.f32.mrf.mxu0
      %v1738 = vadd.f32 0.0, %v1737
      %v1739 = vpop.f32.mrf.mxu0
      %1740 = vmatprep.mubr.f32.mxu0 0.0
      %1741 = vmatmul.mubr.f32.gmra.mxu0 %v367
      %v1742 = vpop.f32.mrf.mxu0
      %v1743 = vadd.f32 0.0, %v1742
      %v1744 = vpop.f32.mrf.mxu0
      %1745 = vmatprep.mubr.f32.mxu0 0.0
      %1746 = vmatmul.mubr.f32.gmra.mxu0 %v369
      %v1747 = vpop.f32.mrf.mxu0
      %v1748 = vadd.f32 0.0, %v1747
      %v1749 = vpop.f32.mrf.mxu0
      %1750 = vmatprep.mubr.f32.mxu0 0.0
      %1751 = vmatmul.mubr.f32.gmra.mxu0 %v371
      %v1752 = vpop.f32.mrf.mxu0
      %v1753 = vadd.f32 0.0, %v1752
      %v1754 = vpop.f32.mrf.mxu0
      %1755 = vmatprep.mubr.f32.mxu0 0.0
      %1756 = vmatmul.mubr.f32.gmra.mxu0 %v373
      %v1757 = vpop.f32.mrf.mxu0
      %v1758 = vadd.f32 0.0, %v1757
      %v1759 = vpop.f32.mrf.mxu0
      %1760 = vmatprep.mubr.f32.mxu0 0.0
      %1761 = vmatmul.mubr.f32.gmra.mxu0 %v375
      %v1762 = vpop.f32.mrf.mxu0
      %v1763 = vadd.f32 0.0, %v1762
      %v1764 = vpop.f32.mrf.mxu0
      %1765 = vmatprep.mubr.f32.mxu0 0.0
      %1766 = vmatmul.mubr.f32.gmra.mxu0 %v377
      %v1767 = vpop.f32.mrf.mxu0
      %v1768 = vadd.f32 0.0, %v1767
      %v1769 = vpop.f32.mrf.mxu0
      %1770 = vmatprep.mubr.f32.mxu0 0.0
      %1771 = vmatmul.mubr.f32.gmra.mxu0 %v379
      %v1772 = vpop.f32.mrf.mxu0
      %v1773 = vadd.f32 0.0, %v1772
      %v1774 = vpop.f32.mrf.mxu0
      %1775 = vmatprep.mubr.f32.mxu0 0.0
      %1776 = vmatmul.mubr.f32.gmra.mxu0 %v381
      %v1777 = vpop.f32.mrf.mxu0
      %v1778 = vadd.f32 0.0, %v1777
      %v1779 = vpop.f32.mrf.mxu0
      %1780 = vmatprep.mubr.f32.mxu0 0.0
      %1781 = vmatmul.mubr.f32.gmra.mxu0 %v383
      %v1782 = vpop.f32.mrf.mxu0
      %v1783 = vadd.f32 0.0, %v1782
      %v1784 = vpop.f32.mrf.mxu0
      %1785 = vmatprep.mubr.f32.mxu0 0.0
      %1786 = vmatmul.mubr.f32.gmra.mxu0 %v385
      %v1787 = vpop.f32.mrf.mxu0
      %v1788 = vadd.f32 0.0, %v1787
      %v1789 = vpop.f32.mrf.mxu0
      %1790 = vmatprep.mubr.f32.mxu0 0.0
      %1791 = vmatmul.mubr.f32.gmra.mxu0 %v387
      %v1792 = vpop.f32.mrf.mxu0
      %v1793 = vadd.f32 0.0, %v1792
      %v1794 = vpop.f32.mrf.mxu0
      %1795 = vmatprep.mubr.f32.mxu0 0.0
      %1796 = vmatmul.mubr.f32.gmra.mxu0 %v389
      %v1797 = vpop.f32.mrf.mxu0
      %v1798 = vadd.f32 0.0, %v1797
      %v1799 = vpop.f32.mrf.mxu0
      %1800 = vmatprep.mubr.f32.mxu0 0.0
      %1801 = vmatmul.mubr.f32.gmra.mxu0 %v391
      %v1802 = vpop.f32.mrf.mxu0
      %v1803 = vadd.f32 0.0, %v1802
      %v1804 = vpop.f32.mrf.mxu0
      %1805 = vmatprep.mubr.f32.mxu0 0.0
      %1806 = vmatmul.mubr.f32.gmra.mxu0 %v393
      %v1807 = vpop.f32.mrf.mxu0
      %v1808 = vadd.f32 0.0, %v1807
      %v1809 = vpop.f32.mrf.mxu0
      %1810 = vmatprep.mubr.f32.mxu0 0.0
      %1811 = vmatmul.mubr.f32.gmra.mxu0 %v395
      %v1812 = vpop.f32.mrf.mxu0
      %v1813 = vadd.f32 0.0, %v1812
      %v1814 = vpop.f32.mrf.mxu0
      %1815 = vmatprep.mubr.f32.mxu0 0.0
      %1816 = vmatmul.mubr.f32.gmra.mxu0 %v397
      %v1817 = vpop.f32.mrf.mxu0
      %v1818 = vadd.f32 0.0, %v1817
      %v1819 = vpop.f32.mrf.mxu0
      %1820 = vmatprep.mubr.f32.mxu0 0.0
      %1821 = vmatmul.mubr.f32.gmra.mxu0 %v399
      %v1822 = vpop.f32.mrf.mxu0
      %v1823 = vadd.f32 0.0, %v1822
      %v1824 = vpop.f32.mrf.mxu0
      %1825 = vmatprep.mubr.f32.mxu0 0.0
      %1826 = vmatmul.mubr.f32.gmra.mxu0 %v401
      %v1827 = vpop.f32.mrf.mxu0
      %v1828 = vadd.f32 0.0, %v1827
      %v1829 = vpop.f32.mrf.mxu0
      %1830 = vmatprep.mubr.f32.mxu0 0.0
      %1831 = vmatmul.mubr.f32.gmra.mxu0 %v403
      %v1832 = vpop.f32.mrf.mxu0
      %v1833 = vadd.f32 0.0, %v1832
      %v1834 = vpop.f32.mrf.mxu0
      %1835 = vmatprep.mubr.f32.mxu0 0.0
      %1836 = vmatmul.mubr.f32.gmra.mxu0 %v405
      %v1837 = vpop.f32.mrf.mxu0
      %v1838 = vadd.f32 0.0, %v1837
      %v1839 = vpop.f32.mrf.mxu0
      %1840 = vmatprep.mubr.f32.mxu0 0.0
      %1841 = vmatmul.mubr.f32.gmra.mxu0 %v407
      %v1842 = vpop.f32.mrf.mxu0
      %v1843 = vadd.f32 0.0, %v1842
      %v1844 = vpop.f32.mrf.mxu0
      %1845 = vmatprep.mubr.f32.mxu0 0.0
      %1846 = vmatmul.mubr.f32.gmra.mxu0 %v409
      %v1847 = vpop.f32.mrf.mxu0
      %v1848 = vadd.f32 0.0, %v1847
      %v1849 = vpop.f32.mrf.mxu0
      %1850 = vmatprep.mubr.f32.mxu0 0.0
      %1851 = vmatmul.mubr.f32.gmra.mxu0 %v411
      %v1852 = vpop.f32.mrf.mxu0
      %v1853 = vadd.f32 0.0, %v1852
      %v1854 = vpop.f32.mrf.mxu0
      %1855 = vmatprep.mubr.f32.mxu0 0.0
      %1856 = vmatmul.mubr.f32.gmra.mxu0 %v413
      %v1857 = vpop.f32.mrf.mxu0
      %v1858 = vadd.f32 0.0, %v1857
      %v1859 = vpop.f32.mrf.mxu0
      %1860 = vmatprep.mubr.f32.mxu0 0.0
      %1861 = vmatmul.mubr.f32.gmra.mxu0 %v415
      %v1862 = vpop.f32.mrf.mxu0
      %v1863 = vadd.f32 0.0, %v1862
      %v1864 = vpop.f32.mrf.mxu0
      %1865 = vmatprep.mubr.f32.mxu0 0.0
      %1866 = vmatmul.mubr.f32.gmra.mxu0 %v417
      %v1867 = vpop.f32.mrf.mxu0
      %v1868 = vadd.f32 0.0, %v1867
      %v1869 = vpop.f32.mrf.mxu0
      %1870 = vmatprep.mubr.f32.mxu0 0.0
      %1871 = vmatmul.mubr.f32.gmra.mxu0 %v419
      %v1872 = vpop.f32.mrf.mxu0
      %v1873 = vadd.f32 0.0, %v1872
      %v1874 = vpop.f32.mrf.mxu0
      %1875 = vmatprep.mubr.f32.mxu0 0.0
      %1876 = vmatmul.mubr.f32.gmra.mxu0 %v1654
      %v1877 = vpop.f32.mrf.mxu0
      %v1878 = vadd.f32 0.0, %v1877
      %v1879 = vpop.f32.mrf.mxu0
      %1880 = vmatprep.mubr.f32.mxu0 0.0
      %1881 = vmatmul.mubr.f32.gmra.mxu0 %v1656
      %v1882 = vpop.f32.mrf.mxu0
      %v1883 = vadd.f32 0.0, %v1882
      %v1884 = vpop.f32.mrf.mxu0
      %1885 = vdwg.mxu0
      %v1886 = vadd.f32 %v1583, %v1728
      %v1887 = vadd.f32 %v1584, %v1733
      %v1888 = vadd.f32 %v1585, %v1738
      %v1889 = vadd.f32 %v1586, %v1743
      %v1890 = vadd.f32 %v1587, %v1748
      %v1891 = vadd.f32 %v1588, %v1753
      %v1892 = vadd.f32 %v1589, %v1758
      %v1893 = vadd.f32 %v1590, %v1763
      %v1894 = vadd.f32 %v1591, %v1768
      %v1895 = vadd.f32 %v1592, %v1773
      %v1896 = vadd.f32 %v1593, %v1778
      %v1897 = vadd.f32 %v1594, %v1783
      %v1898 = vadd.f32 %v1595, %v1788
      %v1899 = vadd.f32 %v1596, %v1793
      %v1900 = vadd.f32 %v1597, %v1798
      %v1901 = vadd.f32 %v1598, %v1803
      %v1902 = vadd.f32 %v1599, %v1808
      %v1903 = vadd.f32 %v1600, %v1813
      %v1904 = vadd.f32 %v1601, %v1818
      %v1905 = vadd.f32 %v1602, %v1823
      %v1906 = vadd.f32 %v1603, %v1828
      %v1907 = vadd.f32 %v1604, %v1833
      %v1908 = vadd.f32 %v1605, %v1838
      %v1909 = vadd.f32 %v1606, %v1843
      %v1910 = vadd.f32 %v1607, %v1848
      %v1911 = vadd.f32 %v1608, %v1853
      %v1912 = vadd.f32 %v1609, %v1858
      %v1913 = vadd.f32 %v1610, %v1863
      %v1914 = vadd.f32 %v1611, %v1868
      %v1915 = vadd.f32 %v1612, %v1873
      %v1916 = vadd.f32 %v1613, %v1878
      %v1917 = vadd.f32 %v1614, %v1883
      %v1918 = vrot.slane %v219, 2
      %v1919 = vrot.slane %v220, 2
      %v1920 = vsel %vm942, %v1918, %v1919
      %v1921 = vrot.slane %v221, 2
      %v1922 = vsel %vm942, %v1919, %v1921
      %v1923 = vld [vmem:[%s1 + $0x14] sm:$0xf]
      %v1924 = vsel %vm356, %v1920, 0
      %v1926 = vsel %vm356, %v1922, 0
      %v1929 = vsel %vm421, %v1923, 0
      %1931 = vmatprep.subr.mxu0 0.0
      %1932 = vmatpush1.msra.mxu0 0.0
      %1933 = vmatprep.subr.mxu0 0.0
      %1934 = vmatpush1.msra.mxu0 0.0
      %1935 = vmatprep.subr.mxu0 0.0
      %1936 = vmatpush1.msra.mxu0 0.0
      %1937 = vmatprep.subr.mxu0 0.0
      %1938 = vmatpush1.msra.mxu0 0.0
      %1939 = vmatprep.subr.mxu0 0.0
      %1940 = vmatpush1.msra.mxu0 0.0
      %1941 = vmatprep.subr.mxu0 0.0
      %1942 = vmatpush1.msra.mxu0 0.0
      %1943 = vmatprep.subr.mxu0 0.0
      %1944 = vmatpush1.msra.mxu0 0.0
      %1945 = vmatprep.subr.mxu0 0.0
      %1946 = vmatpush1.msra.mxu0 0.0
      %1947 = vmatprep.subr.mxu0 0.0
      %1948 = vmatpush1.msra.mxu0 0.0
      %1949 = vmatprep.subr.mxu0 0.0
      %1950 = vmatpush1.msra.mxu0 0.0
      %1951 = vmatprep.subr.mxu0 0.0
      %1952 = vmatpush1.msra.mxu0 0.0
      %1953 = vmatprep.subr.mxu0 0.0
      %1954 = vmatpush1.msra.mxu0 0.0
      %1955 = vmatprep.subr.mxu0 0.0
      %1956 = vmatpush1.msra.mxu0 0.0
      %1957 = vmatprep.subr.mxu0 0.0
      %1958 = vmatpush1.msra.mxu0 0.0
      %1959 = vmatprep.subr.mxu0 0.0
      %1960 = vmatpush1.msra.mxu0 0.0
      %1961 = vmatprep.subr.mxu0 0.0
      %1962 = vmatpush1.msra.mxu0 %v1929
      %1963 = vmatprep.subr.mxu0 0.0
      %1964 = vmatpush2.msra.mxu0 0.0
      %1965 = vmatprep.subr.mxu0 0.0
      %1966 = vmatpush2.msra.mxu0 0.0
      %1967 = vmatprep.subr.mxu0 0.0
      %1968 = vmatpush2.msra.mxu0 0.0
      %1969 = vmatprep.subr.mxu0 0.0
      %1970 = vmatpush2.msra.mxu0 0.0
      %1971 = vmatprep.subr.mxu0 0.0
      %1972 = vmatpush2.msra.mxu0 0.0
      %1973 = vmatprep.subr.mxu0 0.0
      %1974 = vmatpush2.msra.mxu0 0.0
      %1975 = vmatprep.subr.mxu0 0.0
      %1976 = vmatpush2.msra.mxu0 0.0
      %1977 = vmatprep.subr.mxu0 0.0
      %1978 = vmatpush2.msra.mxu0 0.0
      %1979 = vmatprep.subr.mxu0 0.0
      %1980 = vmatpush2.msra.mxu0 0.0
      %1981 = vmatprep.subr.mxu0 0.0
      %1982 = vmatpush2.msra.mxu0 0.0
      %1983 = vmatprep.subr.mxu0 0.0
      %1984 = vmatpush2.msra.mxu0 0.0
      %1985 = vmatprep.subr.mxu0 0.0
      %1986 = vmatpush2.msra.mxu0 0.0
      %1987 = vmatprep.subr.mxu0 0.0
      %1988 = vmatpush2.msra.mxu0 0.0
      %1989 = vmatprep.subr.mxu0 0.0
      %1990 = vmatpush2.msra.mxu0 0.0
      %1991 = vmatprep.subr.mxu0 0.0
      %1992 = vmatpush2.msra.mxu0 0.0
      %1993 = vmatprep.subr.mxu0 0.0
      %1994 = vmatpush2.msra.mxu0 0.0
      %1995 = vmatprep.mubr.f32.mxu0 0.0
      %1996 = vmatmul.mubr.f32.gmra.mxu0 %v1028
      %v1997 = vpop.f32.mrf.mxu0
      %v1998 = vadd.f32 0.0, %v1997
      %v1999 = vpop.f32.mrf.mxu0
      %2000 = vmatprep.mubr.f32.mxu0 0.0
      %2001 = vmatmul.mubr.f32.gmra.mxu0 %v1030
      %v2002 = vpop.f32.mrf.mxu0
      %v2003 = vadd.f32 0.0, %v2002
      %v2004 = vpop.f32.mrf.mxu0
      %2005 = vmatprep.mubr.f32.mxu0 0.0
      %2006 = vmatmul.mubr.f32.gmra.mxu0 %v1032
      %v2007 = vpop.f32.mrf.mxu0
      %v2008 = vadd.f32 0.0, %v2007
      %v2009 = vpop.f32.mrf.mxu0
      %2010 = vmatprep.mubr.f32.mxu0 0.0
      %2011 = vmatmul.mubr.f32.gmra.mxu0 %v1034
      %v2012 = vpop.f32.mrf.mxu0
      %v2013 = vadd.f32 0.0, %v2012
      %v2014 = vpop.f32.mrf.mxu0
      %2015 = vmatprep.mubr.f32.mxu0 0.0
      %2016 = vmatmul.mubr.f32.gmra.mxu0 %v1036
      %v2017 = vpop.f32.mrf.mxu0
      %v2018 = vadd.f32 0.0, %v2017
      %v2019 = vpop.f32.mrf.mxu0
      %2020 = vmatprep.mubr.f32.mxu0 0.0
      %2021 = vmatmul.mubr.f32.gmra.mxu0 %v1038
      %v2022 = vpop.f32.mrf.mxu0
      %v2023 = vadd.f32 0.0, %v2022
      %v2024 = vpop.f32.mrf.mxu0
      %2025 = vmatprep.mubr.f32.mxu0 0.0
      %2026 = vmatmul.mubr.f32.gmra.mxu0 %v1040
      %v2027 = vpop.f32.mrf.mxu0
      %v2028 = vadd.f32 0.0, %v2027
      %v2029 = vpop.f32.mrf.mxu0
      %2030 = vmatprep.mubr.f32.mxu0 0.0
      %2031 = vmatmul.mubr.f32.gmra.mxu0 %v1042
      %v2032 = vpop.f32.mrf.mxu0
      %v2033 = vadd.f32 0.0, %v2032
      %v2034 = vpop.f32.mrf.mxu0
      %2035 = vmatprep.mubr.f32.mxu0 0.0
      %2036 = vmatmul.mubr.f32.gmra.mxu0 %v1044
      %v2037 = vpop.f32.mrf.mxu0
      %v2038 = vadd.f32 0.0, %v2037
      %v2039 = vpop.f32.mrf.mxu0
      %2040 = vmatprep.mubr.f32.mxu0 0.0
      %2041 = vmatmul.mubr.f32.gmra.mxu0 %v1046
      %v2042 = vpop.f32.mrf.mxu0
      %v2043 = vadd.f32 0.0, %v2042
      %v2044 = vpop.f32.mrf.mxu0
      %2045 = vmatprep.mubr.f32.mxu0 0.0
      %2046 = vmatmul.mubr.f32.gmra.mxu0 %v1048
      %v2047 = vpop.f32.mrf.mxu0
      %v2048 = vadd.f32 0.0, %v2047
      %v2049 = vpop.f32.mrf.mxu0
      %2050 = vmatprep.mubr.f32.mxu0 0.0
      %2051 = vmatmul.mubr.f32.gmra.mxu0 %v1050
      %v2052 = vpop.f32.mrf.mxu0
      %v2053 = vadd.f32 0.0, %v2052
      %v2054 = vpop.f32.mrf.mxu0
      %2055 = vmatprep.mubr.f32.mxu0 0.0
      %2056 = vmatmul.mubr.f32.gmra.mxu0 %v1052
      %v2057 = vpop.f32.mrf.mxu0
      %v2058 = vadd.f32 0.0, %v2057
      %v2059 = vpop.f32.mrf.mxu0
      %2060 = vmatprep.mubr.f32.mxu0 0.0
      %2061 = vmatmul.mubr.f32.gmra.mxu0 %v1054
      %v2062 = vpop.f32.mrf.mxu0
      %v2063 = vadd.f32 0.0, %v2062
      %v2064 = vpop.f32.mrf.mxu0
      %2065 = vmatprep.mubr.f32.mxu0 0.0
      %2066 = vmatmul.mubr.f32.gmra.mxu0 %v1056
      %v2067 = vpop.f32.mrf.mxu0
      %v2068 = vadd.f32 0.0, %v2067
      %v2069 = vpop.f32.mrf.mxu0
      %2070 = vmatprep.mubr.f32.mxu0 0.0
      %2071 = vmatmul.mubr.f32.gmra.mxu0 %v1058
      %v2072 = vpop.f32.mrf.mxu0
      %v2073 = vadd.f32 0.0, %v2072
      %v2074 = vpop.f32.mrf.mxu0
      %2075 = vmatprep.mubr.f32.mxu0 0.0
      %2076 = vmatmul.mubr.f32.gmra.mxu0 %v1060
      %v2077 = vpop.f32.mrf.mxu0
      %v2078 = vadd.f32 0.0, %v2077
      %v2079 = vpop.f32.mrf.mxu0
      %2080 = vmatprep.mubr.f32.mxu0 0.0
      %2081 = vmatmul.mubr.f32.gmra.mxu0 %v1062
      %v2082 = vpop.f32.mrf.mxu0
      %v2083 = vadd.f32 0.0, %v2082
      %v2084 = vpop.f32.mrf.mxu0
      %2085 = vmatprep.mubr.f32.mxu0 0.0
      %2086 = vmatmul.mubr.f32.gmra.mxu0 %v1064
      %v2087 = vpop.f32.mrf.mxu0
      %v2088 = vadd.f32 0.0, %v2087
      %v2089 = vpop.f32.mrf.mxu0
      %2090 = vmatprep.mubr.f32.mxu0 0.0
      %2091 = vmatmul.mubr.f32.gmra.mxu0 %v1066
      %v2092 = vpop.f32.mrf.mxu0
      %v2093 = vadd.f32 0.0, %v2092
      %v2094 = vpop.f32.mrf.mxu0
      %2095 = vmatprep.mubr.f32.mxu0 0.0
      %2096 = vmatmul.mubr.f32.gmra.mxu0 %v1068
      %v2097 = vpop.f32.mrf.mxu0
      %v2098 = vadd.f32 0.0, %v2097
      %v2099 = vpop.f32.mrf.mxu0
      %2100 = vmatprep.mubr.f32.mxu0 0.0
      %2101 = vmatmul.mubr.f32.gmra.mxu0 %v1070
      %v2102 = vpop.f32.mrf.mxu0
      %v2103 = vadd.f32 0.0, %v2102
      %v2104 = vpop.f32.mrf.mxu0
      %2105 = vmatprep.mubr.f32.mxu0 0.0
      %2106 = vmatmul.mubr.f32.gmra.mxu0 %v1072
      %v2107 = vpop.f32.mrf.mxu0
      %v2108 = vadd.f32 0.0, %v2107
      %v2109 = vpop.f32.mrf.mxu0
      %2110 = vmatprep.mubr.f32.mxu0 0.0
      %2111 = vmatmul.mubr.f32.gmra.mxu0 %v1074
      %v2112 = vpop.f32.mrf.mxu0
      %v2113 = vadd.f32 0.0, %v2112
      %v2114 = vpop.f32.mrf.mxu0
      %2115 = vmatprep.mubr.f32.mxu0 0.0
      %2116 = vmatmul.mubr.f32.gmra.mxu0 %v1076
      %v2117 = vpop.f32.mrf.mxu0
      %v2118 = vadd.f32 0.0, %v2117
      %v2119 = vpop.f32.mrf.mxu0
      %2120 = vmatprep.mubr.f32.mxu0 0.0
      %2121 = vmatmul.mubr.f32.gmra.mxu0 %v1078
      %v2122 = vpop.f32.mrf.mxu0
      %v2123 = vadd.f32 0.0, %v2122
      %v2124 = vpop.f32.mrf.mxu0
      %2125 = vmatprep.mubr.f32.mxu0 0.0
      %2126 = vmatmul.mubr.f32.gmra.mxu0 %v1080
      %v2127 = vpop.f32.mrf.mxu0
      %v2128 = vadd.f32 0.0, %v2127
      %v2129 = vpop.f32.mrf.mxu0
      %2130 = vmatprep.mubr.f32.mxu0 0.0
      %2131 = vmatmul.mubr.f32.gmra.mxu0 %v1082
      %v2132 = vpop.f32.mrf.mxu0
      %v2133 = vadd.f32 0.0, %v2132
      %v2134 = vpop.f32.mrf.mxu0
      %2135 = vmatprep.mubr.f32.mxu0 0.0
      %2136 = vmatmul.mubr.f32.gmra.mxu0 %v1084
      %v2137 = vpop.f32.mrf.mxu0
      %v2138 = vadd.f32 0.0, %v2137
      %v2139 = vpop.f32.mrf.mxu0
      %2140 = vmatprep.mubr.f32.mxu0 0.0
      %2141 = vmatmul.mubr.f32.gmra.mxu0 %v1086
      %v2142 = vpop.f32.mrf.mxu0
      %v2143 = vadd.f32 0.0, %v2142
      %v2144 = vpop.f32.mrf.mxu0
      %2145 = vmatprep.mubr.f32.mxu0 0.0
      %2146 = vmatmul.mubr.f32.gmra.mxu0 %v1924
      %v2147 = vpop.f32.mrf.mxu0
      %v2148 = vadd.f32 0.0, %v2147
      %v2149 = vpop.f32.mrf.mxu0
      %2150 = vmatprep.mubr.f32.mxu0 0.0
      %2151 = vmatmul.mubr.f32.gmra.mxu0 %v1926
      %v2152 = vpop.f32.mrf.mxu0
      %v2153 = vadd.f32 0.0, %v2152
      %v2154 = vpop.f32.mrf.mxu0
      %2155 = vdwg.mxu0
      %v2156 = vadd.f32 %v1886, %v1998
      %v2157 = vadd.f32 %v1887, %v2003
      %v2158 = vadd.f32 %v1888, %v2008
      %v2159 = vadd.f32 %v1889, %v2013
      %v2160 = vadd.f32 %v1890, %v2018
      %v2161 = vadd.f32 %v1891, %v2023
      %v2162 = vadd.f32 %v1892, %v2028
      %v2163 = vadd.f32 %v1893, %v2033
      %v2164 = vadd.f32 %v1894, %v2038
      %v2165 = vadd.f32 %v1895, %v2043
      %v2166 = vadd.f32 %v1896, %v2048
      %v2167 = vadd.f32 %v1897, %v2053
      %v2168 = vadd.f32 %v1898, %v2058
      %v2169 = vadd.f32 %v1899, %v2063
      %v2170 = vadd.f32 %v1900, %v2068
      %v2171 = vadd.f32 %v1901, %v2073
      %v2172 = vadd.f32 %v1902, %v2078
      %v2173 = vadd.f32 %v1903, %v2083
      %v2174 = vadd.f32 %v1904, %v2088
      %v2175 = vadd.f32 %v1905, %v2093
      %v2176 = vadd.f32 %v1906, %v2098
      %v2177 = vadd.f32 %v1907, %v2103
      %v2178 = vadd.f32 %v1908, %v2108
      %v2179 = vadd.f32 %v1909, %v2113
      %v2180 = vadd.f32 %v1910, %v2118
      %v2181 = vadd.f32 %v1911, %v2123
      %v2182 = vadd.f32 %v1912, %v2128
      %v2183 = vadd.f32 %v1913, %v2133
      %v2184 = vadd.f32 %v1914, %v2138
      %v2185 = vadd.f32 %v1915, %v2143
      %v2186 = vadd.f32 %v1916, %v2148
      %v2187 = vadd.f32 %v1917, %v2153
      %v2188 = vld [vmem:[%s1 + $0x18] sm:$0xf]
      %v2190 = vsel %vm356, %v222, 0
      %v2193 = vsel %vm356, %v223, 0
      %v2196 = vsel %vm421, %v2188, 0
      %2198 = vmatprep.subr.mxu0 0.0
      %2199 = vmatpush1.msra.mxu0 0.0
      %2200 = vmatprep.subr.mxu0 0.0
      %2201 = vmatpush1.msra.mxu0 0.0
      %2202 = vmatprep.subr.mxu0 0.0
      %2203 = vmatpush1.msra.mxu0 0.0
      %2204 = vmatprep.subr.mxu0 0.0
      %2205 = vmatpush1.msra.mxu0 0.0
      %2206 = vmatprep.subr.mxu0 0.0
      %2207 = vmatpush1.msra.mxu0 0.0
      %2208 = vmatprep.subr.mxu0 0.0
      %2209 = vmatpush1.msra.mxu0 0.0
      %2210 = vmatprep.subr.mxu0 0.0
      %2211 = vmatpush1.msra.mxu0 0.0
      %2212 = vmatprep.subr.mxu0 0.0
      %2213 = vmatpush1.msra.mxu0 0.0
      %2214 = vmatprep.subr.mxu0 0.0
      %2215 = vmatpush1.msra.mxu0 0.0
      %2216 = vmatprep.subr.mxu0 0.0
      %2217 = vmatpush1.msra.mxu0 0.0
      %2218 = vmatprep.subr.mxu0 0.0
      %2219 = vmatpush1.msra.mxu0 0.0
      %2220 = vmatprep.subr.mxu0 0.0
      %2221 = vmatpush1.msra.mxu0 0.0
      %2222 = vmatprep.subr.mxu0 0.0
      %2223 = vmatpush1.msra.mxu0 0.0
      %2224 = vmatprep.subr.mxu0 0.0
      %2225 = vmatpush1.msra.mxu0 0.0
      %2226 = vmatprep.subr.mxu0 0.0
      %2227 = vmatpush1.msra.mxu0 0.0
      %2228 = vmatprep.subr.mxu0 0.0
      %2229 = vmatpush1.msra.mxu0 %v2196
      %2230 = vmatprep.subr.mxu0 0.0
      %2231 = vmatpush2.msra.mxu0 0.0
      %2232 = vmatprep.subr.mxu0 0.0
      %2233 = vmatpush2.msra.mxu0 0.0
      %2234 = vmatprep.subr.mxu0 0.0
      %2235 = vmatpush2.msra.mxu0 0.0
      %2236 = vmatprep.subr.mxu0 0.0
      %2237 = vmatpush2.msra.mxu0 0.0
      %2238 = vmatprep.subr.mxu0 0.0
      %2239 = vmatpush2.msra.mxu0 0.0
      %2240 = vmatprep.subr.mxu0 0.0
      %2241 = vmatpush2.msra.mxu0 0.0
      %2242 = vmatprep.subr.mxu0 0.0
      %2243 = vmatpush2.msra.mxu0 0.0
      %2244 = vmatprep.subr.mxu0 0.0
      %2245 = vmatpush2.msra.mxu0 0.0
      %2246 = vmatprep.subr.mxu0 0.0
      %2247 = vmatpush2.msra.mxu0 0.0
      %2248 = vmatprep.subr.mxu0 0.0
      %2249 = vmatpush2.msra.mxu0 0.0
      %2250 = vmatprep.subr.mxu0 0.0
      %2251 = vmatpush2.msra.mxu0 0.0
      %2252 = vmatprep.subr.mxu0 0.0
      %2253 = vmatpush2.msra.mxu0 0.0
      %2254 = vmatprep.subr.mxu0 0.0
      %2255 = vmatpush2.msra.mxu0 0.0
      %2256 = vmatprep.subr.mxu0 0.0
      %2257 = vmatpush2.msra.mxu0 0.0
      %2258 = vmatprep.subr.mxu0 0.0
      %2259 = vmatpush2.msra.mxu0 0.0
      %2260 = vmatprep.subr.mxu0 0.0
      %2261 = vmatpush2.msra.mxu0 0.0
      %2262 = vmatprep.mubr.f32.mxu0 0.0
      %2263 = vmatmul.mubr.f32.gmra.mxu0 %v658
      %v2264 = vpop.f32.mrf.mxu0
      %v2265 = vadd.f32 0.0, %v2264
      %v2266 = vpop.f32.mrf.mxu0
      %2267 = vmatprep.mubr.f32.mxu0 0.0
      %2268 = vmatmul.mubr.f32.gmra.mxu0 %v660
      %v2269 = vpop.f32.mrf.mxu0
      %v2270 = vadd.f32 0.0, %v2269
      %v2271 = vpop.f32.mrf.mxu0
      %2272 = vmatprep.mubr.f32.mxu0 0.0
      %2273 = vmatmul.mubr.f32.gmra.mxu0 %v662
      %v2274 = vpop.f32.mrf.mxu0
      %v2275 = vadd.f32 0.0, %v2274
      %v2276 = vpop.f32.mrf.mxu0
      %2277 = vmatprep.mubr.f32.mxu0 0.0
      %2278 = vmatmul.mubr.f32.gmra.mxu0 %v664
      %v2279 = vpop.f32.mrf.mxu0
      %v2280 = vadd.f32 0.0, %v2279
      %v2281 = vpop.f32.mrf.mxu0
      %2282 = vmatprep.mubr.f32.mxu0 0.0
      %2283 = vmatmul.mubr.f32.gmra.mxu0 %v666
      %v2284 = vpop.f32.mrf.mxu0
      %v2285 = vadd.f32 0.0, %v2284
      %v2286 = vpop.f32.mrf.mxu0
      %2287 = vmatprep.mubr.f32.mxu0 0.0
      %2288 = vmatmul.mubr.f32.gmra.mxu0 %v668
      %v2289 = vpop.f32.mrf.mxu0
      %v2290 = vadd.f32 0.0, %v2289
      %v2291 = vpop.f32.mrf.mxu0
      %2292 = vmatprep.mubr.f32.mxu0 0.0
      %2293 = vmatmul.mubr.f32.gmra.mxu0 %v670
      %v2294 = vpop.f32.mrf.mxu0
      %v2295 = vadd.f32 0.0, %v2294
      %v2296 = vpop.f32.mrf.mxu0
      %2297 = vmatprep.mubr.f32.mxu0 0.0
      %2298 = vmatmul.mubr.f32.gmra.mxu0 %v672
      %v2299 = vpop.f32.mrf.mxu0
      %v2300 = vadd.f32 0.0, %v2299
      %v2301 = vpop.f32.mrf.mxu0
      %2302 = vmatprep.mubr.f32.mxu0 0.0
      %2303 = vmatmul.mubr.f32.gmra.mxu0 %v674
      %v2304 = vpop.f32.mrf.mxu0
      %v2305 = vadd.f32 0.0, %v2304
      %v2306 = vpop.f32.mrf.mxu0
      %2307 = vmatprep.mubr.f32.mxu0 0.0
      %2308 = vmatmul.mubr.f32.gmra.mxu0 %v676
      %v2309 = vpop.f32.mrf.mxu0
      %v2310 = vadd.f32 0.0, %v2309
      %v2311 = vpop.f32.mrf.mxu0
      %2312 = vmatprep.mubr.f32.mxu0 0.0
      %2313 = vmatmul.mubr.f32.gmra.mxu0 %v678
      %v2314 = vpop.f32.mrf.mxu0
      %v2315 = vadd.f32 0.0, %v2314
      %v2316 = vpop.f32.mrf.mxu0
      %2317 = vmatprep.mubr.f32.mxu0 0.0
      %2318 = vmatmul.mubr.f32.gmra.mxu0 %v680
      %v2319 = vpop.f32.mrf.mxu0
      %v2320 = vadd.f32 0.0, %v2319
      %v2321 = vpop.f32.mrf.mxu0
      %2322 = vmatprep.mubr.f32.mxu0 0.0
      %2323 = vmatmul.mubr.f32.gmra.mxu0 %v682
      %v2324 = vpop.f32.mrf.mxu0
      %v2325 = vadd.f32 0.0, %v2324
      %v2326 = vpop.f32.mrf.mxu0
      %2327 = vmatprep.mubr.f32.mxu0 0.0
      %2328 = vmatmul.mubr.f32.gmra.mxu0 %v684
      %v2329 = vpop.f32.mrf.mxu0
      %v2330 = vadd.f32 0.0, %v2329
      %v2331 = vpop.f32.mrf.mxu0
      %2332 = vmatprep.mubr.f32.mxu0 0.0
      %2333 = vmatmul.mubr.f32.gmra.mxu0 %v686
      %v2334 = vpop.f32.mrf.mxu0
      %v2335 = vadd.f32 0.0, %v2334
      %v2336 = vpop.f32.mrf.mxu0
      %2337 = vmatprep.mubr.f32.mxu0 0.0
      %2338 = vmatmul.mubr.f32.gmra.mxu0 %v688
      %v2339 = vpop.f32.mrf.mxu0
      %v2340 = vadd.f32 0.0, %v2339
      %v2341 = vpop.f32.mrf.mxu0
      %2342 = vmatprep.mubr.f32.mxu0 0.0
      %2343 = vmatmul.mubr.f32.gmra.mxu0 %v690
      %v2344 = vpop.f32.mrf.mxu0
      %v2345 = vadd.f32 0.0, %v2344
      %v2346 = vpop.f32.mrf.mxu0
      %2347 = vmatprep.mubr.f32.mxu0 0.0
      %2348 = vmatmul.mubr.f32.gmra.mxu0 %v692
      %v2349 = vpop.f32.mrf.mxu0
      %v2350 = vadd.f32 0.0, %v2349
      %v2351 = vpop.f32.mrf.mxu0
      %2352 = vmatprep.mubr.f32.mxu0 0.0
      %2353 = vmatmul.mubr.f32.gmra.mxu0 %v694
      %v2354 = vpop.f32.mrf.mxu0
      %v2355 = vadd.f32 0.0, %v2354
      %v2356 = vpop.f32.mrf.mxu0
      %2357 = vmatprep.mubr.f32.mxu0 0.0
      %2358 = vmatmul.mubr.f32.gmra.mxu0 %v696
      %v2359 = vpop.f32.mrf.mxu0
      %v2360 = vadd.f32 0.0, %v2359
      %v2361 = vpop.f32.mrf.mxu0
      %2362 = vmatprep.mubr.f32.mxu0 0.0
      %2363 = vmatmul.mubr.f32.gmra.mxu0 %v698
      %v2364 = vpop.f32.mrf.mxu0
      %v2365 = vadd.f32 0.0, %v2364
      %v2366 = vpop.f32.mrf.mxu0
      %2367 = vmatprep.mubr.f32.mxu0 0.0
      %2368 = vmatmul.mubr.f32.gmra.mxu0 %v700
      %v2369 = vpop.f32.mrf.mxu0
      %v2370 = vadd.f32 0.0, %v2369
      %v2371 = vpop.f32.mrf.mxu0
      %2372 = vmatprep.mubr.f32.mxu0 0.0
      %2373 = vmatmul.mubr.f32.gmra.mxu0 %v702
      %v2374 = vpop.f32.mrf.mxu0
      %v2375 = vadd.f32 0.0, %v2374
      %v2376 = vpop.f32.mrf.mxu0
      %2377 = vmatprep.mubr.f32.mxu0 0.0
      %2378 = vmatmul.mubr.f32.gmra.mxu0 %v704
      %v2379 = vpop.f32.mrf.mxu0
      %v2380 = vadd.f32 0.0, %v2379
      %v2381 = vpop.f32.mrf.mxu0
      %2382 = vmatprep.mubr.f32.mxu0 0.0
      %2383 = vmatmul.mubr.f32.gmra.mxu0 %v706
      %v2384 = vpop.f32.mrf.mxu0
      %v2385 = vadd.f32 0.0, %v2384
      %v2386 = vpop.f32.mrf.mxu0
      %2387 = vmatprep.mubr.f32.mxu0 0.0
      %2388 = vmatmul.mubr.f32.gmra.mxu0 %v708
      %v2389 = vpop.f32.mrf.mxu0
      %v2390 = vadd.f32 0.0, %v2389
      %v2391 = vpop.f32.mrf.mxu0
      %2392 = vmatprep.mubr.f32.mxu0 0.0
      %2393 = vmatmul.mubr.f32.gmra.mxu0 %v710
      %v2394 = vpop.f32.mrf.mxu0
      %v2395 = vadd.f32 0.0, %v2394
      %v2396 = vpop.f32.mrf.mxu0
      %2397 = vmatprep.mubr.f32.mxu0 0.0
      %2398 = vmatmul.mubr.f32.gmra.mxu0 %v712
      %v2399 = vpop.f32.mrf.mxu0
      %v2400 = vadd.f32 0.0, %v2399
      %v2401 = vpop.f32.mrf.mxu0
      %2402 = vmatprep.mubr.f32.mxu0 0.0
      %2403 = vmatmul.mubr.f32.gmra.mxu0 %v1350
      %v2404 = vpop.f32.mrf.mxu0
      %v2405 = vadd.f32 0.0, %v2404
      %v2406 = vpop.f32.mrf.mxu0
      %2407 = vmatprep.mubr.f32.mxu0 0.0
      %2408 = vmatmul.mubr.f32.gmra.mxu0 %v1353
      %v2409 = vpop.f32.mrf.mxu0
      %v2410 = vadd.f32 0.0, %v2409
      %v2411 = vpop.f32.mrf.mxu0
      %2412 = vmatprep.mubr.f32.mxu0 0.0
      %2413 = vmatmul.mubr.f32.gmra.mxu0 %v2190
      %v2414 = vpop.f32.mrf.mxu0
      %v2415 = vadd.f32 0.0, %v2414
      %v2416 = vpop.f32.mrf.mxu0
      %2417 = vmatprep.mubr.f32.mxu0 0.0
      %2418 = vmatmul.mubr.f32.gmra.mxu0 %v2193
      %v2419 = vpop.f32.mrf.mxu0
      %v2420 = vadd.f32 0.0, %v2419
      %v2421 = vpop.f32.mrf.mxu0
      %2422 = vdwg.mxu0
      %v2423 = vadd.f32 %v2156, %v2265
      %v2424 = vadd.f32 %v2157, %v2270
      %v2425 = vadd.f32 %v2158, %v2275
      %v2426 = vadd.f32 %v2159, %v2280
      %v2427 = vadd.f32 %v2160, %v2285
      %v2428 = vadd.f32 %v2161, %v2290
      %v2429 = vadd.f32 %v2162, %v2295
      %v2430 = vadd.f32 %v2163, %v2300
      %v2431 = vadd.f32 %v2164, %v2305
      %v2432 = vadd.f32 %v2165, %v2310
      %v2433 = vadd.f32 %v2166, %v2315
      %v2434 = vadd.f32 %v2167, %v2320
      %v2435 = vadd.f32 %v2168, %v2325
      %v2436 = vadd.f32 %v2169, %v2330
      %v2437 = vadd.f32 %v2170, %v2335
      %v2438 = vadd.f32 %v2171, %v2340
      %v2439 = vadd.f32 %v2172, %v2345
      %v2440 = vadd.f32 %v2173, %v2350
      %v2441 = vadd.f32 %v2174, %v2355
      %v2442 = vadd.f32 %v2175, %v2360
      %v2443 = vadd.f32 %v2176, %v2365
      %v2444 = vadd.f32 %v2177, %v2370
      %v2445 = vadd.f32 %v2178, %v2375
      %v2446 = vadd.f32 %v2179, %v2380
      %v2447 = vadd.f32 %v2180, %v2385
      %v2448 = vadd.f32 %v2181, %v2390
      %v2449 = vadd.f32 %v2182, %v2395
      %v2450 = vadd.f32 %v2183, %v2400
      %v2451 = vadd.f32 %v2184, %v2405
      %v2452 = vadd.f32 %v2185, %v2410
      %v2453 = vadd.f32 %v2186, %v2415
      %v2454 = vadd.f32 %v2187, %v2420
      %v2456 = vrot.slane %v222, 1
      %v2457 = vrot.slane %v223, 1
      %v2458 = vsel %vm274, %v2456, %v2457
      %v2459 = vrot.slane %v224, 1
      %v2460 = vsel %vm274, %v2457, %v2459
      %v2461 = vld [vmem:[%s1 + $0x1c] sm:$0xf]
      %v2462 = vsel %vm356, %v2458, 0
      %v2464 = vsel %vm356, %v2460, 0
      %v2467 = vsel %vm421, %v2461, 0
      %2469 = vmatprep.subr.mxu0 0.0
      %2470 = vmatpush1.msra.mxu0 0.0
      %2471 = vmatprep.subr.mxu0 0.0
      %2472 = vmatpush1.msra.mxu0 0.0
      %2473 = vmatprep.subr.mxu0 0.0
      %2474 = vmatpush1.msra.mxu0 0.0
      %2475 = vmatprep.subr.mxu0 0.0
      %2476 = vmatpush1.msra.mxu0 0.0
      %2477 = vmatprep.subr.mxu0 0.0
      %2478 = vmatpush1.msra.mxu0 0.0
      %2479 = vmatprep.subr.mxu0 0.0
      %2480 = vmatpush1.msra.mxu0 0.0
      %2481 = vmatprep.subr.mxu0 0.0
      %2482 = vmatpush1.msra.mxu0 0.0
      %2483 = vmatprep.subr.mxu0 0.0
      %2484 = vmatpush1.msra.mxu0 0.0
      %2485 = vmatprep.subr.mxu0 0.0
      %2486 = vmatpush1.msra.mxu0 0.0
      %2487 = vmatprep.subr.mxu0 0.0
      %2488 = vmatpush1.msra.mxu0 0.0
      %2489 = vmatprep.subr.mxu0 0.0
      %2490 = vmatpush1.msra.mxu0 0.0
      %2491 = vmatprep.subr.mxu0 0.0
      %2492 = vmatpush1.msra.mxu0 0.0
      %2493 = vmatprep.subr.mxu0 0.0
      %2494 = vmatpush1.msra.mxu0 0.0
      %2495 = vmatprep.subr.mxu0 0.0
      %2496 = vmatpush1.msra.mxu0 0.0
      %2497 = vmatprep.subr.mxu0 0.0
      %2498 = vmatpush1.msra.mxu0 0.0
      %2499 = vmatprep.subr.mxu0 0.0
      %2500 = vmatpush1.msra.mxu0 %v2467
      %2501 = vmatprep.subr.mxu0 0.0
      %2502 = vmatpush2.msra.mxu0 0.0
      %2503 = vmatprep.subr.mxu0 0.0
      %2504 = vmatpush2.msra.mxu0 0.0
      %2505 = vmatprep.subr.mxu0 0.0
      %2506 = vmatpush2.msra.mxu0 0.0
      %2507 = vmatprep.subr.mxu0 0.0
      %2508 = vmatpush2.msra.mxu0 0.0
      %2509 = vmatprep.subr.mxu0 0.0
      %2510 = vmatpush2.msra.mxu0 0.0
      %2511 = vmatprep.subr.mxu0 0.0
      %2512 = vmatpush2.msra.mxu0 0.0
      %2513 = vmatprep.subr.mxu0 0.0
      %2514 = vmatpush2.msra.mxu0 0.0
      %2515 = vmatprep.subr.mxu0 0.0
      %2516 = vmatpush2.msra.mxu0 0.0
      %2517 = vmatprep.subr.mxu0 0.0
      %2518 = vmatpush2.msra.mxu0 0.0
      %2519 = vmatprep.subr.mxu0 0.0
      %2520 = vmatpush2.msra.mxu0 0.0
      %2521 = vmatprep.subr.mxu0 0.0
      %2522 = vmatpush2.msra.mxu0 0.0
      %2523 = vmatprep.subr.mxu0 0.0
      %2524 = vmatpush2.msra.mxu0 0.0
      %2525 = vmatprep.subr.mxu0 0.0
      %2526 = vmatpush2.msra.mxu0 0.0
      %2527 = vmatprep.subr.mxu0 0.0
      %2528 = vmatpush2.msra.mxu0 0.0
      %2529 = vmatprep.subr.mxu0 0.0
      %2530 = vmatpush2.msra.mxu0 0.0
      %2531 = vmatprep.subr.mxu0 0.0
      %2532 = vmatpush2.msra.mxu0 0.0
      %2533 = vmatprep.mubr.f32.mxu0 0.0
      %2534 = vmatmul.mubr.f32.gmra.mxu0 %v365
      %v2535 = vpop.f32.mrf.mxu0
      %v2536 = vadd.f32 0.0, %v2535
      %v2537 = vpop.f32.mrf.mxu0
      %2538 = vmatprep.mubr.f32.mxu0 0.0
      %2539 = vmatmul.mubr.f32.gmra.mxu0 %v367
      %v2540 = vpop.f32.mrf.mxu0
      %v2541 = vadd.f32 0.0, %v2540
      %v2542 = vpop.f32.mrf.mxu0
      %2543 = vmatprep.mubr.f32.mxu0 0.0
      %2544 = vmatmul.mubr.f32.gmra.mxu0 %v369
      %v2545 = vpop.f32.mrf.mxu0
      %v2546 = vadd.f32 0.0, %v2545
      %v2547 = vpop.f32.mrf.mxu0
      %2548 = vmatprep.mubr.f32.mxu0 0.0
      %2549 = vmatmul.mubr.f32.gmra.mxu0 %v371
      %v2550 = vpop.f32.mrf.mxu0
      %v2551 = vadd.f32 0.0, %v2550
      %v2552 = vpop.f32.mrf.mxu0
      %2553 = vmatprep.mubr.f32.mxu0 0.0
      %2554 = vmatmul.mubr.f32.gmra.mxu0 %v373
      %v2555 = vpop.f32.mrf.mxu0
      %v2556 = vadd.f32 0.0, %v2555
      %v2557 = vpop.f32.mrf.mxu0
      %2558 = vmatprep.mubr.f32.mxu0 0.0
      %2559 = vmatmul.mubr.f32.gmra.mxu0 %v375
      %v2560 = vpop.f32.mrf.mxu0
      %v2561 = vadd.f32 0.0, %v2560
      %v2562 = vpop.f32.mrf.mxu0
      %2563 = vmatprep.mubr.f32.mxu0 0.0
      %2564 = vmatmul.mubr.f32.gmra.mxu0 %v377
      %v2565 = vpop.f32.mrf.mxu0
      %v2566 = vadd.f32 0.0, %v2565
      %v2567 = vpop.f32.mrf.mxu0
      %2568 = vmatprep.mubr.f32.mxu0 0.0
      %2569 = vmatmul.mubr.f32.gmra.mxu0 %v379
      %v2570 = vpop.f32.mrf.mxu0
      %v2571 = vadd.f32 0.0, %v2570
      %v2572 = vpop.f32.mrf.mxu0
      %2573 = vmatprep.mubr.f32.mxu0 0.0
      %2574 = vmatmul.mubr.f32.gmra.mxu0 %v381
      %v2575 = vpop.f32.mrf.mxu0
      %v2576 = vadd.f32 0.0, %v2575
      %v2577 = vpop.f32.mrf.mxu0
      %2578 = vmatprep.mubr.f32.mxu0 0.0
      %2579 = vmatmul.mubr.f32.gmra.mxu0 %v383
      %v2580 = vpop.f32.mrf.mxu0
      %v2581 = vadd.f32 0.0, %v2580
      %v2582 = vpop.f32.mrf.mxu0
      %2583 = vmatprep.mubr.f32.mxu0 0.0
      %2584 = vmatmul.mubr.f32.gmra.mxu0 %v385
      %v2585 = vpop.f32.mrf.mxu0
      %v2586 = vadd.f32 0.0, %v2585
      %v2587 = vpop.f32.mrf.mxu0
      %2588 = vmatprep.mubr.f32.mxu0 0.0
      %2589 = vmatmul.mubr.f32.gmra.mxu0 %v387
      %v2590 = vpop.f32.mrf.mxu0
      %v2591 = vadd.f32 0.0, %v2590
      %v2592 = vpop.f32.mrf.mxu0
      %2593 = vmatprep.mubr.f32.mxu0 0.0
      %2594 = vmatmul.mubr.f32.gmra.mxu0 %v389
      %v2595 = vpop.f32.mrf.mxu0
      %v2596 = vadd.f32 0.0, %v2595
      %v2597 = vpop.f32.mrf.mxu0
      %2598 = vmatprep.mubr.f32.mxu0 0.0
      %2599 = vmatmul.mubr.f32.gmra.mxu0 %v391
      %v2600 = vpop.f32.mrf.mxu0
      %v2601 = vadd.f32 0.0, %v2600
      %v2602 = vpop.f32.mrf.mxu0
      %2603 = vmatprep.mubr.f32.mxu0 0.0
      %2604 = vmatmul.mubr.f32.gmra.mxu0 %v393
      %v2605 = vpop.f32.mrf.mxu0
      %v2606 = vadd.f32 0.0, %v2605
      %v2607 = vpop.f32.mrf.mxu0
      %2608 = vmatprep.mubr.f32.mxu0 0.0
      %2609 = vmatmul.mubr.f32.gmra.mxu0 %v395
      %v2610 = vpop.f32.mrf.mxu0
      %v2611 = vadd.f32 0.0, %v2610
      %v2612 = vpop.f32.mrf.mxu0
      %2613 = vmatprep.mubr.f32.mxu0 0.0
      %2614 = vmatmul.mubr.f32.gmra.mxu0 %v397
      %v2615 = vpop.f32.mrf.mxu0
      %v2616 = vadd.f32 0.0, %v2615
      %v2617 = vpop.f32.mrf.mxu0
      %2618 = vmatprep.mubr.f32.mxu0 0.0
      %2619 = vmatmul.mubr.f32.gmra.mxu0 %v399
      %v2620 = vpop.f32.mrf.mxu0
      %v2621 = vadd.f32 0.0, %v2620
      %v2622 = vpop.f32.mrf.mxu0
      %2623 = vmatprep.mubr.f32.mxu0 0.0
      %2624 = vmatmul.mubr.f32.gmra.mxu0 %v401
      %v2625 = vpop.f32.mrf.mxu0
      %v2626 = vadd.f32 0.0, %v2625
      %v2627 = vpop.f32.mrf.mxu0
      %2628 = vmatprep.mubr.f32.mxu0 0.0
      %2629 = vmatmul.mubr.f32.gmra.mxu0 %v403
      %v2630 = vpop.f32.mrf.mxu0
      %v2631 = vadd.f32 0.0, %v2630
      %v2632 = vpop.f32.mrf.mxu0
      %2633 = vmatprep.mubr.f32.mxu0 0.0
      %2634 = vmatmul.mubr.f32.gmra.mxu0 %v405
      %v2635 = vpop.f32.mrf.mxu0
      %v2636 = vadd.f32 0.0, %v2635
      %v2637 = vpop.f32.mrf.mxu0
      %2638 = vmatprep.mubr.f32.mxu0 0.0
      %2639 = vmatmul.mubr.f32.gmra.mxu0 %v407
      %v2640 = vpop.f32.mrf.mxu0
      %v2641 = vadd.f32 0.0, %v2640
      %v2642 = vpop.f32.mrf.mxu0
      %2643 = vmatprep.mubr.f32.mxu0 0.0
      %2644 = vmatmul.mubr.f32.gmra.mxu0 %v409
      %v2645 = vpop.f32.mrf.mxu0
      %v2646 = vadd.f32 0.0, %v2645
      %v2647 = vpop.f32.mrf.mxu0
      %2648 = vmatprep.mubr.f32.mxu0 0.0
      %2649 = vmatmul.mubr.f32.gmra.mxu0 %v411
      %v2650 = vpop.f32.mrf.mxu0
      %v2651 = vadd.f32 0.0, %v2650
      %v2652 = vpop.f32.mrf.mxu0
      %2653 = vmatprep.mubr.f32.mxu0 0.0
      %2654 = vmatmul.mubr.f32.gmra.mxu0 %v413
      %v2655 = vpop.f32.mrf.mxu0
      %v2656 = vadd.f32 0.0, %v2655
      %v2657 = vpop.f32.mrf.mxu0
      %2658 = vmatprep.mubr.f32.mxu0 0.0
      %2659 = vmatmul.mubr.f32.gmra.mxu0 %v415
      %v2660 = vpop.f32.mrf.mxu0
      %v2661 = vadd.f32 0.0, %v2660
      %v2662 = vpop.f32.mrf.mxu0
      %2663 = vmatprep.mubr.f32.mxu0 0.0
      %2664 = vmatmul.mubr.f32.gmra.mxu0 %v417
      %v2665 = vpop.f32.mrf.mxu0
      %v2666 = vadd.f32 0.0, %v2665
      %v2667 = vpop.f32.mrf.mxu0
      %2668 = vmatprep.mubr.f32.mxu0 0.0
      %2669 = vmatmul.mubr.f32.gmra.mxu0 %v419
      %v2670 = vpop.f32.mrf.mxu0
      %v2671 = vadd.f32 0.0, %v2670
      %v2672 = vpop.f32.mrf.mxu0
      %2673 = vmatprep.mubr.f32.mxu0 0.0
      %2674 = vmatmul.mubr.f32.gmra.mxu0 %v1654
      %v2675 = vpop.f32.mrf.mxu0
      %v2676 = vadd.f32 0.0, %v2675
      %v2677 = vpop.f32.mrf.mxu0
      %2678 = vmatprep.mubr.f32.mxu0 0.0
      %2679 = vmatmul.mubr.f32.gmra.mxu0 %v1656
      %v2680 = vpop.f32.mrf.mxu0
      %v2681 = vadd.f32 0.0, %v2680
      %v2682 = vpop.f32.mrf.mxu0
      %2683 = vmatprep.mubr.f32.mxu0 0.0
      %2684 = vmatmul.mubr.f32.gmra.mxu0 %v2462
      %v2685 = vpop.f32.mrf.mxu0
      %v2686 = vadd.f32 0.0, %v2685
      %v2687 = vpop.f32.mrf.mxu0
      %2688 = vmatprep.mubr.f32.mxu0 0.0
      %2689 = vmatmul.mubr.f32.gmra.mxu0 %v2464
      %v2690 = vpop.f32.mrf.mxu0
      %v2691 = vadd.f32 0.0, %v2690
      %v2692 = vpop.f32.mrf.mxu0
      %2693 = vdwg.mxu0
      %v2694 = vadd.f32 %v2423, %v2536
      %v2695 = vadd.f32 %v2424, %v2541
      %v2696 = vadd.f32 %v2425, %v2546
      %v2697 = vadd.f32 %v2426, %v2551
      %v2698 = vadd.f32 %v2427, %v2556
      %v2699 = vadd.f32 %v2428, %v2561
      %v2700 = vadd.f32 %v2429, %v2566
      %v2701 = vadd.f32 %v2430, %v2571
      %v2702 = vadd.f32 %v2431, %v2576
      %v2703 = vadd.f32 %v2432, %v2581
      %v2704 = vadd.f32 %v2433, %v2586
      %v2705 = vadd.f32 %v2434, %v2591
      %v2706 = vadd.f32 %v2435, %v2596
      %v2707 = vadd.f32 %v2436, %v2601
      %v2708 = vadd.f32 %v2437, %v2606
      %v2709 = vadd.f32 %v2438, %v2611
      %v2710 = vadd.f32 %v2439, %v2616
      %v2711 = vadd.f32 %v2440, %v2621
      %v2712 = vadd.f32 %v2441, %v2626
      %v2713 = vadd.f32 %v2442, %v2631
      %v2714 = vadd.f32 %v2443, %v2636
      %v2715 = vadd.f32 %v2444, %v2641
      %v2716 = vadd.f32 %v2445, %v2646
      %v2717 = vadd.f32 %v2446, %v2651
      %v2718 = vadd.f32 %v2447, %v2656
      %v2719 = vadd.f32 %v2448, %v2661
      %v2720 = vadd.f32 %v2449, %v2666
      %v2721 = vadd.f32 %v2450, %v2671
      %v2722 = vadd.f32 %v2451, %v2676
      %v2723 = vadd.f32 %v2452, %v2681
      %v2724 = vadd.f32 %v2453, %v2686
      %v2725 = vadd.f32 %v2454, %v2691
      %v2726 = vrot.slane %v222, 2
      %v2727 = vrot.slane %v223, 2
      %v2728 = vsel %vm942, %v2726, %v2727
      %v2729 = vrot.slane %v224, 2
      %v2730 = vsel %vm942, %v2727, %v2729
      %v2731 = vld [vmem:[%s1 + $0x20] sm:$0xf]
      %v2732 = vsel %vm356, %v2728, 0
      %v2734 = vsel %vm356, %v2730, 0
      %v2737 = vsel %vm421, %v2731, 0
      %2739 = vmatprep.subr.mxu0 0.0
      %2740 = vmatpush1.msra.mxu0 0.0
      %2741 = vmatprep.subr.mxu0 0.0
      %2742 = vmatpush1.msra.mxu0 0.0
      %2743 = vmatprep.subr.mxu0 0.0
      %2744 = vmatpush1.msra.mxu0 0.0
      %2745 = vmatprep.subr.mxu0 0.0
      %2746 = vmatpush1.msra.mxu0 0.0
      %2747 = vmatprep.subr.mxu0 0.0
      %2748 = vmatpush1.msra.mxu0 0.0
      %2749 = vmatprep.subr.mxu0 0.0
      %2750 = vmatpush1.msra.mxu0 0.0
      %2751 = vmatprep.subr.mxu0 0.0
      %2752 = vmatpush1.msra.mxu0 0.0
      %2753 = vmatprep.subr.mxu0 0.0
      %2754 = vmatpush1.msra.mxu0 0.0
      %2755 = vmatprep.subr.mxu0 0.0
      %2756 = vmatpush1.msra.mxu0 0.0
      %2757 = vmatprep.subr.mxu0 0.0
      %2758 = vmatpush1.msra.mxu0 0.0
      %2759 = vmatprep.subr.mxu0 0.0
      %2760 = vmatpush1.msra.mxu0 0.0
      %2761 = vmatprep.subr.mxu0 0.0
      %2762 = vmatpush1.msra.mxu0 0.0
      %2763 = vmatprep.subr.mxu0 0.0
      %2764 = vmatpush1.msra.mxu0 0.0
      %2765 = vmatprep.subr.mxu0 0.0
      %2766 = vmatpush1.msra.mxu0 0.0
      %2767 = vmatprep.subr.mxu0 0.0
      %2768 = vmatpush1.msra.mxu0 0.0
      %2769 = vmatprep.subr.mxu0 0.0
      %2770 = vmatpush1.msra.mxu0 %v2737
      %2771 = vmatprep.subr.mxu0 0.0
      %2772 = vmatpush2.msra.mxu0 0.0
      %2773 = vmatprep.subr.mxu0 0.0
      %2774 = vmatpush2.msra.mxu0 0.0
      %2775 = vmatprep.subr.mxu0 0.0
      %2776 = vmatpush2.msra.mxu0 0.0
      %2777 = vmatprep.subr.mxu0 0.0
      %2778 = vmatpush2.msra.mxu0 0.0
      %2779 = vmatprep.subr.mxu0 0.0
      %2780 = vmatpush2.msra.mxu0 0.0
      %2781 = vmatprep.subr.mxu0 0.0
      %2782 = vmatpush2.msra.mxu0 0.0
      %2783 = vmatprep.subr.mxu0 0.0
      %2784 = vmatpush2.msra.mxu0 0.0
      %2785 = vmatprep.subr.mxu0 0.0
      %2786 = vmatpush2.msra.mxu0 0.0
      %2787 = vmatprep.subr.mxu0 0.0
      %2788 = vmatpush2.msra.mxu0 0.0
      %2789 = vmatprep.subr.mxu0 0.0
      %2790 = vmatpush2.msra.mxu0 0.0
      %2791 = vmatprep.subr.mxu0 0.0
      %2792 = vmatpush2.msra.mxu0 0.0
      %2793 = vmatprep.subr.mxu0 0.0
      %2794 = vmatpush2.msra.mxu0 0.0
      %2795 = vmatprep.subr.mxu0 0.0
      %2796 = vmatpush2.msra.mxu0 0.0
      %2797 = vmatprep.subr.mxu0 0.0
      %2798 = vmatpush2.msra.mxu0 0.0
      %2799 = vmatprep.subr.mxu0 0.0
      %2800 = vmatpush2.msra.mxu0 0.0
      %2801 = vmatprep.subr.mxu0 0.0
      %2802 = vmatpush2.msra.mxu0 0.0
      %2803 = vmatprep.mubr.f32.mxu0 0.0
      %2804 = vmatmul.mubr.f32.gmra.mxu0 %v1032
      %v2805 = vpop.f32.mrf.mxu0
      %v2806 = vadd.f32 0.0, %v2805
      %v2807 = vpop.f32.mrf.mxu0
      %2808 = vmatprep.mubr.f32.mxu0 0.0
      %2809 = vmatmul.mubr.f32.gmra.mxu0 %v1034
      %v2810 = vpop.f32.mrf.mxu0
      %v2811 = vadd.f32 0.0, %v2810
      %v2812 = vpop.f32.mrf.mxu0
      %2813 = vmatprep.mubr.f32.mxu0 0.0
      %2814 = vmatmul.mubr.f32.gmra.mxu0 %v1036
      %v2815 = vpop.f32.mrf.mxu0
      %v2816 = vadd.f32 0.0, %v2815
      %v2817 = vpop.f32.mrf.mxu0
      %2818 = vmatprep.mubr.f32.mxu0 0.0
      %2819 = vmatmul.mubr.f32.gmra.mxu0 %v1038
      %v2820 = vpop.f32.mrf.mxu0
      %v2821 = vadd.f32 0.0, %v2820
      %v2822 = vpop.f32.mrf.mxu0
      %2823 = vmatprep.mubr.f32.mxu0 0.0
      %2824 = vmatmul.mubr.f32.gmra.mxu0 %v1040
      %v2825 = vpop.f32.mrf.mxu0
      %v2826 = vadd.f32 0.0, %v2825
      %v2827 = vpop.f32.mrf.mxu0
      %2828 = vmatprep.mubr.f32.mxu0 0.0
      %2829 = vmatmul.mubr.f32.gmra.mxu0 %v1042
      %v2830 = vpop.f32.mrf.mxu0
      %v2831 = vadd.f32 0.0, %v2830
      %v2832 = vpop.f32.mrf.mxu0
      %2833 = vmatprep.mubr.f32.mxu0 0.0
      %2834 = vmatmul.mubr.f32.gmra.mxu0 %v1044
      %v2835 = vpop.f32.mrf.mxu0
      %v2836 = vadd.f32 0.0, %v2835
      %v2837 = vpop.f32.mrf.mxu0
      %2838 = vmatprep.mubr.f32.mxu0 0.0
      %2839 = vmatmul.mubr.f32.gmra.mxu0 %v1046
      %v2840 = vpop.f32.mrf.mxu0
      %v2841 = vadd.f32 0.0, %v2840
      %v2842 = vpop.f32.mrf.mxu0
      %2843 = vmatprep.mubr.f32.mxu0 0.0
      %2844 = vmatmul.mubr.f32.gmra.mxu0 %v1048
      %v2845 = vpop.f32.mrf.mxu0
      %v2846 = vadd.f32 0.0, %v2845
      %v2847 = vpop.f32.mrf.mxu0
      %2848 = vmatprep.mubr.f32.mxu0 0.0
      %2849 = vmatmul.mubr.f32.gmra.mxu0 %v1050
      %v2850 = vpop.f32.mrf.mxu0
      %v2851 = vadd.f32 0.0, %v2850
      %v2852 = vpop.f32.mrf.mxu0
      %2853 = vmatprep.mubr.f32.mxu0 0.0
      %2854 = vmatmul.mubr.f32.gmra.mxu0 %v1052
      %v2855 = vpop.f32.mrf.mxu0
      %v2856 = vadd.f32 0.0, %v2855
      %v2857 = vpop.f32.mrf.mxu0
      %2858 = vmatprep.mubr.f32.mxu0 0.0
      %2859 = vmatmul.mubr.f32.gmra.mxu0 %v1054
      %v2860 = vpop.f32.mrf.mxu0
      %v2861 = vadd.f32 0.0, %v2860
      %v2862 = vpop.f32.mrf.mxu0
      %2863 = vmatprep.mubr.f32.mxu0 0.0
      %2864 = vmatmul.mubr.f32.gmra.mxu0 %v1056
      %v2865 = vpop.f32.mrf.mxu0
      %v2866 = vadd.f32 0.0, %v2865
      %v2867 = vpop.f32.mrf.mxu0
      %2868 = vmatprep.mubr.f32.mxu0 0.0
      %2869 = vmatmul.mubr.f32.gmra.mxu0 %v1058
      %v2870 = vpop.f32.mrf.mxu0
      %v2871 = vadd.f32 0.0, %v2870
      %v2872 = vpop.f32.mrf.mxu0
      %2873 = vmatprep.mubr.f32.mxu0 0.0
      %2874 = vmatmul.mubr.f32.gmra.mxu0 %v1060
      %v2875 = vpop.f32.mrf.mxu0
      %v2876 = vadd.f32 0.0, %v2875
      %v2877 = vpop.f32.mrf.mxu0
      %2878 = vmatprep.mubr.f32.mxu0 0.0
      %2879 = vmatmul.mubr.f32.gmra.mxu0 %v1062
      %v2880 = vpop.f32.mrf.mxu0
      %v2881 = vadd.f32 0.0, %v2880
      %v2882 = vpop.f32.mrf.mxu0
      %2883 = vmatprep.mubr.f32.mxu0 0.0
      %2884 = vmatmul.mubr.f32.gmra.mxu0 %v1064
      %v2885 = vpop.f32.mrf.mxu0
      %v2886 = vadd.f32 0.0, %v2885
      %v2887 = vpop.f32.mrf.mxu0
      %2888 = vmatprep.mubr.f32.mxu0 0.0
      %2889 = vmatmul.mubr.f32.gmra.mxu0 %v1066
      %v2890 = vpop.f32.mrf.mxu0
      %v2891 = vadd.f32 0.0, %v2890
      %v2892 = vpop.f32.mrf.mxu0
      %2893 = vmatprep.mubr.f32.mxu0 0.0
      %2894 = vmatmul.mubr.f32.gmra.mxu0 %v1068
      %v2895 = vpop.f32.mrf.mxu0
      %v2896 = vadd.f32 0.0, %v2895
      %v2897 = vpop.f32.mrf.mxu0
      %2898 = vmatprep.mubr.f32.mxu0 0.0
      %2899 = vmatmul.mubr.f32.gmra.mxu0 %v1070
      %v2900 = vpop.f32.mrf.mxu0
      %v2901 = vadd.f32 0.0, %v2900
      %v2902 = vpop.f32.mrf.mxu0
      %2903 = vmatprep.mubr.f32.mxu0 0.0
      %2904 = vmatmul.mubr.f32.gmra.mxu0 %v1072
      %v2905 = vpop.f32.mrf.mxu0
      %v2906 = vadd.f32 0.0, %v2905
      %v2907 = vpop.f32.mrf.mxu0
      %2908 = vmatprep.mubr.f32.mxu0 0.0
      %2909 = vmatmul.mubr.f32.gmra.mxu0 %v1074
      %v2910 = vpop.f32.mrf.mxu0
      %v2911 = vadd.f32 0.0, %v2910
      %v2912 = vpop.f32.mrf.mxu0
      %2913 = vmatprep.mubr.f32.mxu0 0.0
      %2914 = vmatmul.mubr.f32.gmra.mxu0 %v1076
      %v2915 = vpop.f32.mrf.mxu0
      %v2916 = vadd.f32 0.0, %v2915
      %v2917 = vpop.f32.mrf.mxu0
      %2918 = vmatprep.mubr.f32.mxu0 0.0
      %2919 = vmatmul.mubr.f32.gmra.mxu0 %v1078
      %v2920 = vpop.f32.mrf.mxu0
      %v2921 = vadd.f32 0.0, %v2920
      %v2922 = vpop.f32.mrf.mxu0
      %2923 = vmatprep.mubr.f32.mxu0 0.0
      %2924 = vmatmul.mubr.f32.gmra.mxu0 %v1080
      %v2925 = vpop.f32.mrf.mxu0
      %v2926 = vadd.f32 0.0, %v2925
      %v2927 = vpop.f32.mrf.mxu0
      %2928 = vmatprep.mubr.f32.mxu0 0.0
      %2929 = vmatmul.mubr.f32.gmra.mxu0 %v1082
      %v2930 = vpop.f32.mrf.mxu0
      %v2931 = vadd.f32 0.0, %v2930
      %v2932 = vpop.f32.mrf.mxu0
      %2933 = vmatprep.mubr.f32.mxu0 0.0
      %2934 = vmatmul.mubr.f32.gmra.mxu0 %v1084
      %v2935 = vpop.f32.mrf.mxu0
      %v2936 = vadd.f32 0.0, %v2935
      %v2937 = vpop.f32.mrf.mxu0
      %2938 = vmatprep.mubr.f32.mxu0 0.0
      %2939 = vmatmul.mubr.f32.gmra.mxu0 %v1086
      %v2940 = vpop.f32.mrf.mxu0
      %v2941 = vadd.f32 0.0, %v2940
      %v2942 = vpop.f32.mrf.mxu0
      %2943 = vmatprep.mubr.f32.mxu0 0.0
      %2944 = vmatmul.mubr.f32.gmra.mxu0 %v1924
      %v2945 = vpop.f32.mrf.mxu0
      %v2946 = vadd.f32 0.0, %v2945
      %v2947 = vpop.f32.mrf.mxu0
      %2948 = vmatprep.mubr.f32.mxu0 0.0
      %2949 = vmatmul.mubr.f32.gmra.mxu0 %v1926
      %v2950 = vpop.f32.mrf.mxu0
      %v2951 = vadd.f32 0.0, %v2950
      %v2952 = vpop.f32.mrf.mxu0
      %2953 = vmatprep.mubr.f32.mxu0 0.0
      %2954 = vmatmul.mubr.f32.gmra.mxu0 %v2732
      %v2955 = vpop.f32.mrf.mxu0
      %v2956 = vadd.f32 0.0, %v2955
      %v2957 = vpop.f32.mrf.mxu0
      %2958 = vmatprep.mubr.f32.mxu0 0.0
      %2959 = vmatmul.mubr.f32.gmra.mxu0 %v2734
      %v2960 = vpop.f32.mrf.mxu0
      %v2961 = vadd.f32 0.0, %v2960
      %v2962 = vpop.f32.mrf.mxu0
      %2963 = vdwg.mxu0
      %v2964 = vadd.f32 %v2694, %v2806
      %v2965 = vadd.f32 %v2695, %v2811
      %v2966 = vadd.f32 %v2696, %v2816
      %v2967 = vadd.f32 %v2697, %v2821
      %v2968 = vadd.f32 %v2698, %v2826
      %v2969 = vadd.f32 %v2699, %v2831
      %v2970 = vadd.f32 %v2700, %v2836
      %v2971 = vadd.f32 %v2701, %v2841
      %v2972 = vadd.f32 %v2702, %v2846
      %v2973 = vadd.f32 %v2703, %v2851
      %v2974 = vadd.f32 %v2704, %v2856
      %v2975 = vadd.f32 %v2705, %v2861
      %v2976 = vadd.f32 %v2706, %v2866
      %v2977 = vadd.f32 %v2707, %v2871
      %v2978 = vadd.f32 %v2708, %v2876
      %v2979 = vadd.f32 %v2709, %v2881
      %v2980 = vadd.f32 %v2710, %v2886
      %v2981 = vadd.f32 %v2711, %v2891
      %v2982 = vadd.f32 %v2712, %v2896
      %v2983 = vadd.f32 %v2713, %v2901
      %v2984 = vadd.f32 %v2714, %v2906
      %v2985 = vadd.f32 %v2715, %v2911
      %v2986 = vadd.f32 %v2716, %v2916
      %v2987 = vadd.f32 %v2717, %v2921
      %v2988 = vadd.f32 %v2718, %v2926
      %v2989 = vadd.f32 %v2719, %v2931
      %v2990 = vadd.f32 %v2720, %v2936
      %v2991 = vadd.f32 %v2721, %v2941
      %v2992 = vadd.f32 %v2722, %v2946
      %v2993 = vadd.f32 %v2723, %v2951
      %v2994 = vadd.f32 %v2724, %v2956
      %v2995 = vadd.f32 %v2725, %v2961
      %v2996 = vsel %vm356, %v2964, 0.0
      %v2997 = vsel %vm356, %v2965, 0.0
      %v2998 = vadd.f32 %v2996, %v2997
      %v2999 = vsel %vm356, %v2966, 0.0
      %v3000 = vadd.f32 %v2998, %v2999
      %v3001 = vsel %vm356, %v2967, 0.0
      %v3002 = vadd.f32 %v3000, %v3001
      %v3003 = vsel %vm356, %v2968, 0.0
      %v3004 = vadd.f32 %v3002, %v3003
      %v3005 = vsel %vm356, %v2969, 0.0
      %v3006 = vadd.f32 %v3004, %v3005
      %v3007 = vsel %vm356, %v2970, 0.0
      %v3008 = vadd.f32 %v3006, %v3007
      %v3009 = vsel %vm356, %v2971, 0.0
      %v3010 = vadd.f32 %v3008, %v3009
      %v3011 = vsel %vm356, %v2972, 0.0
      %v3012 = vadd.f32 %v3010, %v3011
      %v3013 = vsel %vm356, %v2973, 0.0
      %v3014 = vadd.f32 %v3012, %v3013
      %v3015 = vsel %vm356, %v2974, 0.0
      %v3016 = vadd.f32 %v3014, %v3015
      %v3017 = vsel %vm356, %v2975, 0.0
      %v3018 = vadd.f32 %v3016, %v3017
      %v3019 = vsel %vm356, %v2976, 0.0
      %v3020 = vadd.f32 %v3018, %v3019
      %v3021 = vsel %vm356, %v2977, 0.0
      %v3022 = vadd.f32 %v3020, %v3021
      %v3023 = vsel %vm356, %v2978, 0.0
      %v3024 = vadd.f32 %v3022, %v3023
      %v3025 = vsel %vm356, %v2979, 0.0
      %v3026 = vadd.f32 %v3024, %v3025
      %v3027 = vsel %vm356, %v2980, 0.0
      %v3028 = vadd.f32 %v3026, %v3027
      %v3029 = vsel %vm356, %v2981, 0.0
      %v3030 = vadd.f32 %v3028, %v3029
      %v3031 = vsel %vm356, %v2982, 0.0
      %v3032 = vadd.f32 %v3030, %v3031
      %v3033 = vsel %vm356, %v2983, 0.0
      %v3034 = vadd.f32 %v3032, %v3033
      %v3035 = vsel %vm356, %v2984, 0.0
      %v3036 = vadd.f32 %v3034, %v3035
      %v3037 = vsel %vm356, %v2985, 0.0
      %v3038 = vadd.f32 %v3036, %v3037
      %v3039 = vsel %vm356, %v2986, 0.0
      %v3040 = vadd.f32 %v3038, %v3039
      %v3041 = vsel %vm356, %v2987, 0.0
      %v3042 = vadd.f32 %v3040, %v3041
      %v3043 = vsel %vm356, %v2988, 0.0
      %v3044 = vadd.f32 %v3042, %v3043
      %v3045 = vsel %vm356, %v2989, 0.0
      %v3046 = vadd.f32 %v3044, %v3045
      %v3047 = vsel %vm356, %v2990, 0.0
      %v3048 = vadd.f32 %v3046, %v3047
      %v3049 = vsel %vm356, %v2991, 0.0
      %v3050 = vadd.f32 %v3048, %v3049
      %v3051 = vsel %vm356, %v2992, 0.0
      %v3052 = vadd.f32 %v3050, %v3051
      %v3053 = vsel %vm356, %v2993, 0.0
      %v3054 = vadd.f32 %v3052, %v3053
      %v3055 = vsel %vm356, %v2994, 0.0
      %v3056 = vadd.f32 %v3054, %v3055
      %v3057 = vsel %vm356, %v2995, 0.0
      %v3058 = vadd.f32 %v3056, %v3057
      %v3059 = vrot.slane %v3058, 4
      %v3060 = vadd.f32 %v3058, %v3059
      %v3061 = vrot.slane %v3060, 2
      %v3062 = vadd.f32 %v3060, %v3061
      %v3063 = vrot.slane %v3062, 1
      %v3064 = vadd.f32 %v3062, %v3063
      %v3065 = vmul.f32 %v3064, 0.00390625
      %v3066 = vmul.f32 %v2964, %v2964
      %v3067 = vmul.f32 %v2965, %v2965
      %v3068 = vmul.f32 %v2966, %v2966
      %v3069 = vmul.f32 %v2967, %v2967
      %v3070 = vmul.f32 %v2968, %v2968
      %v3071 = vmul.f32 %v2969, %v2969
      %v3072 = vmul.f32 %v2970, %v2970
      %v3073 = vmul.f32 %v2971, %v2971
      %v3074 = vmul.f32 %v2972, %v2972
      %v3075 = vmul.f32 %v2973, %v2973
      %v3076 = vmul.f32 %v2974, %v2974
      %v3077 = vmul.f32 %v2975, %v2975
      %v3078 = vmul.f32 %v2976, %v2976
      %v3079 = vmul.f32 %v2977, %v2977
      %v3080 = vmul.f32 %v2978, %v2978
      %v3081 = vmul.f32 %v2979, %v2979
      %v3082 = vmul.f32 %v2980, %v2980
      %v3083 = vmul.f32 %v2981, %v2981
      %v3084 = vmul.f32 %v2982, %v2982
      %v3085 = vmul.f32 %v2983, %v2983
      %v3086 = vmul.f32 %v2984, %v2984
      %v3087 = vmul.f32 %v2985, %v2985
      %v3088 = vmul.f32 %v2986, %v2986
      %v3089 = vmul.f32 %v2987, %v2987
      %v3090 = vmul.f32 %v2988, %v2988
      %v3091 = vmul.f32 %v2989, %v2989
      %v3092 = vmul.f32 %v2990, %v2990
      %v3093 = vmul.f32 %v2991, %v2991
      %v3094 = vmul.f32 %v2992, %v2992
      %v3095 = vmul.f32 %v2993, %v2993
      %v3096 = vmul.f32 %v2994, %v2994
      %v3097 = vmul.f32 %v2995, %v2995
      %v3098 = vsel %vm356, %v3066, 0.0
      %v3099 = vsel %vm356, %v3067, 0.0
      %v3100 = vadd.f32 %v3098, %v3099
      %v3101 = vsel %vm356, %v3068, 0.0
      %v3102 = vadd.f32 %v3100, %v3101
      %v3103 = vsel %vm356, %v3069, 0.0
      %v3104 = vadd.f32 %v3102, %v3103
      %v3105 = vsel %vm356, %v3070, 0.0
      %v3106 = vadd.f32 %v3104, %v3105
      %v3107 = vsel %vm356, %v3071, 0.0
      %v3108 = vadd.f32 %v3106, %v3107
      %v3109 = vsel %vm356, %v3072, 0.0
      %v3110 = vadd.f32 %v3108, %v3109
      %v3111 = vsel %vm356, %v3073, 0.0
      %v3112 = vadd.f32 %v3110, %v3111
      %v3113 = vsel %vm356, %v3074, 0.0
      %v3114 = vadd.f32 %v3112, %v3113
      %v3115 = vsel %vm356, %v3075, 0.0
      %v3116 = vadd.f32 %v3114, %v3115
      %v3117 = vsel %vm356, %v3076, 0.0
      %v3118 = vadd.f32 %v3116, %v3117
      %v3119 = vsel %vm356, %v3077, 0.0
      %v3120 = vadd.f32 %v3118, %v3119
      %v3121 = vsel %vm356, %v3078, 0.0
      %v3122 = vadd.f32 %v3120, %v3121
      %v3123 = vsel %vm356, %v3079, 0.0
      %v3124 = vadd.f32 %v3122, %v3123
      %v3125 = vsel %vm356, %v3080, 0.0
      %v3126 = vadd.f32 %v3124, %v3125
      %v3127 = vsel %vm356, %v3081, 0.0
      %v3128 = vadd.f32 %v3126, %v3127
      %v3129 = vsel %vm356, %v3082, 0.0
      %v3130 = vadd.f32 %v3128, %v3129
      %v3131 = vsel %vm356, %v3083, 0.0
      %v3132 = vadd.f32 %v3130, %v3131
      %v3133 = vsel %vm356, %v3084, 0.0
      %v3134 = vadd.f32 %v3132, %v3133
      %v3135 = vsel %vm356, %v3085, 0.0
      %v3136 = vadd.f32 %v3134, %v3135
      %v3137 = vsel %vm356, %v3086, 0.0
      %v3138 = vadd.f32 %v3136, %v3137
      %v3139 = vsel %vm356, %v3087, 0.0
      %v3140 = vadd.f32 %v3138, %v3139
      %v3141 = vsel %vm356, %v3088, 0.0
      %v3142 = vadd.f32 %v3140, %v3141
      %v3143 = vsel %vm356, %v3089, 0.0
      %v3144 = vadd.f32 %v3142, %v3143
      %v3145 = vsel %vm356, %v3090, 0.0
      %v3146 = vadd.f32 %v3144, %v3145
      %v3147 = vsel %vm356, %v3091, 0.0
      %v3148 = vadd.f32 %v3146, %v3147
      %v3149 = vsel %vm356, %v3092, 0.0
      %v3150 = vadd.f32 %v3148, %v3149
      %v3151 = vsel %vm356, %v3093, 0.0
      %v3152 = vadd.f32 %v3150, %v3151
      %v3153 = vsel %vm356, %v3094, 0.0
      %v3154 = vadd.f32 %v3152, %v3153
      %v3155 = vsel %vm356, %v3095, 0.0
      %v3156 = vadd.f32 %v3154, %v3155
      %v3157 = vsel %vm356, %v3096, 0.0
      %v3158 = vadd.f32 %v3156, %v3157
      %v3159 = vsel %vm356, %v3097, 0.0
      %v3160 = vadd.f32 %v3158, %v3159
      %v3161 = vrot.slane %v3160, 4
      %v3162 = vadd.f32 %v3160, %v3161
      %v3163 = vrot.slane %v3162, 2
      %v3164 = vadd.f32 %v3162, %v3163
      %v3165 = vrot.slane %v3164, 1
      %v3166 = vadd.f32 %v3164, %v3165
      %v3167 = vmul.f32 %v3166, 0.00390625
      %v3168 = vmul.f32 %v3065, %v3065
      %v3169 = vsub.f32 %v3167, %v3168
      %v3170 = vmax.f32 %v3169, 0.0
      %v3171 = vsub.f32 %v2964, %v3065
      %v3172 = vsub.f32 %v2965, %v3065
      %v3173 = vsub.f32 %v2966, %v3065
      %v3174 = vsub.f32 %v2967, %v3065
      %v3175 = vsub.f32 %v2968, %v3065
      %v3176 = vsub.f32 %v2969, %v3065
      %v3177 = vsub.f32 %v2970, %v3065
      %v3178 = vsub.f32 %v2971, %v3065
      %v3179 = vsub.f32 %v2972, %v3065
      %v3180 = vsub.f32 %v2973, %v3065
      %v3181 = vsub.f32 %v2974, %v3065
      %v3182 = vsub.f32 %v2975, %v3065
      %v3183 = vsub.f32 %v2976, %v3065
      %v3184 = vsub.f32 %v2977, %v3065
      %v3185 = vsub.f32 %v2978, %v3065
      %v3186 = vsub.f32 %v2979, %v3065
      %v3187 = vsub.f32 %v2980, %v3065
      %v3188 = vsub.f32 %v2981, %v3065
      %v3189 = vsub.f32 %v2982, %v3065
      %v3190 = vsub.f32 %v2983, %v3065
      %v3191 = vsub.f32 %v2984, %v3065
      %v3192 = vsub.f32 %v2985, %v3065
      %v3193 = vsub.f32 %v2986, %v3065
      %v3194 = vsub.f32 %v2987, %v3065
      %v3195 = vsub.f32 %v2988, %v3065
      %v3196 = vsub.f32 %v2989, %v3065
      %v3197 = vsub.f32 %v2990, %v3065
      %v3198 = vsub.f32 %v2991, %v3065
      %v3199 = vsub.f32 %v2992, %v3065
      %v3200 = vsub.f32 %v2993, %v3065
      %v3201 = vsub.f32 %v2994, %v3065
      %v3202 = vsub.f32 %v2995, %v3065
      %v3203 = vadd.f32 %v3170, 1e-05
      %v3204 = vrsqrt.pop %v3203
      %v3205 = vmul.f32 %v3171, %v3204
      %v3206 = vmul.f32 %v3172, %v3204
      %v3207 = vmul.f32 %v3173, %v3204
      %v3208 = vmul.f32 %v3174, %v3204
      %v3209 = vmul.f32 %v3175, %v3204
      %v3210 = vmul.f32 %v3176, %v3204
      %v3211 = vmul.f32 %v3177, %v3204
      %v3212 = vmul.f32 %v3178, %v3204
      %v3213 = vmul.f32 %v3179, %v3204
      %v3214 = vmul.f32 %v3180, %v3204
      %v3215 = vmul.f32 %v3181, %v3204
      %v3216 = vmul.f32 %v3182, %v3204
      %v3217 = vmul.f32 %v3183, %v3204
      %v3218 = vmul.f32 %v3184, %v3204
      %v3219 = vmul.f32 %v3185, %v3204
      %v3220 = vmul.f32 %v3186, %v3204
      %v3221 = vmul.f32 %v3187, %v3204
      %v3222 = vmul.f32 %v3188, %v3204
      %v3223 = vmul.f32 %v3189, %v3204
      %v3224 = vmul.f32 %v3190, %v3204
      %v3225 = vmul.f32 %v3191, %v3204
      %v3226 = vmul.f32 %v3192, %v3204
      %v3227 = vmul.f32 %v3193, %v3204
      %v3228 = vmul.f32 %v3194, %v3204
      %v3229 = vmul.f32 %v3195, %v3204
      %v3230 = vmul.f32 %v3196, %v3204
      %v3231 = vmul.f32 %v3197, %v3204
      %v3232 = vmul.f32 %v3198, %v3204
      %v3233 = vmul.f32 %v3199, %v3204
      %v3234 = vmul.f32 %v3200, %v3204
      %v3235 = vmul.f32 %v3201, %v3204
      %v3236 = vmul.f32 %v3202, %v3204
      %v3253 = vrot.slane %v3207, 1
      %v3254 = vrot.slane %v3205, 1
      %v3255 = vrot.slane %v3209, 1
      %v3256 = vrot.slane %v3211, 1
      %v3257 = vrot.slane %v3213, 1
      %v3258 = vrot.slane %v3215, 1
      %v3259 = vrot.slane %v3217, 1
      %v3260 = vrot.slane %v3219, 1
      %v3261 = vrot.slane %v3221, 1
      %v3262 = vrot.slane %v3223, 1
      %v3263 = vrot.slane %v3225, 1
      %v3264 = vrot.slane %v3227, 1
      %v3265 = vrot.slane %v3229, 1
      %v3266 = vrot.slane %v3231, 1
      %v3267 = vrot.slane %v3233, 1
      %v3268 = vrot.slane %v3235, 1
      %vm3301 = vcmask 1040384
      %v3302 = vrot.slane %v3207, 7
      %v3303 = vrot.slane %v3208, 7
      %v3304 = vsel %vm3301, %v3302, %v3303
      %v3305 = vrot.slane %v3205, 7
      %v3306 = vrot.slane %v3206, 7
      %v3307 = vsel %vm3301, %v3305, %v3306
      %v3308 = vrot.slane %v3209, 7
      %v3309 = vrot.slane %v3210, 7
      %v3310 = vsel %vm3301, %v3308, %v3309
      %v3311 = vrot.slane %v3211, 7
      %v3312 = vrot.slane %v3212, 7
      %v3313 = vsel %vm3301, %v3311, %v3312
      %v3314 = vrot.slane %v3213, 7
      %v3315 = vrot.slane %v3214, 7
      %v3316 = vsel %vm3301, %v3314, %v3315
      %v3317 = vrot.slane %v3215, 7
      %v3318 = vrot.slane %v3216, 7
      %v3319 = vsel %vm3301, %v3317, %v3318
      %v3320 = vrot.slane %v3217, 7
      %v3321 = vrot.slane %v3218, 7
      %v3322 = vsel %vm3301, %v3320, %v3321
      %v3323 = vrot.slane %v3219, 7
      %v3324 = vrot.slane %v3220, 7
      %v3325 = vsel %vm3301, %v3323, %v3324
      %v3326 = vrot.slane %v3221, 7
      %v3327 = vrot.slane %v3222, 7
      %v3328 = vsel %vm3301, %v3326, %v3327
      %v3329 = vrot.slane %v3223, 7
      %v3330 = vrot.slane %v3224, 7
      %v3331 = vsel %vm3301, %v3329, %v3330
      %v3332 = vrot.slane %v3225, 7
      %v3333 = vrot.slane %v3226, 7
      %v3334 = vsel %vm3301, %v3332, %v3333
      %v3335 = vrot.slane %v3227, 7
      %v3336 = vrot.slane %v3228, 7
      %v3337 = vsel %vm3301, %v3335, %v3336
      %v3338 = vrot.slane %v3229, 7
      %v3339 = vrot.slane %v3230, 7
      %v3340 = vsel %vm3301, %v3338, %v3339
      %v3341 = vrot.slane %v3231, 7
      %v3342 = vrot.slane %v3232, 7
      %v3343 = vsel %vm3301, %v3341, %v3342
      %v3344 = vrot.slane %v3233, 7
      %v3345 = vrot.slane %v3234, 7
      %v3346 = vsel %vm3301, %v3344, %v3345
      %v3347 = vrot.slane %v3235, 7
      %v3348 = vrot.slane %v3236, 7
      %v3349 = vsel %vm3301, %v3347, %v3348
      %v3382 = vrot.slane %v3208, 5
      %v3383 = vrot.slane %v3206, 5
      %v3384 = vrot.slane %v3210, 5
      %v3385 = vrot.slane %v3212, 5
      %v3386 = vrot.slane %v3214, 5
      %v3387 = vrot.slane %v3216, 5
      %v3388 = vrot.slane %v3218, 5
      %v3389 = vrot.slane %v3220, 5
      %v3390 = vrot.slane %v3222, 5
      %v3391 = vrot.slane %v3224, 5
      %v3392 = vrot.slane %v3226, 5
      %v3393 = vrot.slane %v3228, 5
      %v3394 = vrot.slane %v3230, 5
      %v3395 = vrot.slane %v3232, 5
      %v3396 = vrot.slane %v3234, 5
      %v3397 = vrot.slane %v3236, 5
      %v3414 = vsel %vm3301, %v3253, %v3302
      %v3415 = vsel %vm3301, %v3254, %v3305
      %v3416 = vsel %vm3301, %v3255, %v3308
      %v3417 = vsel %vm3301, %v3256, %v3311
      %v3418 = vsel %vm3301, %v3257, %v3314
      %v3419 = vsel %vm3301, %v3258, %v3317
      %v3420 = vsel %vm3301, %v3259, %v3320
      %v3421 = vsel %vm3301, %v3260, %v3323
      %v3422 = vsel %vm3301, %v3261, %v3326
      %v3423 = vsel %vm3301, %v3262, %v3329
      %v3424 = vsel %vm3301, %v3263, %v3332
      %v3425 = vsel %vm3301, %v3264, %v3335
      %v3426 = vsel %vm3301, %v3265, %v3338
      %v3427 = vsel %vm3301, %v3266, %v3341
      %v3428 = vsel %vm3301, %v3267, %v3344
      %v3429 = vsel %vm3301, %v3268, %v3347
      %v3430 = vsel %vm3301, %v3303, %v3382
      %v3431 = vsel %vm3301, %v3306, %v3383
      %v3432 = vsel %vm3301, %v3309, %v3384
      %v3433 = vsel %vm3301, %v3312, %v3385
      %v3434 = vsel %vm3301, %v3315, %v3386
      %v3435 = vsel %vm3301, %v3318, %v3387
      %v3436 = vsel %vm3301, %v3321, %v3388
      %v3437 = vsel %vm3301, %v3324, %v3389
      %v3438 = vsel %vm3301, %v3327, %v3390
      %v3439 = vsel %vm3301, %v3330, %v3391
      %v3440 = vsel %vm3301, %v3333, %v3392
      %v3441 = vsel %vm3301, %v3336, %v3393
      %v3442 = vsel %vm3301, %v3339, %v3394
      %v3443 = vsel %vm3301, %v3342, %v3395
      %v3444 = vsel %vm3301, %v3345, %v3396
      %v3445 = vsel %vm3301, %v3348, %v3397
      %v3446 = vld [vmem:[%s2] sm:$0xf]
      %v3477 = vrot.slane %v3414, 1
      %v3478 = vrot.slane %v3304, 1
      %v3479 = vsel %vm274, %v3477, %v3478
      %v3480 = vrot.slane %v3430, 1
      %v3481 = vsel %vm274, %v3478, %v3480
      %v3482 = vrot.slane %v3415, 1
      %v3483 = vrot.slane %v3307, 1
      %v3484 = vsel %vm274, %v3482, %v3483
      %v3485 = vrot.slane %v3431, 1
      %v3486 = vsel %vm274, %v3483, %v3485
      %v3487 = vrot.slane %v3416, 1
      %v3488 = vrot.slane %v3310, 1
      %v3489 = vsel %vm274, %v3487, %v3488
      %v3490 = vrot.slane %v3432, 1
      %v3491 = vsel %vm274, %v3488, %v3490
      %v3492 = vrot.slane %v3417, 1
      %v3493 = vrot.slane %v3313, 1
      %v3494 = vsel %vm274, %v3492, %v3493
      %v3495 = vrot.slane %v3433, 1
      %v3496 = vsel %vm274, %v3493, %v3495
      %v3497 = vrot.slane %v3418, 1
      %v3498 = vrot.slane %v3316, 1
      %v3499 = vsel %vm274, %v3497, %v3498
      %v3500 = vrot.slane %v3434, 1
      %v3501 = vsel %vm274, %v3498, %v3500
      %v3502 = vrot.slane %v3419, 1
      %v3503 = vrot.slane %v3319, 1
      %v3504 = vsel %vm274, %v3502, %v3503
      %v3505 = vrot.slane %v3435, 1
      %v3506 = vsel %vm274, %v3503, %v3505
      %v3507 = vrot.slane %v3420, 1
      %v3508 = vrot.slane %v3322, 1
      %v3509 = vsel %vm274, %v3507, %v3508
      %v3510 = vrot.slane %v3436, 1
      %v3511 = vsel %vm274, %v3508, %v3510
      %v3512 = vrot.slane %v3421, 1
      %v3513 = vrot.slane %v3325, 1
      %v3514 = vsel %vm274, %v3512, %v3513
      %v3515 = vrot.slane %v3437, 1
      %v3516 = vsel %vm274, %v3513, %v3515
      %v3517 = vrot.slane %v3422, 1
      %v3518 = vrot.slane %v3328, 1
      %v3519 = vsel %vm274, %v3517, %v3518
      %v3520 = vrot.slane %v3438, 1
      %v3521 = vsel %vm274, %v3518, %v3520
      %v3522 = vrot.slane %v3423, 1
      %v3523 = vrot.slane %v3331, 1
      %v3524 = vsel %vm274, %v3522, %v3523
      %v3525 = vrot.slane %v3439, 1
      %v3526 = vsel %vm274, %v3523, %v3525
      %v3527 = vrot.slane %v3424, 1
      %v3528 = vrot.slane %v3334, 1
      %v3529 = vsel %vm274, %v3527, %v3528
      %v3530 = vrot.slane %v3440, 1
      %v3531 = vsel %vm274, %v3528, %v3530
      %v3532 = vrot.slane %v3425, 1
      %v3533 = vrot.slane %v3337, 1
      %v3534 = vsel %vm274, %v3532, %v3533
      %v3535 = vrot.slane %v3441, 1
      %v3536 = vsel %vm274, %v3533, %v3535
      %v3537 = vrot.slane %v3426, 1
      %v3538 = vrot.slane %v3340, 1
      %v3539 = vsel %vm274, %v3537, %v3538
      %v3540 = vrot.slane %v3442, 1
      %v3541 = vsel %vm274, %v3538, %v3540
      %v3542 = vrot.slane %v3427, 1
      %v3543 = vrot.slane %v3343, 1
      %v3544 = vsel %vm274, %v3542, %v3543
      %v3545 = vrot.slane %v3443, 1
      %v3546 = vsel %vm274, %v3543, %v3545
      %v3547 = vrot.slane %v3428, 1
      %v3548 = vrot.slane %v3346, 1
      %v3549 = vsel %vm274, %v3547, %v3548
      %v3550 = vrot.slane %v3444, 1
      %v3551 = vsel %vm274, %v3548, %v3550
      %v3552 = vld [vmem:[%s2 + $0x4] sm:$0xf]
      %v3553 = vsel %vm356, %v3479, 0
      %v3555 = vsel %vm356, %v3481, 0
      %v3557 = vsel %vm356, %v3484, 0
      %v3559 = vsel %vm356, %v3486, 0
      %v3561 = vsel %vm356, %v3489, 0
      %v3563 = vsel %vm356, %v3491, 0
      %v3565 = vsel %vm356, %v3494, 0
      %v3567 = vsel %vm356, %v3496, 0
      %v3569 = vsel %vm356, %v3499, 0
      %v3571 = vsel %vm356, %v3501, 0
      %v3573 = vsel %vm356, %v3504, 0
      %v3575 = vsel %vm356, %v3506, 0
      %v3577 = vsel %vm356, %v3509, 0
      %v3579 = vsel %vm356, %v3511, 0
      %v3581 = vsel %vm356, %v3514, 0
      %v3583 = vsel %vm356, %v3516, 0
      %v3585 = vsel %vm356, %v3519, 0
      %v3587 = vsel %vm356, %v3521, 0
      %v3589 = vsel %vm356, %v3524, 0
      %v3591 = vsel %vm356, %v3526, 0
      %v3593 = vsel %vm356, %v3529, 0
      %v3595 = vsel %vm356, %v3531, 0
      %v3597 = vsel %vm356, %v3534, 0
      %v3599 = vsel %vm356, %v3536, 0
      %v3601 = vsel %vm356, %v3539, 0
      %v3603 = vsel %vm356, %v3541, 0
      %v3605 = vsel %vm356, %v3544, 0
      %v3607 = vsel %vm356, %v3546, 0
      %v3609 = vsel %vm356, %v3549, 0
      %v3611 = vsel %vm356, %v3551, 0
      %v3614 = vsel %vm421, %v3552, 0
      %3616 = vmatprep.subr.mxu0 0.0
      %3617 = vmatpush1.msra.mxu0 0.0
      %3618 = vmatprep.subr.mxu0 0.0
      %3619 = vmatpush1.msra.mxu0 0.0
      %3620 = vmatprep.subr.mxu0 0.0
      %3621 = vmatpush1.msra.mxu0 0.0
      %3622 = vmatprep.subr.mxu0 0.0
      %3623 = vmatpush1.msra.mxu0 0.0
      %3624 = vmatprep.subr.mxu0 0.0
      %3625 = vmatpush1.msra.mxu0 0.0
      %3626 = vmatprep.subr.mxu0 0.0
      %3627 = vmatpush1.msra.mxu0 0.0
      %3628 = vmatprep.subr.mxu0 0.0
      %3629 = vmatpush1.msra.mxu0 0.0
      %3630 = vmatprep.subr.mxu0 0.0
      %3631 = vmatpush1.msra.mxu0 0.0
      %3632 = vmatprep.subr.mxu0 0.0
      %3633 = vmatpush1.msra.mxu0 0.0
      %3634 = vmatprep.subr.mxu0 0.0
      %3635 = vmatpush1.msra.mxu0 0.0
      %3636 = vmatprep.subr.mxu0 0.0
      %3637 = vmatpush1.msra.mxu0 0.0
      %3638 = vmatprep.subr.mxu0 0.0
      %3639 = vmatpush1.msra.mxu0 0.0
      %3640 = vmatprep.subr.mxu0 0.0
      %3641 = vmatpush1.msra.mxu0 0.0
      %3642 = vmatprep.subr.mxu0 0.0
      %3643 = vmatpush1.msra.mxu0 0.0
      %3644 = vmatprep.subr.mxu0 0.0
      %3645 = vmatpush1.msra.mxu0 0.0
      %3646 = vmatprep.subr.mxu0 0.0
      %3647 = vmatpush1.msra.mxu0 %v3614
      %3648 = vmatprep.subr.mxu0 0.0
      %3649 = vmatpush2.msra.mxu0 0.0
      %3650 = vmatprep.subr.mxu0 0.0
      %3651 = vmatpush2.msra.mxu0 0.0
      %3652 = vmatprep.subr.mxu0 0.0
      %3653 = vmatpush2.msra.mxu0 0.0
      %3654 = vmatprep.subr.mxu0 0.0
      %3655 = vmatpush2.msra.mxu0 0.0
      %3656 = vmatprep.subr.mxu0 0.0
      %3657 = vmatpush2.msra.mxu0 0.0
      %3658 = vmatprep.subr.mxu0 0.0
      %3659 = vmatpush2.msra.mxu0 0.0
      %3660 = vmatprep.subr.mxu0 0.0
      %3661 = vmatpush2.msra.mxu0 0.0
      %3662 = vmatprep.subr.mxu0 0.0
      %3663 = vmatpush2.msra.mxu0 0.0
      %3664 = vmatprep.subr.mxu0 0.0
      %3665 = vmatpush2.msra.mxu0 0.0
      %3666 = vmatprep.subr.mxu0 0.0
      %3667 = vmatpush2.msra.mxu0 0.0
      %3668 = vmatprep.subr.mxu0 0.0
      %3669 = vmatpush2.msra.mxu0 0.0
      %3670 = vmatprep.subr.mxu0 0.0
      %3671 = vmatpush2.msra.mxu0 0.0
      %3672 = vmatprep.subr.mxu0 0.0
      %3673 = vmatpush2.msra.mxu0 0.0
      %3674 = vmatprep.subr.mxu0 0.0
      %3675 = vmatpush2.msra.mxu0 0.0
      %3676 = vmatprep.subr.mxu0 0.0
      %3677 = vmatpush2.msra.mxu0 0.0
      %3678 = vmatprep.subr.mxu0 0.0
      %3679 = vmatpush2.msra.mxu0 0.0
      %3680 = vmatprep.mubr.f32.mxu0 0.0
      %3681 = vmatmul.mubr.f32.gmra.mxu0 %v3553
      %v3682 = vpop.f32.mrf.mxu0
      %v3683 = vadd.f32 0.0, %v3682
      %v3684 = vpop.f32.mrf.mxu0
      %3685 = vmatprep.mubr.f32.mxu0 0.0
      %3686 = vmatmul.mubr.f32.gmra.mxu0 %v3555
      %v3687 = vpop.f32.mrf.mxu0
      %v3688 = vadd.f32 0.0, %v3687
      %v3689 = vpop.f32.mrf.mxu0
      %3690 = vmatprep.mubr.f32.mxu0 0.0
      %3691 = vmatmul.mubr.f32.gmra.mxu0 %v3557
      %v3692 = vpop.f32.mrf.mxu0
      %v3693 = vadd.f32 0.0, %v3692
      %v3694 = vpop.f32.mrf.mxu0
      %3695 = vmatprep.mubr.f32.mxu0 0.0
      %3696 = vmatmul.mubr.f32.gmra.mxu0 %v3559
      %v3697 = vpop.f32.mrf.mxu0
      %v3698 = vadd.f32 0.0, %v3697
      %v3699 = vpop.f32.mrf.mxu0
      %3700 = vmatprep.mubr.f32.mxu0 0.0
      %3701 = vmatmul.mubr.f32.gmra.mxu0 %v3553
      %v3702 = vpop.f32.mrf.mxu0
      %v3703 = vadd.f32 0.0, %v3702
      %v3704 = vpop.f32.mrf.mxu0
      %3705 = vmatprep.mubr.f32.mxu0 0.0
      %3706 = vmatmul.mubr.f32.gmra.mxu0 %v3555
      %v3707 = vpop.f32.mrf.mxu0
      %v3708 = vadd.f32 0.0, %v3707
      %v3709 = vpop.f32.mrf.mxu0
      %3710 = vmatprep.mubr.f32.mxu0 0.0
      %3711 = vmatmul.mubr.f32.gmra.mxu0 %v3561
      %v3712 = vpop.f32.mrf.mxu0
      %v3713 = vadd.f32 0.0, %v3712
      %v3714 = vpop.f32.mrf.mxu0
      %3715 = vmatprep.mubr.f32.mxu0 0.0
      %3716 = vmatmul.mubr.f32.gmra.mxu0 %v3563
      %v3717 = vpop.f32.mrf.mxu0
      %v3718 = vadd.f32 0.0, %v3717
      %v3719 = vpop.f32.mrf.mxu0
      %3720 = vmatprep.mubr.f32.mxu0 0.0
      %3721 = vmatmul.mubr.f32.gmra.mxu0 %v3565
      %v3722 = vpop.f32.mrf.mxu0
      %v3723 = vadd.f32 0.0, %v3722
      %v3724 = vpop.f32.mrf.mxu0
      %3725 = vmatprep.mubr.f32.mxu0 0.0
      %3726 = vmatmul.mubr.f32.gmra.mxu0 %v3567
      %v3727 = vpop.f32.mrf.mxu0
      %v3728 = vadd.f32 0.0, %v3727
      %v3729 = vpop.f32.mrf.mxu0
      %3730 = vmatprep.mubr.f32.mxu0 0.0
      %3731 = vmatmul.mubr.f32.gmra.mxu0 %v3569
      %v3732 = vpop.f32.mrf.mxu0
      %v3733 = vadd.f32 0.0, %v3732
      %v3734 = vpop.f32.mrf.mxu0
      %3735 = vmatprep.mubr.f32.mxu0 0.0
      %3736 = vmatmul.mubr.f32.gmra.mxu0 %v3571
      %v3737 = vpop.f32.mrf.mxu0
      %v3738 = vadd.f32 0.0, %v3737
      %v3739 = vpop.f32.mrf.mxu0
      %3740 = vmatprep.mubr.f32.mxu0 0.0
      %3741 = vmatmul.mubr.f32.gmra.mxu0 %v3573
      %v3742 = vpop.f32.mrf.mxu0
      %v3743 = vadd.f32 0.0, %v3742
      %v3744 = vpop.f32.mrf.mxu0
      %3745 = vmatprep.mubr.f32.mxu0 0.0
      %3746 = vmatmul.mubr.f32.gmra.mxu0 %v3575
      %v3747 = vpop.f32.mrf.mxu0
      %v3748 = vadd.f32 0.0, %v3747
      %v3749 = vpop.f32.mrf.mxu0
      %3750 = vmatprep.mubr.f32.mxu0 0.0
      %3751 = vmatmul.mubr.f32.gmra.mxu0 %v3577
      %v3752 = vpop.f32.mrf.mxu0
      %v3753 = vadd.f32 0.0, %v3752
      %v3754 = vpop.f32.mrf.mxu0
      %3755 = vmatprep.mubr.f32.mxu0 0.0
      %3756 = vmatmul.mubr.f32.gmra.mxu0 %v3579
      %v3757 = vpop.f32.mrf.mxu0
      %v3758 = vadd.f32 0.0, %v3757
      %v3759 = vpop.f32.mrf.mxu0
      %3760 = vmatprep.mubr.f32.mxu0 0.0
      %3761 = vmatmul.mubr.f32.gmra.mxu0 %v3581
      %v3762 = vpop.f32.mrf.mxu0
      %v3763 = vadd.f32 0.0, %v3762
      %v3764 = vpop.f32.mrf.mxu0
      %3765 = vmatprep.mubr.f32.mxu0 0.0
      %3766 = vmatmul.mubr.f32.gmra.mxu0 %v3583
      %v3767 = vpop.f32.mrf.mxu0
      %v3768 = vadd.f32 0.0, %v3767
      %v3769 = vpop.f32.mrf.mxu0
      %3770 = vmatprep.mubr.f32.mxu0 0.0
      %3771 = vmatmul.mubr.f32.gmra.mxu0 %v3585
      %v3772 = vpop.f32.mrf.mxu0
      %v3773 = vadd.f32 0.0, %v3772
      %v3774 = vpop.f32.mrf.mxu0
      %3775 = vmatprep.mubr.f32.mxu0 0.0
      %3776 = vmatmul.mubr.f32.gmra.mxu0 %v3587
      %v3777 = vpop.f32.mrf.mxu0
      %v3778 = vadd.f32 0.0, %v3777
      %v3779 = vpop.f32.mrf.mxu0
      %3780 = vmatprep.mubr.f32.mxu0 0.0
      %3781 = vmatmul.mubr.f32.gmra.mxu0 %v3589
      %v3782 = vpop.f32.mrf.mxu0
      %v3783 = vadd.f32 0.0, %v3782
      %v3784 = vpop.f32.mrf.mxu0
      %3785 = vmatprep.mubr.f32.mxu0 0.0
      %3786 = vmatmul.mubr.f32.gmra.mxu0 %v3591
      %v3787 = vpop.f32.mrf.mxu0
      %v3788 = vadd.f32 0.0, %v3787
      %v3789 = vpop.f32.mrf.mxu0
      %3790 = vmatprep.mubr.f32.mxu0 0.0
      %3791 = vmatmul.mubr.f32.gmra.mxu0 %v3593
      %v3792 = vpop.f32.mrf.mxu0
      %v3793 = vadd.f32 0.0, %v3792
      %v3794 = vpop.f32.mrf.mxu0
      %3795 = vmatprep.mubr.f32.mxu0 0.0
      %3796 = vmatmul.mubr.f32.gmra.mxu0 %v3595
      %v3797 = vpop.f32.mrf.mxu0
      %v3798 = vadd.f32 0.0, %v3797
      %v3799 = vpop.f32.mrf.mxu0
      %3800 = vmatprep.mubr.f32.mxu0 0.0
      %3801 = vmatmul.mubr.f32.gmra.mxu0 %v3597
      %v3802 = vpop.f32.mrf.mxu0
      %v3803 = vadd.f32 0.0, %v3802
      %v3804 = vpop.f32.mrf.mxu0
      %3805 = vmatprep.mubr.f32.mxu0 0.0
      %3806 = vmatmul.mubr.f32.gmra.mxu0 %v3599
      %v3807 = vpop.f32.mrf.mxu0
      %v3808 = vadd.f32 0.0, %v3807
      %v3809 = vpop.f32.mrf.mxu0
      %3810 = vmatprep.mubr.f32.mxu0 0.0
      %3811 = vmatmul.mubr.f32.gmra.mxu0 %v3601
      %v3812 = vpop.f32.mrf.mxu0
      %v3813 = vadd.f32 0.0, %v3812
      %v3814 = vpop.f32.mrf.mxu0
      %3815 = vmatprep.mubr.f32.mxu0 0.0
      %3816 = vmatmul.mubr.f32.gmra.mxu0 %v3603
      %v3817 = vpop.f32.mrf.mxu0
      %v3818 = vadd.f32 0.0, %v3817
      %v3819 = vpop.f32.mrf.mxu0
      %3820 = vmatprep.mubr.f32.mxu0 0.0
      %3821 = vmatmul.mubr.f32.gmra.mxu0 %v3605
      %v3822 = vpop.f32.mrf.mxu0
      %v3823 = vadd.f32 0.0, %v3822
      %v3824 = vpop.f32.mrf.mxu0
      %3825 = vmatprep.mubr.f32.mxu0 0.0
      %3826 = vmatmul.mubr.f32.gmra.mxu0 %v3607
      %v3827 = vpop.f32.mrf.mxu0
      %v3828 = vadd.f32 0.0, %v3827
      %v3829 = vpop.f32.mrf.mxu0
      %3830 = vmatprep.mubr.f32.mxu0 0.0
      %3831 = vmatmul.mubr.f32.gmra.mxu0 %v3609
      %v3832 = vpop.f32.mrf.mxu0
      %v3833 = vadd.f32 0.0, %v3832
      %v3834 = vpop.f32.mrf.mxu0
      %3835 = vmatprep.mubr.f32.mxu0 0.0
      %3836 = vmatmul.mubr.f32.gmra.mxu0 %v3611
      %v3837 = vpop.f32.mrf.mxu0
      %v3838 = vadd.f32 0.0, %v3837
      %v3839 = vpop.f32.mrf.mxu0
      %3840 = vdwg.mxu0
      %v3841 = vsel %vm356, %v3414, 0
      %v3843 = vsel %vm356, %v3304, 0
      %v3845 = vsel %vm356, %v3415, 0
      %v3847 = vsel %vm356, %v3307, 0
      %v3849 = vsel %vm356, %v3416, 0
      %v3851 = vsel %vm356, %v3310, 0
      %v3853 = vsel %vm356, %v3417, 0
      %v3855 = vsel %vm356, %v3313, 0
      %v3857 = vsel %vm356, %v3418, 0
      %v3859 = vsel %vm356, %v3316, 0
      %v3861 = vsel %vm356, %v3419, 0
      %v3863 = vsel %vm356, %v3319, 0
      %v3865 = vsel %vm356, %v3420, 0
      %v3867 = vsel %vm356, %v3322, 0
      %v3869 = vsel %vm356, %v3421, 0
      %v3871 = vsel %vm356, %v3325, 0
      %v3873 = vsel %vm356, %v3422, 0
      %v3875 = vsel %vm356, %v3328, 0
      %v3877 = vsel %vm356, %v3423, 0
      %v3879 = vsel %vm356, %v3331, 0
      %v3881 = vsel %vm356, %v3424, 0
      %v3883 = vsel %vm356, %v3334, 0
      %v3885 = vsel %vm356, %v3425, 0
      %v3887 = vsel %vm356, %v3337, 0
      %v3889 = vsel %vm356, %v3426, 0
      %v3891 = vsel %vm356, %v3340, 0
      %v3893 = vsel %vm356, %v3427, 0
      %v3895 = vsel %vm356, %v3343, 0
      %v3897 = vsel %vm356, %v3428, 0
      %v3899 = vsel %vm356, %v3346, 0
      %v3902 = vsel %vm421, %v3446, 0
      %3904 = vmatprep.subr.mxu0 0.0
      %3905 = vmatpush1.msra.mxu0 0.0
      %3906 = vmatprep.subr.mxu0 0.0
      %3907 = vmatpush1.msra.mxu0 0.0
      %3908 = vmatprep.subr.mxu0 0.0
      %3909 = vmatpush1.msra.mxu0 0.0
      %3910 = vmatprep.subr.mxu0 0.0
      %3911 = vmatpush1.msra.mxu0 0.0
      %3912 = vmatprep.subr.mxu0 0.0
      %3913 = vmatpush1.msra.mxu0 0.0
      %3914 = vmatprep.subr.mxu0 0.0
      %3915 = vmatpush1.msra.mxu0 0.0
      %3916 = vmatprep.subr.mxu0 0.0
      %3917 = vmatpush1.msra.mxu0 0.0
      %3918 = vmatprep.subr.mxu0 0.0
      %3919 = vmatpush1.msra.mxu0 0.0
      %3920 = vmatprep.subr.mxu0 0.0
      %3921 = vmatpush1.msra.mxu0 0.0
      %3922 = vmatprep.subr.mxu0 0.0
      %3923 = vmatpush1.msra.mxu0 0.0
      %3924 = vmatprep.subr.mxu0 0.0
      %3925 = vmatpush1.msra.mxu0 0.0
      %3926 = vmatprep.subr.mxu0 0.0
      %3927 = vmatpush1.msra.mxu0 0.0
      %3928 = vmatprep.subr.mxu0 0.0
      %3929 = vmatpush1.msra.mxu0 0.0
      %3930 = vmatprep.subr.mxu0 0.0
      %3931 = vmatpush1.msra.mxu0 0.0
      %3932 = vmatprep.subr.mxu0 0.0
      %3933 = vmatpush1.msra.mxu0 0.0
      %3934 = vmatprep.subr.mxu0 0.0
      %3935 = vmatpush1.msra.mxu0 %v3902
      %3936 = vmatprep.subr.mxu0 0.0
      %3937 = vmatpush2.msra.mxu0 0.0
      %3938 = vmatprep.subr.mxu0 0.0
      %3939 = vmatpush2.msra.mxu0 0.0
      %3940 = vmatprep.subr.mxu0 0.0
      %3941 = vmatpush2.msra.mxu0 0.0
      %3942 = vmatprep.subr.mxu0 0.0
      %3943 = vmatpush2.msra.mxu0 0.0
      %3944 = vmatprep.subr.mxu0 0.0
      %3945 = vmatpush2.msra.mxu0 0.0
      %3946 = vmatprep.subr.mxu0 0.0
      %3947 = vmatpush2.msra.mxu0 0.0
      %3948 = vmatprep.subr.mxu0 0.0
      %3949 = vmatpush2.msra.mxu0 0.0
      %3950 = vmatprep.subr.mxu0 0.0
      %3951 = vmatpush2.msra.mxu0 0.0
      %3952 = vmatprep.subr.mxu0 0.0
      %3953 = vmatpush2.msra.mxu0 0.0
      %3954 = vmatprep.subr.mxu0 0.0
      %3955 = vmatpush2.msra.mxu0 0.0
      %3956 = vmatprep.subr.mxu0 0.0
      %3957 = vmatpush2.msra.mxu0 0.0
      %3958 = vmatprep.subr.mxu0 0.0
      %3959 = vmatpush2.msra.mxu0 0.0
      %3960 = vmatprep.subr.mxu0 0.0
      %3961 = vmatpush2.msra.mxu0 0.0
      %3962 = vmatprep.subr.mxu0 0.0
      %3963 = vmatpush2.msra.mxu0 0.0
      %3964 = vmatprep.subr.mxu0 0.0
      %3965 = vmatpush2.msra.mxu0 0.0
      %3966 = vmatprep.subr.mxu0 0.0
      %3967 = vmatpush2.msra.mxu0 0.0
      %3968 = vmatprep.mubr.f32.mxu0 0.0
      %3969 = vmatmul.mubr.f32.gmra.mxu0 %v3841
      %v3970 = vpop.f32.mrf.mxu0
      %v3971 = vadd.f32 %v3683, %v3970
      %v3972 = vpop.f32.mrf.mxu0
      %3973 = vmatprep.mubr.f32.mxu0 0.0
      %3974 = vmatmul.mubr.f32.gmra.mxu0 %v3843
      %v3975 = vpop.f32.mrf.mxu0
      %v3976 = vadd.f32 %v3688, %v3975
      %v3977 = vpop.f32.mrf.mxu0
      %3978 = vmatprep.mubr.f32.mxu0 0.0
      %3979 = vmatmul.mubr.f32.gmra.mxu0 %v3845
      %v3980 = vpop.f32.mrf.mxu0
      %v3981 = vadd.f32 %v3693, %v3980
      %v3982 = vpop.f32.mrf.mxu0
      %3983 = vmatprep.mubr.f32.mxu0 0.0
      %3984 = vmatmul.mubr.f32.gmra.mxu0 %v3847
      %v3985 = vpop.f32.mrf.mxu0
      %v3986 = vadd.f32 %v3698, %v3985
      %v3987 = vpop.f32.mrf.mxu0
      %3988 = vmatprep.mubr.f32.mxu0 0.0
      %3989 = vmatmul.mubr.f32.gmra.mxu0 %v3841
      %v3990 = vpop.f32.mrf.mxu0
      %v3991 = vadd.f32 %v3703, %v3990
      %v3992 = vpop.f32.mrf.mxu0
      %3993 = vmatprep.mubr.f32.mxu0 0.0
      %3994 = vmatmul.mubr.f32.gmra.mxu0 %v3843
      %v3995 = vpop.f32.mrf.mxu0
      %v3996 = vadd.f32 %v3708, %v3995
      %v3997 = vpop.f32.mrf.mxu0
      %3998 = vmatprep.mubr.f32.mxu0 0.0
      %3999 = vmatmul.mubr.f32.gmra.mxu0 %v3849
      %v4000 = vpop.f32.mrf.mxu0
      %v4001 = vadd.f32 %v3713, %v4000
      %v4002 = vpop.f32.mrf.mxu0
      %4003 = vmatprep.mubr.f32.mxu0 0.0
      %4004 = vmatmul.mubr.f32.gmra.mxu0 %v3851
      %v4005 = vpop.f32.mrf.mxu0
      %v4006 = vadd.f32 %v3718, %v4005
      %v4007 = vpop.f32.mrf.mxu0
      %4008 = vmatprep.mubr.f32.mxu0 0.0
      %4009 = vmatmul.mubr.f32.gmra.mxu0 %v3853
      %v4010 = vpop.f32.mrf.mxu0
      %v4011 = vadd.f32 %v3723, %v4010
      %v4012 = vpop.f32.mrf.mxu0
      %4013 = vmatprep.mubr.f32.mxu0 0.0
      %4014 = vmatmul.mubr.f32.gmra.mxu0 %v3855
      %v4015 = vpop.f32.mrf.mxu0
      %v4016 = vadd.f32 %v3728, %v4015
      %v4017 = vpop.f32.mrf.mxu0
      %4018 = vmatprep.mubr.f32.mxu0 0.0
      %4019 = vmatmul.mubr.f32.gmra.mxu0 %v3857
      %v4020 = vpop.f32.mrf.mxu0
      %v4021 = vadd.f32 %v3733, %v4020
      %v4022 = vpop.f32.mrf.mxu0
      %4023 = vmatprep.mubr.f32.mxu0 0.0
      %4024 = vmatmul.mubr.f32.gmra.mxu0 %v3859
      %v4025 = vpop.f32.mrf.mxu0
      %v4026 = vadd.f32 %v3738, %v4025
      %v4027 = vpop.f32.mrf.mxu0
      %4028 = vmatprep.mubr.f32.mxu0 0.0
      %4029 = vmatmul.mubr.f32.gmra.mxu0 %v3861
      %v4030 = vpop.f32.mrf.mxu0
      %v4031 = vadd.f32 %v3743, %v4030
      %v4032 = vpop.f32.mrf.mxu0
      %4033 = vmatprep.mubr.f32.mxu0 0.0
      %4034 = vmatmul.mubr.f32.gmra.mxu0 %v3863
      %v4035 = vpop.f32.mrf.mxu0
      %v4036 = vadd.f32 %v3748, %v4035
      %v4037 = vpop.f32.mrf.mxu0
      %4038 = vmatprep.mubr.f32.mxu0 0.0
      %4039 = vmatmul.mubr.f32.gmra.mxu0 %v3865
      %v4040 = vpop.f32.mrf.mxu0
      %v4041 = vadd.f32 %v3753, %v4040
      %v4042 = vpop.f32.mrf.mxu0
      %4043 = vmatprep.mubr.f32.mxu0 0.0
      %4044 = vmatmul.mubr.f32.gmra.mxu0 %v3867
      %v4045 = vpop.f32.mrf.mxu0
      %v4046 = vadd.f32 %v3758, %v4045
      %v4047 = vpop.f32.mrf.mxu0
      %4048 = vmatprep.mubr.f32.mxu0 0.0
      %4049 = vmatmul.mubr.f32.gmra.mxu0 %v3869
      %v4050 = vpop.f32.mrf.mxu0
      %v4051 = vadd.f32 %v3763, %v4050
      %v4052 = vpop.f32.mrf.mxu0
      %4053 = vmatprep.mubr.f32.mxu0 0.0
      %4054 = vmatmul.mubr.f32.gmra.mxu0 %v3871
      %v4055 = vpop.f32.mrf.mxu0
      %v4056 = vadd.f32 %v3768, %v4055
      %v4057 = vpop.f32.mrf.mxu0
      %4058 = vmatprep.mubr.f32.mxu0 0.0
      %4059 = vmatmul.mubr.f32.gmra.mxu0 %v3873
      %v4060 = vpop.f32.mrf.mxu0
      %v4061 = vadd.f32 %v3773, %v4060
      %v4062 = vpop.f32.mrf.mxu0
      %4063 = vmatprep.mubr.f32.mxu0 0.0
      %4064 = vmatmul.mubr.f32.gmra.mxu0 %v3875
      %v4065 = vpop.f32.mrf.mxu0
      %v4066 = vadd.f32 %v3778, %v4065
      %v4067 = vpop.f32.mrf.mxu0
      %4068 = vmatprep.mubr.f32.mxu0 0.0
      %4069 = vmatmul.mubr.f32.gmra.mxu0 %v3877
      %v4070 = vpop.f32.mrf.mxu0
      %v4071 = vadd.f32 %v3783, %v4070
      %v4072 = vpop.f32.mrf.mxu0
      %4073 = vmatprep.mubr.f32.mxu0 0.0
      %4074 = vmatmul.mubr.f32.gmra.mxu0 %v3879
      %v4075 = vpop.f32.mrf.mxu0
      %v4076 = vadd.f32 %v3788, %v4075
      %v4077 = vpop.f32.mrf.mxu0
      %4078 = vmatprep.mubr.f32.mxu0 0.0
      %4079 = vmatmul.mubr.f32.gmra.mxu0 %v3881
      %v4080 = vpop.f32.mrf.mxu0
      %v4081 = vadd.f32 %v3793, %v4080
      %v4082 = vpop.f32.mrf.mxu0
      %4083 = vmatprep.mubr.f32.mxu0 0.0
      %4084 = vmatmul.mubr.f32.gmra.mxu0 %v3883
      %v4085 = vpop.f32.mrf.mxu0
      %v4086 = vadd.f32 %v3798, %v4085
      %v4087 = vpop.f32.mrf.mxu0
      %4088 = vmatprep.mubr.f32.mxu0 0.0
      %4089 = vmatmul.mubr.f32.gmra.mxu0 %v3885
      %v4090 = vpop.f32.mrf.mxu0
      %v4091 = vadd.f32 %v3803, %v4090
      %v4092 = vpop.f32.mrf.mxu0
      %4093 = vmatprep.mubr.f32.mxu0 0.0
      %4094 = vmatmul.mubr.f32.gmra.mxu0 %v3887
      %v4095 = vpop.f32.mrf.mxu0
      %v4096 = vadd.f32 %v3808, %v4095
      %v4097 = vpop.f32.mrf.mxu0
      %4098 = vmatprep.mubr.f32.mxu0 0.0
      %4099 = vmatmul.mubr.f32.gmra.mxu0 %v3889
      %v4100 = vpop.f32.mrf.mxu0
      %v4101 = vadd.f32 %v3813, %v4100
      %v4102 = vpop.f32.mrf.mxu0
      %4103 = vmatprep.mubr.f32.mxu0 0.0
      %4104 = vmatmul.mubr.f32.gmra.mxu0 %v3891
      %v4105 = vpop.f32.mrf.mxu0
      %v4106 = vadd.f32 %v3818, %v4105
      %v4107 = vpop.f32.mrf.mxu0
      %4108 = vmatprep.mubr.f32.mxu0 0.0
      %4109 = vmatmul.mubr.f32.gmra.mxu0 %v3893
      %v4110 = vpop.f32.mrf.mxu0
      %v4111 = vadd.f32 %v3823, %v4110
      %v4112 = vpop.f32.mrf.mxu0
      %4113 = vmatprep.mubr.f32.mxu0 0.0
      %4114 = vmatmul.mubr.f32.gmra.mxu0 %v3895
      %v4115 = vpop.f32.mrf.mxu0
      %v4116 = vadd.f32 %v3828, %v4115
      %v4117 = vpop.f32.mrf.mxu0
      %4118 = vmatprep.mubr.f32.mxu0 0.0
      %4119 = vmatmul.mubr.f32.gmra.mxu0 %v3897
      %v4120 = vpop.f32.mrf.mxu0
      %v4121 = vadd.f32 %v3833, %v4120
      %v4122 = vpop.f32.mrf.mxu0
      %4123 = vmatprep.mubr.f32.mxu0 0.0
      %4124 = vmatmul.mubr.f32.gmra.mxu0 %v3899
      %v4125 = vpop.f32.mrf.mxu0
      %v4126 = vadd.f32 %v3838, %v4125
      %v4127 = vpop.f32.mrf.mxu0
      %4128 = vdwg.mxu0
      %v4129 = vrot.slane %v3414, 2
      %v4130 = vrot.slane %v3304, 2
      %v4131 = vsel %vm942, %v4129, %v4130
      %v4132 = vrot.slane %v3430, 2
      %v4133 = vsel %vm942, %v4130, %v4132
      %v4134 = vrot.slane %v3415, 2
      %v4135 = vrot.slane %v3307, 2
      %v4136 = vsel %vm942, %v4134, %v4135
      %v4137 = vrot.slane %v3431, 2
      %v4138 = vsel %vm942, %v4135, %v4137
      %v4139 = vrot.slane %v3416, 2
      %v4140 = vrot.slane %v3310, 2
      %v4141 = vsel %vm942, %v4139, %v4140
      %v4142 = vrot.slane %v3432, 2
      %v4143 = vsel %vm942, %v4140, %v4142
      %v4144 = vrot.slane %v3417, 2
      %v4145 = vrot.slane %v3313, 2
      %v4146 = vsel %vm942, %v4144, %v4145
      %v4147 = vrot.slane %v3433, 2
      %v4148 = vsel %vm942, %v4145, %v4147
      %v4149 = vrot.slane %v3418, 2
      %v4150 = vrot.slane %v3316, 2
      %v4151 = vsel %vm942, %v4149, %v4150
      %v4152 = vrot.slane %v3434, 2
      %v4153 = vsel %vm942, %v4150, %v4152
      %v4154 = vrot.slane %v3419, 2
      %v4155 = vrot.slane %v3319, 2
      %v4156 = vsel %vm942, %v4154, %v4155
      %v4157 = vrot.slane %v3435, 2
      %v4158 = vsel %vm942, %v4155, %v4157
      %v4159 = vrot.slane %v3420, 2
      %v4160 = vrot.slane %v3322, 2
      %v4161 = vsel %vm942, %v4159, %v4160
      %v4162 = vrot.slane %v3436, 2
      %v4163 = vsel %vm942, %v4160, %v4162
      %v4164 = vrot.slane %v3421, 2
      %v4165 = vrot.slane %v3325, 2
      %v4166 = vsel %vm942, %v4164, %v4165
      %v4167 = vrot.slane %v3437, 2
      %v4168 = vsel %vm942, %v4165, %v4167
      %v4169 = vrot.slane %v3422, 2
      %v4170 = vrot.slane %v3328, 2
      %v4171 = vsel %vm942, %v4169, %v4170
      %v4172 = vrot.slane %v3438, 2
      %v4173 = vsel %vm942, %v4170, %v4172
      %v4174 = vrot.slane %v3423, 2
      %v4175 = vrot.slane %v3331, 2
      %v4176 = vsel %vm942, %v4174, %v4175
      %v4177 = vrot.slane %v3439, 2
      %v4178 = vsel %vm942, %v4175, %v4177
      %v4179 = vrot.slane %v3424, 2
      %v4180 = vrot.slane %v3334, 2
      %v4181 = vsel %vm942, %v4179, %v4180
      %v4182 = vrot.slane %v3440, 2
      %v4183 = vsel %vm942, %v4180, %v4182
      %v4184 = vrot.slane %v3425, 2
      %v4185 = vrot.slane %v3337, 2
      %v4186 = vsel %vm942, %v4184, %v4185
      %v4187 = vrot.slane %v3441, 2
      %v4188 = vsel %vm942, %v4185, %v4187
      %v4189 = vrot.slane %v3426, 2
      %v4190 = vrot.slane %v3340, 2
      %v4191 = vsel %vm942, %v4189, %v4190
      %v4192 = vrot.slane %v3442, 2
      %v4193 = vsel %vm942, %v4190, %v4192
      %v4194 = vrot.slane %v3427, 2
      %v4195 = vrot.slane %v3343, 2
      %v4196 = vsel %vm942, %v4194, %v4195
      %v4197 = vrot.slane %v3443, 2
      %v4198 = vsel %vm942, %v4195, %v4197
      %v4199 = vrot.slane %v3428, 2
      %v4200 = vrot.slane %v3346, 2
      %v4201 = vsel %vm942, %v4199, %v4200
      %v4202 = vrot.slane %v3444, 2
      %v4203 = vsel %vm942, %v4200, %v4202
      %v4204 = vld [vmem:[%s2 + $0x8] sm:$0xf]
      %v4205 = vsel %vm356, %v4131, 0
      %v4207 = vsel %vm356, %v4133, 0
      %v4209 = vsel %vm356, %v4136, 0
      %v4211 = vsel %vm356, %v4138, 0
      %v4213 = vsel %vm356, %v4141, 0
      %v4215 = vsel %vm356, %v4143, 0
      %v4217 = vsel %vm356, %v4146, 0
      %v4219 = vsel %vm356, %v4148, 0
      %v4221 = vsel %vm356, %v4151, 0
      %v4223 = vsel %vm356, %v4153, 0
      %v4225 = vsel %vm356, %v4156, 0
      %v4227 = vsel %vm356, %v4158, 0
      %v4229 = vsel %vm356, %v4161, 0
      %v4231 = vsel %vm356, %v4163, 0
      %v4233 = vsel %vm356, %v4166, 0
      %v4235 = vsel %vm356, %v4168, 0
      %v4237 = vsel %vm356, %v4171, 0
      %v4239 = vsel %vm356, %v4173, 0
      %v4241 = vsel %vm356, %v4176, 0
      %v4243 = vsel %vm356, %v4178, 0
      %v4245 = vsel %vm356, %v4181, 0
      %v4247 = vsel %vm356, %v4183, 0
      %v4249 = vsel %vm356, %v4186, 0
      %v4251 = vsel %vm356, %v4188, 0
      %v4253 = vsel %vm356, %v4191, 0
      %v4255 = vsel %vm356, %v4193, 0
      %v4257 = vsel %vm356, %v4196, 0
      %v4259 = vsel %vm356, %v4198, 0
      %v4261 = vsel %vm356, %v4201, 0
      %v4263 = vsel %vm356, %v4203, 0
      %v4266 = vsel %vm421, %v4204, 0
      %4268 = vmatprep.subr.mxu0 0.0
      %4269 = vmatpush1.msra.mxu0 0.0
      %4270 = vmatprep.subr.mxu0 0.0
      %4271 = vmatpush1.msra.mxu0 0.0
      %4272 = vmatprep.subr.mxu0 0.0
      %4273 = vmatpush1.msra.mxu0 0.0
      %4274 = vmatprep.subr.mxu0 0.0
      %4275 = vmatpush1.msra.mxu0 0.0
      %4276 = vmatprep.subr.mxu0 0.0
      %4277 = vmatpush1.msra.mxu0 0.0
      %4278 = vmatprep.subr.mxu0 0.0
      %4279 = vmatpush1.msra.mxu0 0.0
      %4280 = vmatprep.subr.mxu0 0.0
      %4281 = vmatpush1.msra.mxu0 0.0
      %4282 = vmatprep.subr.mxu0 0.0
      %4283 = vmatpush1.msra.mxu0 0.0
      %4284 = vmatprep.subr.mxu0 0.0
      %4285 = vmatpush1.msra.mxu0 0.0
      %4286 = vmatprep.subr.mxu0 0.0
      %4287 = vmatpush1.msra.mxu0 0.0
      %4288 = vmatprep.subr.mxu0 0.0
      %4289 = vmatpush1.msra.mxu0 0.0
      %4290 = vmatprep.subr.mxu0 0.0
      %4291 = vmatpush1.msra.mxu0 0.0
      %4292 = vmatprep.subr.mxu0 0.0
      %4293 = vmatpush1.msra.mxu0 0.0
      %4294 = vmatprep.subr.mxu0 0.0
      %4295 = vmatpush1.msra.mxu0 0.0
      %4296 = vmatprep.subr.mxu0 0.0
      %4297 = vmatpush1.msra.mxu0 0.0
      %4298 = vmatprep.subr.mxu0 0.0
      %4299 = vmatpush1.msra.mxu0 %v4266
      %4300 = vmatprep.subr.mxu0 0.0
      %4301 = vmatpush2.msra.mxu0 0.0
      %4302 = vmatprep.subr.mxu0 0.0
      %4303 = vmatpush2.msra.mxu0 0.0
      %4304 = vmatprep.subr.mxu0 0.0
      %4305 = vmatpush2.msra.mxu0 0.0
      %4306 = vmatprep.subr.mxu0 0.0
      %4307 = vmatpush2.msra.mxu0 0.0
      %4308 = vmatprep.subr.mxu0 0.0
      %4309 = vmatpush2.msra.mxu0 0.0
      %4310 = vmatprep.subr.mxu0 0.0
      %4311 = vmatpush2.msra.mxu0 0.0
      %4312 = vmatprep.subr.mxu0 0.0
      %4313 = vmatpush2.msra.mxu0 0.0
      %4314 = vmatprep.subr.mxu0 0.0
      %4315 = vmatpush2.msra.mxu0 0.0
      %4316 = vmatprep.subr.mxu0 0.0
      %4317 = vmatpush2.msra.mxu0 0.0
      %4318 = vmatprep.subr.mxu0 0.0
      %4319 = vmatpush2.msra.mxu0 0.0
      %4320 = vmatprep.subr.mxu0 0.0
      %4321 = vmatpush2.msra.mxu0 0.0
      %4322 = vmatprep.subr.mxu0 0.0
      %4323 = vmatpush2.msra.mxu0 0.0
      %4324 = vmatprep.subr.mxu0 0.0
      %4325 = vmatpush2.msra.mxu0 0.0
      %4326 = vmatprep.subr.mxu0 0.0
      %4327 = vmatpush2.msra.mxu0 0.0
      %4328 = vmatprep.subr.mxu0 0.0
      %4329 = vmatpush2.msra.mxu0 0.0
      %4330 = vmatprep.subr.mxu0 0.0
      %4331 = vmatpush2.msra.mxu0 0.0
      %4332 = vmatprep.mubr.f32.mxu0 0.0
      %4333 = vmatmul.mubr.f32.gmra.mxu0 %v4205
      %v4334 = vpop.f32.mrf.mxu0
      %v4335 = vadd.f32 0.0, %v4334
      %v4336 = vpop.f32.mrf.mxu0
      %4337 = vmatprep.mubr.f32.mxu0 0.0
      %4338 = vmatmul.mubr.f32.gmra.mxu0 %v4207
      %v4339 = vpop.f32.mrf.mxu0
      %v4340 = vadd.f32 0.0, %v4339
      %v4341 = vpop.f32.mrf.mxu0
      %4342 = vmatprep.mubr.f32.mxu0 0.0
      %4343 = vmatmul.mubr.f32.gmra.mxu0 %v4209
      %v4344 = vpop.f32.mrf.mxu0
      %v4345 = vadd.f32 0.0, %v4344
      %v4346 = vpop.f32.mrf.mxu0
      %4347 = vmatprep.mubr.f32.mxu0 0.0
      %4348 = vmatmul.mubr.f32.gmra.mxu0 %v4211
      %v4349 = vpop.f32.mrf.mxu0
      %v4350 = vadd.f32 0.0, %v4349
      %v4351 = vpop.f32.mrf.mxu0
      %4352 = vmatprep.mubr.f32.mxu0 0.0
      %4353 = vmatmul.mubr.f32.gmra.mxu0 %v4205
      %v4354 = vpop.f32.mrf.mxu0
      %v4355 = vadd.f32 0.0, %v4354
      %v4356 = vpop.f32.mrf.mxu0
      %4357 = vmatprep.mubr.f32.mxu0 0.0
      %4358 = vmatmul.mubr.f32.gmra.mxu0 %v4207
      %v4359 = vpop.f32.mrf.mxu0
      %v4360 = vadd.f32 0.0, %v4359
      %v4361 = vpop.f32.mrf.mxu0
      %4362 = vmatprep.mubr.f32.mxu0 0.0
      %4363 = vmatmul.mubr.f32.gmra.mxu0 %v4213
      %v4364 = vpop.f32.mrf.mxu0
      %v4365 = vadd.f32 0.0, %v4364
      %v4366 = vpop.f32.mrf.mxu0
      %4367 = vmatprep.mubr.f32.mxu0 0.0
      %4368 = vmatmul.mubr.f32.gmra.mxu0 %v4215
      %v4369 = vpop.f32.mrf.mxu0
      %v4370 = vadd.f32 0.0, %v4369
      %v4371 = vpop.f32.mrf.mxu0
      %4372 = vmatprep.mubr.f32.mxu0 0.0
      %4373 = vmatmul.mubr.f32.gmra.mxu0 %v4217
      %v4374 = vpop.f32.mrf.mxu0
      %v4375 = vadd.f32 0.0, %v4374
      %v4376 = vpop.f32.mrf.mxu0
      %4377 = vmatprep.mubr.f32.mxu0 0.0
      %4378 = vmatmul.mubr.f32.gmra.mxu0 %v4219
      %v4379 = vpop.f32.mrf.mxu0
      %v4380 = vadd.f32 0.0, %v4379
      %v4381 = vpop.f32.mrf.mxu0
      %4382 = vmatprep.mubr.f32.mxu0 0.0
      %4383 = vmatmul.mubr.f32.gmra.mxu0 %v4221
      %v4384 = vpop.f32.mrf.mxu0
      %v4385 = vadd.f32 0.0, %v4384
      %v4386 = vpop.f32.mrf.mxu0
      %4387 = vmatprep.mubr.f32.mxu0 0.0
      %4388 = vmatmul.mubr.f32.gmra.mxu0 %v4223
      %v4389 = vpop.f32.mrf.mxu0
      %v4390 = vadd.f32 0.0, %v4389
      %v4391 = vpop.f32.mrf.mxu0
      %4392 = vmatprep.mubr.f32.mxu0 0.0
      %4393 = vmatmul.mubr.f32.gmra.mxu0 %v4225
      %v4394 = vpop.f32.mrf.mxu0
      %v4395 = vadd.f32 0.0, %v4394
      %v4396 = vpop.f32.mrf.mxu0
      %4397 = vmatprep.mubr.f32.mxu0 0.0
      %4398 = vmatmul.mubr.f32.gmra.mxu0 %v4227
      %v4399 = vpop.f32.mrf.mxu0
      %v4400 = vadd.f32 0.0, %v4399
      %v4401 = vpop.f32.mrf.mxu0
      %4402 = vmatprep.mubr.f32.mxu0 0.0
      %4403 = vmatmul.mubr.f32.gmra.mxu0 %v4229
      %v4404 = vpop.f32.mrf.mxu0
      %v4405 = vadd.f32 0.0, %v4404
      %v4406 = vpop.f32.mrf.mxu0
      %4407 = vmatprep.mubr.f32.mxu0 0.0
      %4408 = vmatmul.mubr.f32.gmra.mxu0 %v4231
      %v4409 = vpop.f32.mrf.mxu0
      %v4410 = vadd.f32 0.0, %v4409
      %v4411 = vpop.f32.mrf.mxu0
      %4412 = vmatprep.mubr.f32.mxu0 0.0
      %4413 = vmatmul.mubr.f32.gmra.mxu0 %v4233
      %v4414 = vpop.f32.mrf.mxu0
      %v4415 = vadd.f32 0.0, %v4414
      %v4416 = vpop.f32.mrf.mxu0
      %4417 = vmatprep.mubr.f32.mxu0 0.0
      %4418 = vmatmul.mubr.f32.gmra.mxu0 %v4235
      %v4419 = vpop.f32.mrf.mxu0
      %v4420 = vadd.f32 0.0, %v4419
      %v4421 = vpop.f32.mrf.mxu0
      %4422 = vmatprep.mubr.f32.mxu0 0.0
      %4423 = vmatmul.mubr.f32.gmra.mxu0 %v4237
      %v4424 = vpop.f32.mrf.mxu0
      %v4425 = vadd.f32 0.0, %v4424
      %v4426 = vpop.f32.mrf.mxu0
      %4427 = vmatprep.mubr.f32.mxu0 0.0
      %4428 = vmatmul.mubr.f32.gmra.mxu0 %v4239
      %v4429 = vpop.f32.mrf.mxu0
      %v4430 = vadd.f32 0.0, %v4429
      %v4431 = vpop.f32.mrf.mxu0
      %4432 = vmatprep.mubr.f32.mxu0 0.0
      %4433 = vmatmul.mubr.f32.gmra.mxu0 %v4241
      %v4434 = vpop.f32.mrf.mxu0
      %v4435 = vadd.f32 0.0, %v4434
      %v4436 = vpop.f32.mrf.mxu0
      %4437 = vmatprep.mubr.f32.mxu0 0.0
      %4438 = vmatmul.mubr.f32.gmra.mxu0 %v4243
      %v4439 = vpop.f32.mrf.mxu0
      %v4440 = vadd.f32 0.0, %v4439
      %v4441 = vpop.f32.mrf.mxu0
      %4442 = vmatprep.mubr.f32.mxu0 0.0
      %4443 = vmatmul.mubr.f32.gmra.mxu0 %v4245
      %v4444 = vpop.f32.mrf.mxu0
      %v4445 = vadd.f32 0.0, %v4444
      %v4446 = vpop.f32.mrf.mxu0
      %4447 = vmatprep.mubr.f32.mxu0 0.0
      %4448 = vmatmul.mubr.f32.gmra.mxu0 %v4247
      %v4449 = vpop.f32.mrf.mxu0
      %v4450 = vadd.f32 0.0, %v4449
      %v4451 = vpop.f32.mrf.mxu0
      %4452 = vmatprep.mubr.f32.mxu0 0.0
      %4453 = vmatmul.mubr.f32.gmra.mxu0 %v4249
      %v4454 = vpop.f32.mrf.mxu0
      %v4455 = vadd.f32 0.0, %v4454
      %v4456 = vpop.f32.mrf.mxu0
      %4457 = vmatprep.mubr.f32.mxu0 0.0
      %4458 = vmatmul.mubr.f32.gmra.mxu0 %v4251
      %v4459 = vpop.f32.mrf.mxu0
      %v4460 = vadd.f32 0.0, %v4459
      %v4461 = vpop.f32.mrf.mxu0
      %4462 = vmatprep.mubr.f32.mxu0 0.0
      %4463 = vmatmul.mubr.f32.gmra.mxu0 %v4253
      %v4464 = vpop.f32.mrf.mxu0
      %v4465 = vadd.f32 0.0, %v4464
      %v4466 = vpop.f32.mrf.mxu0
      %4467 = vmatprep.mubr.f32.mxu0 0.0
      %4468 = vmatmul.mubr.f32.gmra.mxu0 %v4255
      %v4469 = vpop.f32.mrf.mxu0
      %v4470 = vadd.f32 0.0, %v4469
      %v4471 = vpop.f32.mrf.mxu0
      %4472 = vmatprep.mubr.f32.mxu0 0.0
      %4473 = vmatmul.mubr.f32.gmra.mxu0 %v4257
      %v4474 = vpop.f32.mrf.mxu0
      %v4475 = vadd.f32 0.0, %v4474
      %v4476 = vpop.f32.mrf.mxu0
      %4477 = vmatprep.mubr.f32.mxu0 0.0
      %4478 = vmatmul.mubr.f32.gmra.mxu0 %v4259
      %v4479 = vpop.f32.mrf.mxu0
      %v4480 = vadd.f32 0.0, %v4479
      %v4481 = vpop.f32.mrf.mxu0
      %4482 = vmatprep.mubr.f32.mxu0 0.0
      %4483 = vmatmul.mubr.f32.gmra.mxu0 %v4261
      %v4484 = vpop.f32.mrf.mxu0
      %v4485 = vadd.f32 0.0, %v4484
      %v4486 = vpop.f32.mrf.mxu0
      %4487 = vmatprep.mubr.f32.mxu0 0.0
      %4488 = vmatmul.mubr.f32.gmra.mxu0 %v4263
      %v4489 = vpop.f32.mrf.mxu0
      %v4490 = vadd.f32 0.0, %v4489
      %v4491 = vpop.f32.mrf.mxu0
      %4492 = vdwg.mxu0
      %v4493 = vadd.f32 %v3971, %v4335
      %v4494 = vadd.f32 %v3976, %v4340
      %v4495 = vadd.f32 %v3981, %v4345
      %v4496 = vadd.f32 %v3986, %v4350
      %v4497 = vadd.f32 %v3991, %v4355
      %v4498 = vadd.f32 %v3996, %v4360
      %v4499 = vadd.f32 %v4001, %v4365
      %v4500 = vadd.f32 %v4006, %v4370
      %v4501 = vadd.f32 %v4011, %v4375
      %v4502 = vadd.f32 %v4016, %v4380
      %v4503 = vadd.f32 %v4021, %v4385
      %v4504 = vadd.f32 %v4026, %v4390
      %v4505 = vadd.f32 %v4031, %v4395
      %v4506 = vadd.f32 %v4036, %v4400
      %v4507 = vadd.f32 %v4041, %v4405
      %v4508 = vadd.f32 %v4046, %v4410
      %v4509 = vadd.f32 %v4051, %v4415
      %v4510 = vadd.f32 %v4056, %v4420
      %v4511 = vadd.f32 %v4061, %v4425
      %v4512 = vadd.f32 %v4066, %v4430
      %v4513 = vadd.f32 %v4071, %v4435
      %v4514 = vadd.f32 %v4076, %v4440
      %v4515 = vadd.f32 %v4081, %v4445
      %v4516 = vadd.f32 %v4086, %v4450
      %v4517 = vadd.f32 %v4091, %v4455
      %v4518 = vadd.f32 %v4096, %v4460
      %v4519 = vadd.f32 %v4101, %v4465
      %v4520 = vadd.f32 %v4106, %v4470
      %v4521 = vadd.f32 %v4111, %v4475
      %v4522 = vadd.f32 %v4116, %v4480
      %v4523 = vadd.f32 %v4121, %v4485
      %v4524 = vadd.f32 %v4126, %v4490
      %v4525 = vld [vmem:[%s2 + $0xc] sm:$0xf]
      %v4527 = vsel %vm356, %v3429, 0
      %v4529 = vsel %vm356, %v3349, 0
      %v4532 = vsel %vm421, %v4525, 0
      %4534 = vmatprep.subr.mxu0 0.0
      %4535 = vmatpush1.msra.mxu0 0.0
      %4536 = vmatprep.subr.mxu0 0.0
      %4537 = vmatpush1.msra.mxu0 0.0
      %4538 = vmatprep.subr.mxu0 0.0
      %4539 = vmatpush1.msra.mxu0 0.0
      %4540 = vmatprep.subr.mxu0 0.0
      %4541 = vmatpush1.msra.mxu0 0.0
      %4542 = vmatprep.subr.mxu0 0.0
      %4543 = vmatpush1.msra.mxu0 0.0
      %4544 = vmatprep.subr.mxu0 0.0
      %4545 = vmatpush1.msra.mxu0 0.0
      %4546 = vmatprep.subr.mxu0 0.0
      %4547 = vmatpush1.msra.mxu0 0.0
      %4548 = vmatprep.subr.mxu0 0.0
      %4549 = vmatpush1.msra.mxu0 0.0
      %4550 = vmatprep.subr.mxu0 0.0
      %4551 = vmatpush1.msra.mxu0 0.0
      %4552 = vmatprep.subr.mxu0 0.0
      %4553 = vmatpush1.msra.mxu0 0.0
      %4554 = vmatprep.subr.mxu0 0.0
      %4555 = vmatpush1.msra.mxu0 0.0
      %4556 = vmatprep.subr.mxu0 0.0
      %4557 = vmatpush1.msra.mxu0 0.0
      %4558 = vmatprep.subr.mxu0 0.0
      %4559 = vmatpush1.msra.mxu0 0.0
      %4560 = vmatprep.subr.mxu0 0.0
      %4561 = vmatpush1.msra.mxu0 0.0
      %4562 = vmatprep.subr.mxu0 0.0
      %4563 = vmatpush1.msra.mxu0 0.0
      %4564 = vmatprep.subr.mxu0 0.0
      %4565 = vmatpush1.msra.mxu0 %v4532
      %4566 = vmatprep.subr.mxu0 0.0
      %4567 = vmatpush2.msra.mxu0 0.0
      %4568 = vmatprep.subr.mxu0 0.0
      %4569 = vmatpush2.msra.mxu0 0.0
      %4570 = vmatprep.subr.mxu0 0.0
      %4571 = vmatpush2.msra.mxu0 0.0
      %4572 = vmatprep.subr.mxu0 0.0
      %4573 = vmatpush2.msra.mxu0 0.0
      %4574 = vmatprep.subr.mxu0 0.0
      %4575 = vmatpush2.msra.mxu0 0.0
      %4576 = vmatprep.subr.mxu0 0.0
      %4577 = vmatpush2.msra.mxu0 0.0
      %4578 = vmatprep.subr.mxu0 0.0
      %4579 = vmatpush2.msra.mxu0 0.0
      %4580 = vmatprep.subr.mxu0 0.0
      %4581 = vmatpush2.msra.mxu0 0.0
      %4582 = vmatprep.subr.mxu0 0.0
      %4583 = vmatpush2.msra.mxu0 0.0
      %4584 = vmatprep.subr.mxu0 0.0
      %4585 = vmatpush2.msra.mxu0 0.0
      %4586 = vmatprep.subr.mxu0 0.0
      %4587 = vmatpush2.msra.mxu0 0.0
      %4588 = vmatprep.subr.mxu0 0.0
      %4589 = vmatpush2.msra.mxu0 0.0
      %4590 = vmatprep.subr.mxu0 0.0
      %4591 = vmatpush2.msra.mxu0 0.0
      %4592 = vmatprep.subr.mxu0 0.0
      %4593 = vmatpush2.msra.mxu0 0.0
      %4594 = vmatprep.subr.mxu0 0.0
      %4595 = vmatpush2.msra.mxu0 0.0
      %4596 = vmatprep.subr.mxu0 0.0
      %4597 = vmatpush2.msra.mxu0 0.0
      %4598 = vmatprep.mubr.f32.mxu0 0.0
      %4599 = vmatmul.mubr.f32.gmra.mxu0 %v3845
      %v4600 = vpop.f32.mrf.mxu0
      %v4601 = vadd.f32 0.0, %v4600
      %v4602 = vpop.f32.mrf.mxu0
      %4603 = vmatprep.mubr.f32.mxu0 0.0
      %4604 = vmatmul.mubr.f32.gmra.mxu0 %v3847
      %v4605 = vpop.f32.mrf.mxu0
      %v4606 = vadd.f32 0.0, %v4605
      %v4607 = vpop.f32.mrf.mxu0
      %4608 = vmatprep.mubr.f32.mxu0 0.0
      %4609 = vmatmul.mubr.f32.gmra.mxu0 %v3841
      %v4610 = vpop.f32.mrf.mxu0
      %v4611 = vadd.f32 0.0, %v4610
      %v4612 = vpop.f32.mrf.mxu0
      %4613 = vmatprep.mubr.f32.mxu0 0.0
      %4614 = vmatmul.mubr.f32.gmra.mxu0 %v3843
      %v4615 = vpop.f32.mrf.mxu0
      %v4616 = vadd.f32 0.0, %v4615
      %v4617 = vpop.f32.mrf.mxu0
      %4618 = vmatprep.mubr.f32.mxu0 0.0
      %4619 = vmatmul.mubr.f32.gmra.mxu0 %v3849
      %v4620 = vpop.f32.mrf.mxu0
      %v4621 = vadd.f32 0.0, %v4620
      %v4622 = vpop.f32.mrf.mxu0
      %4623 = vmatprep.mubr.f32.mxu0 0.0
      %4624 = vmatmul.mubr.f32.gmra.mxu0 %v3851
      %v4625 = vpop.f32.mrf.mxu0
      %v4626 = vadd.f32 0.0, %v4625
      %v4627 = vpop.f32.mrf.mxu0
      %4628 = vmatprep.mubr.f32.mxu0 0.0
      %4629 = vmatmul.mubr.f32.gmra.mxu0 %v3853
      %v4630 = vpop.f32.mrf.mxu0
      %v4631 = vadd.f32 0.0, %v4630
      %v4632 = vpop.f32.mrf.mxu0
      %4633 = vmatprep.mubr.f32.mxu0 0.0
      %4634 = vmatmul.mubr.f32.gmra.mxu0 %v3855
      %v4635 = vpop.f32.mrf.mxu0
      %v4636 = vadd.f32 0.0, %v4635
      %v4637 = vpop.f32.mrf.mxu0
      %4638 = vmatprep.mubr.f32.mxu0 0.0
      %4639 = vmatmul.mubr.f32.gmra.mxu0 %v3857
      %v4640 = vpop.f32.mrf.mxu0
      %v4641 = vadd.f32 0.0, %v4640
      %v4642 = vpop.f32.mrf.mxu0
      %4643 = vmatprep.mubr.f32.mxu0 0.0
      %4644 = vmatmul.mubr.f32.gmra.mxu0 %v3859
      %v4645 = vpop.f32.mrf.mxu0
      %v4646 = vadd.f32 0.0, %v4645
      %v4647 = vpop.f32.mrf.mxu0
      %4648 = vmatprep.mubr.f32.mxu0 0.0
      %4649 = vmatmul.mubr.f32.gmra.mxu0 %v3861
      %v4650 = vpop.f32.mrf.mxu0
      %v4651 = vadd.f32 0.0, %v4650
      %v4652 = vpop.f32.mrf.mxu0
      %4653 = vmatprep.mubr.f32.mxu0 0.0
      %4654 = vmatmul.mubr.f32.gmra.mxu0 %v3863
      %v4655 = vpop.f32.mrf.mxu0
      %v4656 = vadd.f32 0.0, %v4655
      %v4657 = vpop.f32.mrf.mxu0
      %4658 = vmatprep.mubr.f32.mxu0 0.0
      %4659 = vmatmul.mubr.f32.gmra.mxu0 %v3865
      %v4660 = vpop.f32.mrf.mxu0
      %v4661 = vadd.f32 0.0, %v4660
      %v4662 = vpop.f32.mrf.mxu0
      %4663 = vmatprep.mubr.f32.mxu0 0.0
      %4664 = vmatmul.mubr.f32.gmra.mxu0 %v3867
      %v4665 = vpop.f32.mrf.mxu0
      %v4666 = vadd.f32 0.0, %v4665
      %v4667 = vpop.f32.mrf.mxu0
      %4668 = vmatprep.mubr.f32.mxu0 0.0
      %4669 = vmatmul.mubr.f32.gmra.mxu0 %v3869
      %v4670 = vpop.f32.mrf.mxu0
      %v4671 = vadd.f32 0.0, %v4670
      %v4672 = vpop.f32.mrf.mxu0
      %4673 = vmatprep.mubr.f32.mxu0 0.0
      %4674 = vmatmul.mubr.f32.gmra.mxu0 %v3871
      %v4675 = vpop.f32.mrf.mxu0
      %v4676 = vadd.f32 0.0, %v4675
      %v4677 = vpop.f32.mrf.mxu0
      %4678 = vmatprep.mubr.f32.mxu0 0.0
      %4679 = vmatmul.mubr.f32.gmra.mxu0 %v3873
      %v4680 = vpop.f32.mrf.mxu0
      %v4681 = vadd.f32 0.0, %v4680
      %v4682 = vpop.f32.mrf.mxu0
      %4683 = vmatprep.mubr.f32.mxu0 0.0
      %4684 = vmatmul.mubr.f32.gmra.mxu0 %v3875
      %v4685 = vpop.f32.mrf.mxu0
      %v4686 = vadd.f32 0.0, %v4685
      %v4687 = vpop.f32.mrf.mxu0
      %4688 = vmatprep.mubr.f32.mxu0 0.0
      %4689 = vmatmul.mubr.f32.gmra.mxu0 %v3877
      %v4690 = vpop.f32.mrf.mxu0
      %v4691 = vadd.f32 0.0, %v4690
      %v4692 = vpop.f32.mrf.mxu0
      %4693 = vmatprep.mubr.f32.mxu0 0.0
      %4694 = vmatmul.mubr.f32.gmra.mxu0 %v3879
      %v4695 = vpop.f32.mrf.mxu0
      %v4696 = vadd.f32 0.0, %v4695
      %v4697 = vpop.f32.mrf.mxu0
      %4698 = vmatprep.mubr.f32.mxu0 0.0
      %4699 = vmatmul.mubr.f32.gmra.mxu0 %v3881
      %v4700 = vpop.f32.mrf.mxu0
      %v4701 = vadd.f32 0.0, %v4700
      %v4702 = vpop.f32.mrf.mxu0
      %4703 = vmatprep.mubr.f32.mxu0 0.0
      %4704 = vmatmul.mubr.f32.gmra.mxu0 %v3883
      %v4705 = vpop.f32.mrf.mxu0
      %v4706 = vadd.f32 0.0, %v4705
      %v4707 = vpop.f32.mrf.mxu0
      %4708 = vmatprep.mubr.f32.mxu0 0.0
      %4709 = vmatmul.mubr.f32.gmra.mxu0 %v3885
      %v4710 = vpop.f32.mrf.mxu0
      %v4711 = vadd.f32 0.0, %v4710
      %v4712 = vpop.f32.mrf.mxu0
      %4713 = vmatprep.mubr.f32.mxu0 0.0
      %4714 = vmatmul.mubr.f32.gmra.mxu0 %v3887
      %v4715 = vpop.f32.mrf.mxu0
      %v4716 = vadd.f32 0.0, %v4715
      %v4717 = vpop.f32.mrf.mxu0
      %4718 = vmatprep.mubr.f32.mxu0 0.0
      %4719 = vmatmul.mubr.f32.gmra.mxu0 %v3889
      %v4720 = vpop.f32.mrf.mxu0
      %v4721 = vadd.f32 0.0, %v4720
      %v4722 = vpop.f32.mrf.mxu0
      %4723 = vmatprep.mubr.f32.mxu0 0.0
      %4724 = vmatmul.mubr.f32.gmra.mxu0 %v3891
      %v4725 = vpop.f32.mrf.mxu0
      %v4726 = vadd.f32 0.0, %v4725
      %v4727 = vpop.f32.mrf.mxu0
      %4728 = vmatprep.mubr.f32.mxu0 0.0
      %4729 = vmatmul.mubr.f32.gmra.mxu0 %v3893
      %v4730 = vpop.f32.mrf.mxu0
      %v4731 = vadd.f32 0.0, %v4730
      %v4732 = vpop.f32.mrf.mxu0
      %4733 = vmatprep.mubr.f32.mxu0 0.0
      %4734 = vmatmul.mubr.f32.gmra.mxu0 %v3895
      %v4735 = vpop.f32.mrf.mxu0
      %v4736 = vadd.f32 0.0, %v4735
      %v4737 = vpop.f32.mrf.mxu0
      %4738 = vmatprep.mubr.f32.mxu0 0.0
      %4739 = vmatmul.mubr.f32.gmra.mxu0 %v3897
      %v4740 = vpop.f32.mrf.mxu0
      %v4741 = vadd.f32 0.0, %v4740
      %v4742 = vpop.f32.mrf.mxu0
      %4743 = vmatprep.mubr.f32.mxu0 0.0
      %4744 = vmatmul.mubr.f32.gmra.mxu0 %v3899
      %v4745 = vpop.f32.mrf.mxu0
      %v4746 = vadd.f32 0.0, %v4745
      %v4747 = vpop.f32.mrf.mxu0
      %4748 = vmatprep.mubr.f32.mxu0 0.0
      %4749 = vmatmul.mubr.f32.gmra.mxu0 %v4527
      %v4750 = vpop.f32.mrf.mxu0
      %v4751 = vadd.f32 0.0, %v4750
      %v4752 = vpop.f32.mrf.mxu0
      %4753 = vmatprep.mubr.f32.mxu0 0.0
      %4754 = vmatmul.mubr.f32.gmra.mxu0 %v4529
      %v4755 = vpop.f32.mrf.mxu0
      %v4756 = vadd.f32 0.0, %v4755
      %v4757 = vpop.f32.mrf.mxu0
      %4758 = vdwg.mxu0
      %v4759 = vadd.f32 %v4493, %v4601
      %v4760 = vadd.f32 %v4494, %v4606
      %v4761 = vadd.f32 %v4495, %v4611
      %v4762 = vadd.f32 %v4496, %v4616
      %v4763 = vadd.f32 %v4497, %v4621
      %v4764 = vadd.f32 %v4498, %v4626
      %v4765 = vadd.f32 %v4499, %v4631
      %v4766 = vadd.f32 %v4500, %v4636
      %v4767 = vadd.f32 %v4501, %v4641
      %v4768 = vadd.f32 %v4502, %v4646
      %v4769 = vadd.f32 %v4503, %v4651
      %v4770 = vadd.f32 %v4504, %v4656
      %v4771 = vadd.f32 %v4505, %v4661
      %v4772 = vadd.f32 %v4506, %v4666
      %v4773 = vadd.f32 %v4507, %v4671
      %v4774 = vadd.f32 %v4508, %v4676
      %v4775 = vadd.f32 %v4509, %v4681
      %v4776 = vadd.f32 %v4510, %v4686
      %v4777 = vadd.f32 %v4511, %v4691
      %v4778 = vadd.f32 %v4512, %v4696
      %v4779 = vadd.f32 %v4513, %v4701
      %v4780 = vadd.f32 %v4514, %v4706
      %v4781 = vadd.f32 %v4515, %v4711
      %v4782 = vadd.f32 %v4516, %v4716
      %v4783 = vadd.f32 %v4517, %v4721
      %v4784 = vadd.f32 %v4518, %v4726
      %v4785 = vadd.f32 %v4519, %v4731
      %v4786 = vadd.f32 %v4520, %v4736
      %v4787 = vadd.f32 %v4521, %v4741
      %v4788 = vadd.f32 %v4522, %v4746
      %v4789 = vadd.f32 %v4523, %v4751
      %v4790 = vadd.f32 %v4524, %v4756
      %v4792 = vrot.slane %v3429, 1
      %v4793 = vrot.slane %v3349, 1
      %v4794 = vsel %vm274, %v4792, %v4793
      %v4795 = vrot.slane %v3445, 1
      %v4796 = vsel %vm274, %v4793, %v4795
      %v4797 = vld [vmem:[%s2 + $0x10] sm:$0xf]
      %v4798 = vsel %vm356, %v4794, 0
      %v4800 = vsel %vm356, %v4796, 0
      %v4803 = vsel %vm421, %v4797, 0
      %4805 = vmatprep.subr.mxu0 0.0
      %4806 = vmatpush1.msra.mxu0 0.0
      %4807 = vmatprep.subr.mxu0 0.0
      %4808 = vmatpush1.msra.mxu0 0.0
      %4809 = vmatprep.subr.mxu0 0.0
      %4810 = vmatpush1.msra.mxu0 0.0
      %4811 = vmatprep.subr.mxu0 0.0
      %4812 = vmatpush1.msra.mxu0 0.0
      %4813 = vmatprep.subr.mxu0 0.0
      %4814 = vmatpush1.msra.mxu0 0.0
      %4815 = vmatprep.subr.mxu0 0.0
      %4816 = vmatpush1.msra.mxu0 0.0
      %4817 = vmatprep.subr.mxu0 0.0
      %4818 = vmatpush1.msra.mxu0 0.0
      %4819 = vmatprep.subr.mxu0 0.0
      %4820 = vmatpush1.msra.mxu0 0.0
      %4821 = vmatprep.subr.mxu0 0.0
      %4822 = vmatpush1.msra.mxu0 0.0
      %4823 = vmatprep.subr.mxu0 0.0
      %4824 = vmatpush1.msra.mxu0 0.0
      %4825 = vmatprep.subr.mxu0 0.0
      %4826 = vmatpush1.msra.mxu0 0.0
      %4827 = vmatprep.subr.mxu0 0.0
      %4828 = vmatpush1.msra.mxu0 0.0
      %4829 = vmatprep.subr.mxu0 0.0
      %4830 = vmatpush1.msra.mxu0 0.0
      %4831 = vmatprep.subr.mxu0 0.0
      %4832 = vmatpush1.msra.mxu0 0.0
      %4833 = vmatprep.subr.mxu0 0.0
      %4834 = vmatpush1.msra.mxu0 0.0
      %4835 = vmatprep.subr.mxu0 0.0
      %4836 = vmatpush1.msra.mxu0 %v4803
      %4837 = vmatprep.subr.mxu0 0.0
      %4838 = vmatpush2.msra.mxu0 0.0
      %4839 = vmatprep.subr.mxu0 0.0
      %4840 = vmatpush2.msra.mxu0 0.0
      %4841 = vmatprep.subr.mxu0 0.0
      %4842 = vmatpush2.msra.mxu0 0.0
      %4843 = vmatprep.subr.mxu0 0.0
      %4844 = vmatpush2.msra.mxu0 0.0
      %4845 = vmatprep.subr.mxu0 0.0
      %4846 = vmatpush2.msra.mxu0 0.0
      %4847 = vmatprep.subr.mxu0 0.0
      %4848 = vmatpush2.msra.mxu0 0.0
      %4849 = vmatprep.subr.mxu0 0.0
      %4850 = vmatpush2.msra.mxu0 0.0
      %4851 = vmatprep.subr.mxu0 0.0
      %4852 = vmatpush2.msra.mxu0 0.0
      %4853 = vmatprep.subr.mxu0 0.0
      %4854 = vmatpush2.msra.mxu0 0.0
      %4855 = vmatprep.subr.mxu0 0.0
      %4856 = vmatpush2.msra.mxu0 0.0
      %4857 = vmatprep.subr.mxu0 0.0
      %4858 = vmatpush2.msra.mxu0 0.0
      %4859 = vmatprep.subr.mxu0 0.0
      %4860 = vmatpush2.msra.mxu0 0.0
      %4861 = vmatprep.subr.mxu0 0.0
      %4862 = vmatpush2.msra.mxu0 0.0
      %4863 = vmatprep.subr.mxu0 0.0
      %4864 = vmatpush2.msra.mxu0 0.0
      %4865 = vmatprep.subr.mxu0 0.0
      %4866 = vmatpush2.msra.mxu0 0.0
      %4867 = vmatprep.subr.mxu0 0.0
      %4868 = vmatpush2.msra.mxu0 0.0
      %4869 = vmatprep.mubr.f32.mxu0 0.0
      %4870 = vmatmul.mubr.f32.gmra.mxu0 %v3557
      %v4871 = vpop.f32.mrf.mxu0
      %v4872 = vadd.f32 0.0, %v4871
      %v4873 = vpop.f32.mrf.mxu0
      %4874 = vmatprep.mubr.f32.mxu0 0.0
      %4875 = vmatmul.mubr.f32.gmra.mxu0 %v3559
      %v4876 = vpop.f32.mrf.mxu0
      %v4877 = vadd.f32 0.0, %v4876
      %v4878 = vpop.f32.mrf.mxu0
      %4879 = vmatprep.mubr.f32.mxu0 0.0
      %4880 = vmatmul.mubr.f32.gmra.mxu0 %v3553
      %v4881 = vpop.f32.mrf.mxu0
      %v4882 = vadd.f32 0.0, %v4881
      %v4883 = vpop.f32.mrf.mxu0
      %4884 = vmatprep.mubr.f32.mxu0 0.0
      %4885 = vmatmul.mubr.f32.gmra.mxu0 %v3555
      %v4886 = vpop.f32.mrf.mxu0
      %v4887 = vadd.f32 0.0, %v4886
      %v4888 = vpop.f32.mrf.mxu0
      %4889 = vmatprep.mubr.f32.mxu0 0.0
      %4890 = vmatmul.mubr.f32.gmra.mxu0 %v3561
      %v4891 = vpop.f32.mrf.mxu0
      %v4892 = vadd.f32 0.0, %v4891
      %v4893 = vpop.f32.mrf.mxu0
      %4894 = vmatprep.mubr.f32.mxu0 0.0
      %4895 = vmatmul.mubr.f32.gmra.mxu0 %v3563
      %v4896 = vpop.f32.mrf.mxu0
      %v4897 = vadd.f32 0.0, %v4896
      %v4898 = vpop.f32.mrf.mxu0
      %4899 = vmatprep.mubr.f32.mxu0 0.0
      %4900 = vmatmul.mubr.f32.gmra.mxu0 %v3565
      %v4901 = vpop.f32.mrf.mxu0
      %v4902 = vadd.f32 0.0, %v4901
      %v4903 = vpop.f32.mrf.mxu0
      %4904 = vmatprep.mubr.f32.mxu0 0.0
      %4905 = vmatmul.mubr.f32.gmra.mxu0 %v3567
      %v4906 = vpop.f32.mrf.mxu0
      %v4907 = vadd.f32 0.0, %v4906
      %v4908 = vpop.f32.mrf.mxu0
      %4909 = vmatprep.mubr.f32.mxu0 0.0
      %4910 = vmatmul.mubr.f32.gmra.mxu0 %v3569
      %v4911 = vpop.f32.mrf.mxu0
      %v4912 = vadd.f32 0.0, %v4911
      %v4913 = vpop.f32.mrf.mxu0
      %4914 = vmatprep.mubr.f32.mxu0 0.0
      %4915 = vmatmul.mubr.f32.gmra.mxu0 %v3571
      %v4916 = vpop.f32.mrf.mxu0
      %v4917 = vadd.f32 0.0, %v4916
      %v4918 = vpop.f32.mrf.mxu0
      %4919 = vmatprep.mubr.f32.mxu0 0.0
      %4920 = vmatmul.mubr.f32.gmra.mxu0 %v3573
      %v4921 = vpop.f32.mrf.mxu0
      %v4922 = vadd.f32 0.0, %v4921
      %v4923 = vpop.f32.mrf.mxu0
      %4924 = vmatprep.mubr.f32.mxu0 0.0
      %4925 = vmatmul.mubr.f32.gmra.mxu0 %v3575
      %v4926 = vpop.f32.mrf.mxu0
      %v4927 = vadd.f32 0.0, %v4926
      %v4928 = vpop.f32.mrf.mxu0
      %4929 = vmatprep.mubr.f32.mxu0 0.0
      %4930 = vmatmul.mubr.f32.gmra.mxu0 %v3577
      %v4931 = vpop.f32.mrf.mxu0
      %v4932 = vadd.f32 0.0, %v4931
      %v4933 = vpop.f32.mrf.mxu0
      %4934 = vmatprep.mubr.f32.mxu0 0.0
      %4935 = vmatmul.mubr.f32.gmra.mxu0 %v3579
      %v4936 = vpop.f32.mrf.mxu0
      %v4937 = vadd.f32 0.0, %v4936
      %v4938 = vpop.f32.mrf.mxu0
      %4939 = vmatprep.mubr.f32.mxu0 0.0
      %4940 = vmatmul.mubr.f32.gmra.mxu0 %v3581
      %v4941 = vpop.f32.mrf.mxu0
      %v4942 = vadd.f32 0.0, %v4941
      %v4943 = vpop.f32.mrf.mxu0
      %4944 = vmatprep.mubr.f32.mxu0 0.0
      %4945 = vmatmul.mubr.f32.gmra.mxu0 %v3583
      %v4946 = vpop.f32.mrf.mxu0
      %v4947 = vadd.f32 0.0, %v4946
      %v4948 = vpop.f32.mrf.mxu0
      %4949 = vmatprep.mubr.f32.mxu0 0.0
      %4950 = vmatmul.mubr.f32.gmra.mxu0 %v3585
      %v4951 = vpop.f32.mrf.mxu0
      %v4952 = vadd.f32 0.0, %v4951
      %v4953 = vpop.f32.mrf.mxu0
      %4954 = vmatprep.mubr.f32.mxu0 0.0
      %4955 = vmatmul.mubr.f32.gmra.mxu0 %v3587
      %v4956 = vpop.f32.mrf.mxu0
      %v4957 = vadd.f32 0.0, %v4956
      %v4958 = vpop.f32.mrf.mxu0
      %4959 = vmatprep.mubr.f32.mxu0 0.0
      %4960 = vmatmul.mubr.f32.gmra.mxu0 %v3589
      %v4961 = vpop.f32.mrf.mxu0
      %v4962 = vadd.f32 0.0, %v4961
      %v4963 = vpop.f32.mrf.mxu0
      %4964 = vmatprep.mubr.f32.mxu0 0.0
      %4965 = vmatmul.mubr.f32.gmra.mxu0 %v3591
      %v4966 = vpop.f32.mrf.mxu0
      %v4967 = vadd.f32 0.0, %v4966
      %v4968 = vpop.f32.mrf.mxu0
      %4969 = vmatprep.mubr.f32.mxu0 0.0
      %4970 = vmatmul.mubr.f32.gmra.mxu0 %v3593
      %v4971 = vpop.f32.mrf.mxu0
      %v4972 = vadd.f32 0.0, %v4971
      %v4973 = vpop.f32.mrf.mxu0
      %4974 = vmatprep.mubr.f32.mxu0 0.0
      %4975 = vmatmul.mubr.f32.gmra.mxu0 %v3595
      %v4976 = vpop.f32.mrf.mxu0
      %v4977 = vadd.f32 0.0, %v4976
      %v4978 = vpop.f32.mrf.mxu0
      %4979 = vmatprep.mubr.f32.mxu0 0.0
      %4980 = vmatmul.mubr.f32.gmra.mxu0 %v3597
      %v4981 = vpop.f32.mrf.mxu0
      %v4982 = vadd.f32 0.0, %v4981
      %v4983 = vpop.f32.mrf.mxu0
      %4984 = vmatprep.mubr.f32.mxu0 0.0
      %4985 = vmatmul.mubr.f32.gmra.mxu0 %v3599
      %v4986 = vpop.f32.mrf.mxu0
      %v4987 = vadd.f32 0.0, %v4986
      %v4988 = vpop.f32.mrf.mxu0
      %4989 = vmatprep.mubr.f32.mxu0 0.0
      %4990 = vmatmul.mubr.f32.gmra.mxu0 %v3601
      %v4991 = vpop.f32.mrf.mxu0
      %v4992 = vadd.f32 0.0, %v4991
      %v4993 = vpop.f32.mrf.mxu0
      %4994 = vmatprep.mubr.f32.mxu0 0.0
      %4995 = vmatmul.mubr.f32.gmra.mxu0 %v3603
      %v4996 = vpop.f32.mrf.mxu0
      %v4997 = vadd.f32 0.0, %v4996
      %v4998 = vpop.f32.mrf.mxu0
      %4999 = vmatprep.mubr.f32.mxu0 0.0
      %5000 = vmatmul.mubr.f32.gmra.mxu0 %v3605
      %v5001 = vpop.f32.mrf.mxu0
      %v5002 = vadd.f32 0.0, %v5001
      %v5003 = vpop.f32.mrf.mxu0
      %5004 = vmatprep.mubr.f32.mxu0 0.0
      %5005 = vmatmul.mubr.f32.gmra.mxu0 %v3607
      %v5006 = vpop.f32.mrf.mxu0
      %v5007 = vadd.f32 0.0, %v5006
      %v5008 = vpop.f32.mrf.mxu0
      %5009 = vmatprep.mubr.f32.mxu0 0.0
      %5010 = vmatmul.mubr.f32.gmra.mxu0 %v3609
      %v5011 = vpop.f32.mrf.mxu0
      %v5012 = vadd.f32 0.0, %v5011
      %v5013 = vpop.f32.mrf.mxu0
      %5014 = vmatprep.mubr.f32.mxu0 0.0
      %5015 = vmatmul.mubr.f32.gmra.mxu0 %v3611
      %v5016 = vpop.f32.mrf.mxu0
      %v5017 = vadd.f32 0.0, %v5016
      %v5018 = vpop.f32.mrf.mxu0
      %5019 = vmatprep.mubr.f32.mxu0 0.0
      %5020 = vmatmul.mubr.f32.gmra.mxu0 %v4798
      %v5021 = vpop.f32.mrf.mxu0
      %v5022 = vadd.f32 0.0, %v5021
      %v5023 = vpop.f32.mrf.mxu0
      %5024 = vmatprep.mubr.f32.mxu0 0.0
      %5025 = vmatmul.mubr.f32.gmra.mxu0 %v4800
      %v5026 = vpop.f32.mrf.mxu0
      %v5027 = vadd.f32 0.0, %v5026
      %v5028 = vpop.f32.mrf.mxu0
      %5029 = vdwg.mxu0
      %v5030 = vadd.f32 %v4759, %v4872
      %v5031 = vadd.f32 %v4760, %v4877
      %v5032 = vadd.f32 %v4761, %v4882
      %v5033 = vadd.f32 %v4762, %v4887
      %v5034 = vadd.f32 %v4763, %v4892
      %v5035 = vadd.f32 %v4764, %v4897
      %v5036 = vadd.f32 %v4765, %v4902
      %v5037 = vadd.f32 %v4766, %v4907
      %v5038 = vadd.f32 %v4767, %v4912
      %v5039 = vadd.f32 %v4768, %v4917
      %v5040 = vadd.f32 %v4769, %v4922
      %v5041 = vadd.f32 %v4770, %v4927
      %v5042 = vadd.f32 %v4771, %v4932
      %v5043 = vadd.f32 %v4772, %v4937
      %v5044 = vadd.f32 %v4773, %v4942
      %v5045 = vadd.f32 %v4774, %v4947
      %v5046 = vadd.f32 %v4775, %v4952
      %v5047 = vadd.f32 %v4776, %v4957
      %v5048 = vadd.f32 %v4777, %v4962
      %v5049 = vadd.f32 %v4778, %v4967
      %v5050 = vadd.f32 %v4779, %v4972
      %v5051 = vadd.f32 %v4780, %v4977
      %v5052 = vadd.f32 %v4781, %v4982
      %v5053 = vadd.f32 %v4782, %v4987
      %v5054 = vadd.f32 %v4783, %v4992
      %v5055 = vadd.f32 %v4784, %v4997
      %v5056 = vadd.f32 %v4785, %v5002
      %v5057 = vadd.f32 %v4786, %v5007
      %v5058 = vadd.f32 %v4787, %v5012
      %v5059 = vadd.f32 %v4788, %v5017
      %v5060 = vadd.f32 %v4789, %v5022
      %v5061 = vadd.f32 %v4790, %v5027
      %v5062 = vrot.slane %v3429, 2
      %v5063 = vrot.slane %v3349, 2
      %v5064 = vsel %vm942, %v5062, %v5063
      %v5065 = vrot.slane %v3445, 2
      %v5066 = vsel %vm942, %v5063, %v5065
      %v5067 = vld [vmem:[%s2 + $0x14] sm:$0xf]
      %v5068 = vsel %vm356, %v5064, 0
      %v5070 = vsel %vm356, %v5066, 0
      %v5073 = vsel %vm421, %v5067, 0
      %5075 = vmatprep.subr.mxu0 0.0
      %5076 = vmatpush1.msra.mxu0 0.0
      %5077 = vmatprep.subr.mxu0 0.0
      %5078 = vmatpush1.msra.mxu0 0.0
      %5079 = vmatprep.subr.mxu0 0.0
      %5080 = vmatpush1.msra.mxu0 0.0
      %5081 = vmatprep.subr.mxu0 0.0
      %5082 = vmatpush1.msra.mxu0 0.0
      %5083 = vmatprep.subr.mxu0 0.0
      %5084 = vmatpush1.msra.mxu0 0.0
      %5085 = vmatprep.subr.mxu0 0.0
      %5086 = vmatpush1.msra.mxu0 0.0
      %5087 = vmatprep.subr.mxu0 0.0
      %5088 = vmatpush1.msra.mxu0 0.0
      %5089 = vmatprep.subr.mxu0 0.0
      %5090 = vmatpush1.msra.mxu0 0.0
      %5091 = vmatprep.subr.mxu0 0.0
      %5092 = vmatpush1.msra.mxu0 0.0
      %5093 = vmatprep.subr.mxu0 0.0
      %5094 = vmatpush1.msra.mxu0 0.0
      %5095 = vmatprep.subr.mxu0 0.0
      %5096 = vmatpush1.msra.mxu0 0.0
      %5097 = vmatprep.subr.mxu0 0.0
      %5098 = vmatpush1.msra.mxu0 0.0
      %5099 = vmatprep.subr.mxu0 0.0
      %5100 = vmatpush1.msra.mxu0 0.0
      %5101 = vmatprep.subr.mxu0 0.0
      %5102 = vmatpush1.msra.mxu0 0.0
      %5103 = vmatprep.subr.mxu0 0.0
      %5104 = vmatpush1.msra.mxu0 0.0
      %5105 = vmatprep.subr.mxu0 0.0
      %5106 = vmatpush1.msra.mxu0 %v5073
      %5107 = vmatprep.subr.mxu0 0.0
      %5108 = vmatpush2.msra.mxu0 0.0
      %5109 = vmatprep.subr.mxu0 0.0
      %5110 = vmatpush2.msra.mxu0 0.0
      %5111 = vmatprep.subr.mxu0 0.0
      %5112 = vmatpush2.msra.mxu0 0.0
      %5113 = vmatprep.subr.mxu0 0.0
      %5114 = vmatpush2.msra.mxu0 0.0
      %5115 = vmatprep.subr.mxu0 0.0
      %5116 = vmatpush2.msra.mxu0 0.0
      %5117 = vmatprep.subr.mxu0 0.0
      %5118 = vmatpush2.msra.mxu0 0.0
      %5119 = vmatprep.subr.mxu0 0.0
      %5120 = vmatpush2.msra.mxu0 0.0
      %5121 = vmatprep.subr.mxu0 0.0
      %5122 = vmatpush2.msra.mxu0 0.0
      %5123 = vmatprep.subr.mxu0 0.0
      %5124 = vmatpush2.msra.mxu0 0.0
      %5125 = vmatprep.subr.mxu0 0.0
      %5126 = vmatpush2.msra.mxu0 0.0
      %5127 = vmatprep.subr.mxu0 0.0
      %5128 = vmatpush2.msra.mxu0 0.0
      %5129 = vmatprep.subr.mxu0 0.0
      %5130 = vmatpush2.msra.mxu0 0.0
      %5131 = vmatprep.subr.mxu0 0.0
      %5132 = vmatpush2.msra.mxu0 0.0
      %5133 = vmatprep.subr.mxu0 0.0
      %5134 = vmatpush2.msra.mxu0 0.0
      %5135 = vmatprep.subr.mxu0 0.0
      %5136 = vmatpush2.msra.mxu0 0.0
      %5137 = vmatprep.subr.mxu0 0.0
      %5138 = vmatpush2.msra.mxu0 0.0
      %5139 = vmatprep.mubr.f32.mxu0 0.0
      %5140 = vmatmul.mubr.f32.gmra.mxu0 %v4209
      %v5141 = vpop.f32.mrf.mxu0
      %v5142 = vadd.f32 0.0, %v5141
      %v5143 = vpop.f32.mrf.mxu0
      %5144 = vmatprep.mubr.f32.mxu0 0.0
      %5145 = vmatmul.mubr.f32.gmra.mxu0 %v4211
      %v5146 = vpop.f32.mrf.mxu0
      %v5147 = vadd.f32 0.0, %v5146
      %v5148 = vpop.f32.mrf.mxu0
      %5149 = vmatprep.mubr.f32.mxu0 0.0
      %5150 = vmatmul.mubr.f32.gmra.mxu0 %v4205
      %v5151 = vpop.f32.mrf.mxu0
      %v5152 = vadd.f32 0.0, %v5151
      %v5153 = vpop.f32.mrf.mxu0
      %5154 = vmatprep.mubr.f32.mxu0 0.0
      %5155 = vmatmul.mubr.f32.gmra.mxu0 %v4207
      %v5156 = vpop.f32.mrf.mxu0
      %v5157 = vadd.f32 0.0, %v5156
      %v5158 = vpop.f32.mrf.mxu0
      %5159 = vmatprep.mubr.f32.mxu0 0.0
      %5160 = vmatmul.mubr.f32.gmra.mxu0 %v4213
      %v5161 = vpop.f32.mrf.mxu0
      %v5162 = vadd.f32 0.0, %v5161
      %v5163 = vpop.f32.mrf.mxu0
      %5164 = vmatprep.mubr.f32.mxu0 0.0
      %5165 = vmatmul.mubr.f32.gmra.mxu0 %v4215
      %v5166 = vpop.f32.mrf.mxu0
      %v5167 = vadd.f32 0.0, %v5166
      %v5168 = vpop.f32.mrf.mxu0
      %5169 = vmatprep.mubr.f32.mxu0 0.0
      %5170 = vmatmul.mubr.f32.gmra.mxu0 %v4217
      %v5171 = vpop.f32.mrf.mxu0
      %v5172 = vadd.f32 0.0, %v5171
      %v5173 = vpop.f32.mrf.mxu0
      %5174 = vmatprep.mubr.f32.mxu0 0.0
      %5175 = vmatmul.mubr.f32.gmra.mxu0 %v4219
      %v5176 = vpop.f32.mrf.mxu0
      %v5177 = vadd.f32 0.0, %v5176
      %v5178 = vpop.f32.mrf.mxu0
      %5179 = vmatprep.mubr.f32.mxu0 0.0
      %5180 = vmatmul.mubr.f32.gmra.mxu0 %v4221
      %v5181 = vpop.f32.mrf.mxu0
      %v5182 = vadd.f32 0.0, %v5181
      %v5183 = vpop.f32.mrf.mxu0
      %5184 = vmatprep.mubr.f32.mxu0 0.0
      %5185 = vmatmul.mubr.f32.gmra.mxu0 %v4223
      %v5186 = vpop.f32.mrf.mxu0
      %v5187 = vadd.f32 0.0, %v5186
      %v5188 = vpop.f32.mrf.mxu0
      %5189 = vmatprep.mubr.f32.mxu0 0.0
      %5190 = vmatmul.mubr.f32.gmra.mxu0 %v4225
      %v5191 = vpop.f32.mrf.mxu0
      %v5192 = vadd.f32 0.0, %v5191
      %v5193 = vpop.f32.mrf.mxu0
      %5194 = vmatprep.mubr.f32.mxu0 0.0
      %5195 = vmatmul.mubr.f32.gmra.mxu0 %v4227
      %v5196 = vpop.f32.mrf.mxu0
      %v5197 = vadd.f32 0.0, %v5196
      %v5198 = vpop.f32.mrf.mxu0
      %5199 = vmatprep.mubr.f32.mxu0 0.0
      %5200 = vmatmul.mubr.f32.gmra.mxu0 %v4229
      %v5201 = vpop.f32.mrf.mxu0
      %v5202 = vadd.f32 0.0, %v5201
      %v5203 = vpop.f32.mrf.mxu0
      %5204 = vmatprep.mubr.f32.mxu0 0.0
      %5205 = vmatmul.mubr.f32.gmra.mxu0 %v4231
      %v5206 = vpop.f32.mrf.mxu0
      %v5207 = vadd.f32 0.0, %v5206
      %v5208 = vpop.f32.mrf.mxu0
      %5209 = vmatprep.mubr.f32.mxu0 0.0
      %5210 = vmatmul.mubr.f32.gmra.mxu0 %v4233
      %v5211 = vpop.f32.mrf.mxu0
      %v5212 = vadd.f32 0.0, %v5211
      %v5213 = vpop.f32.mrf.mxu0
      %5214 = vmatprep.mubr.f32.mxu0 0.0
      %5215 = vmatmul.mubr.f32.gmra.mxu0 %v4235
      %v5216 = vpop.f32.mrf.mxu0
      %v5217 = vadd.f32 0.0, %v5216
      %v5218 = vpop.f32.mrf.mxu0
      %5219 = vmatprep.mubr.f32.mxu0 0.0
      %5220 = vmatmul.mubr.f32.gmra.mxu0 %v4237
      %v5221 = vpop.f32.mrf.mxu0
      %v5222 = vadd.f32 0.0, %v5221
      %v5223 = vpop.f32.mrf.mxu0
      %5224 = vmatprep.mubr.f32.mxu0 0.0
      %5225 = vmatmul.mubr.f32.gmra.mxu0 %v4239
      %v5226 = vpop.f32.mrf.mxu0
      %v5227 = vadd.f32 0.0, %v5226
      %v5228 = vpop.f32.mrf.mxu0
      %5229 = vmatprep.mubr.f32.mxu0 0.0
      %5230 = vmatmul.mubr.f32.gmra.mxu0 %v4241
      %v5231 = vpop.f32.mrf.mxu0
      %v5232 = vadd.f32 0.0, %v5231
      %v5233 = vpop.f32.mrf.mxu0
      %5234 = vmatprep.mubr.f32.mxu0 0.0
      %5235 = vmatmul.mubr.f32.gmra.mxu0 %v4243
      %v5236 = vpop.f32.mrf.mxu0
      %v5237 = vadd.f32 0.0, %v5236
      %v5238 = vpop.f32.mrf.mxu0
      %5239 = vmatprep.mubr.f32.mxu0 0.0
      %5240 = vmatmul.mubr.f32.gmra.mxu0 %v4245
      %v5241 = vpop.f32.mrf.mxu0
      %v5242 = vadd.f32 0.0, %v5241
      %v5243 = vpop.f32.mrf.mxu0
      %5244 = vmatprep.mubr.f32.mxu0 0.0
      %5245 = vmatmul.mubr.f32.gmra.mxu0 %v4247
      %v5246 = vpop.f32.mrf.mxu0
      %v5247 = vadd.f32 0.0, %v5246
      %v5248 = vpop.f32.mrf.mxu0
      %5249 = vmatprep.mubr.f32.mxu0 0.0
      %5250 = vmatmul.mubr.f32.gmra.mxu0 %v4249
      %v5251 = vpop.f32.mrf.mxu0
      %v5252 = vadd.f32 0.0, %v5251
      %v5253 = vpop.f32.mrf.mxu0
      %5254 = vmatprep.mubr.f32.mxu0 0.0
      %5255 = vmatmul.mubr.f32.gmra.mxu0 %v4251
      %v5256 = vpop.f32.mrf.mxu0
      %v5257 = vadd.f32 0.0, %v5256
      %v5258 = vpop.f32.mrf.mxu0
      %5259 = vmatprep.mubr.f32.mxu0 0.0
      %5260 = vmatmul.mubr.f32.gmra.mxu0 %v4253
      %v5261 = vpop.f32.mrf.mxu0
      %v5262 = vadd.f32 0.0, %v5261
      %v5263 = vpop.f32.mrf.mxu0
      %5264 = vmatprep.mubr.f32.mxu0 0.0
      %5265 = vmatmul.mubr.f32.gmra.mxu0 %v4255
      %v5266 = vpop.f32.mrf.mxu0
      %v5267 = vadd.f32 0.0, %v5266
      %v5268 = vpop.f32.mrf.mxu0
      %5269 = vmatprep.mubr.f32.mxu0 0.0
      %5270 = vmatmul.mubr.f32.gmra.mxu0 %v4257
      %v5271 = vpop.f32.mrf.mxu0
      %v5272 = vadd.f32 0.0, %v5271
      %v5273 = vpop.f32.mrf.mxu0
      %5274 = vmatprep.mubr.f32.mxu0 0.0
      %5275 = vmatmul.mubr.f32.gmra.mxu0 %v4259
      %v5276 = vpop.f32.mrf.mxu0
      %v5277 = vadd.f32 0.0, %v5276
      %v5278 = vpop.f32.mrf.mxu0
      %5279 = vmatprep.mubr.f32.mxu0 0.0
      %5280 = vmatmul.mubr.f32.gmra.mxu0 %v4261
      %v5281 = vpop.f32.mrf.mxu0
      %v5282 = vadd.f32 0.0, %v5281
      %v5283 = vpop.f32.mrf.mxu0
      %5284 = vmatprep.mubr.f32.mxu0 0.0
      %5285 = vmatmul.mubr.f32.gmra.mxu0 %v4263
      %v5286 = vpop.f32.mrf.mxu0
      %v5287 = vadd.f32 0.0, %v5286
      %v5288 = vpop.f32.mrf.mxu0
      %5289 = vmatprep.mubr.f32.mxu0 0.0
      %5290 = vmatmul.mubr.f32.gmra.mxu0 %v5068
      %v5291 = vpop.f32.mrf.mxu0
      %v5292 = vadd.f32 0.0, %v5291
      %v5293 = vpop.f32.mrf.mxu0
      %5294 = vmatprep.mubr.f32.mxu0 0.0
      %5295 = vmatmul.mubr.f32.gmra.mxu0 %v5070
      %v5296 = vpop.f32.mrf.mxu0
      %v5297 = vadd.f32 0.0, %v5296
      %v5298 = vpop.f32.mrf.mxu0
      %5299 = vdwg.mxu0
      %v5300 = vadd.f32 %v5030, %v5142
      %v5301 = vadd.f32 %v5031, %v5147
      %v5302 = vadd.f32 %v5032, %v5152
      %v5303 = vadd.f32 %v5033, %v5157
      %v5304 = vadd.f32 %v5034, %v5162
      %v5305 = vadd.f32 %v5035, %v5167
      %v5306 = vadd.f32 %v5036, %v5172
      %v5307 = vadd.f32 %v5037, %v5177
      %v5308 = vadd.f32 %v5038, %v5182
      %v5309 = vadd.f32 %v5039, %v5187
      %v5310 = vadd.f32 %v5040, %v5192
      %v5311 = vadd.f32 %v5041, %v5197
      %v5312 = vadd.f32 %v5042, %v5202
      %v5313 = vadd.f32 %v5043, %v5207
      %v5314 = vadd.f32 %v5044, %v5212
      %v5315 = vadd.f32 %v5045, %v5217
      %v5316 = vadd.f32 %v5046, %v5222
      %v5317 = vadd.f32 %v5047, %v5227
      %v5318 = vadd.f32 %v5048, %v5232
      %v5319 = vadd.f32 %v5049, %v5237
      %v5320 = vadd.f32 %v5050, %v5242
      %v5321 = vadd.f32 %v5051, %v5247
      %v5322 = vadd.f32 %v5052, %v5252
      %v5323 = vadd.f32 %v5053, %v5257
      %v5324 = vadd.f32 %v5054, %v5262
      %v5325 = vadd.f32 %v5055, %v5267
      %v5326 = vadd.f32 %v5056, %v5272
      %v5327 = vadd.f32 %v5057, %v5277
      %v5328 = vadd.f32 %v5058, %v5282
      %v5329 = vadd.f32 %v5059, %v5287
      %v5330 = vadd.f32 %v5060, %v5292
      %v5331 = vadd.f32 %v5061, %v5297
      %v5332 = vld [vmem:[%s2 + $0x18] sm:$0xf]
      %v5334 = vsel %vm421, %v5332, 0
      %5336 = vmatprep.subr.mxu0 0.0
      %5337 = vmatpush1.msra.mxu0 0.0
      %5338 = vmatprep.subr.mxu0 0.0
      %5339 = vmatpush1.msra.mxu0 0.0
      %5340 = vmatprep.subr.mxu0 0.0
      %5341 = vmatpush1.msra.mxu0 0.0
      %5342 = vmatprep.subr.mxu0 0.0
      %5343 = vmatpush1.msra.mxu0 0.0
      %5344 = vmatprep.subr.mxu0 0.0
      %5345 = vmatpush1.msra.mxu0 0.0
      %5346 = vmatprep.subr.mxu0 0.0
      %5347 = vmatpush1.msra.mxu0 0.0
      %5348 = vmatprep.subr.mxu0 0.0
      %5349 = vmatpush1.msra.mxu0 0.0
      %5350 = vmatprep.subr.mxu0 0.0
      %5351 = vmatpush1.msra.mxu0 0.0
      %5352 = vmatprep.subr.mxu0 0.0
      %5353 = vmatpush1.msra.mxu0 0.0
      %5354 = vmatprep.subr.mxu0 0.0
      %5355 = vmatpush1.msra.mxu0 0.0
      %5356 = vmatprep.subr.mxu0 0.0
      %5357 = vmatpush1.msra.mxu0 0.0
      %5358 = vmatprep.subr.mxu0 0.0
      %5359 = vmatpush1.msra.mxu0 0.0
      %5360 = vmatprep.subr.mxu0 0.0
      %5361 = vmatpush1.msra.mxu0 0.0
      %5362 = vmatprep.subr.mxu0 0.0
      %5363 = vmatpush1.msra.mxu0 0.0
      %5364 = vmatprep.subr.mxu0 0.0
      %5365 = vmatpush1.msra.mxu0 0.0
      %5366 = vmatprep.subr.mxu0 0.0
      %5367 = vmatpush1.msra.mxu0 %v5334
      %5368 = vmatprep.subr.mxu0 0.0
      %5369 = vmatpush2.msra.mxu0 0.0
      %5370 = vmatprep.subr.mxu0 0.0
      %5371 = vmatpush2.msra.mxu0 0.0
      %5372 = vmatprep.subr.mxu0 0.0
      %5373 = vmatpush2.msra.mxu0 0.0
      %5374 = vmatprep.subr.mxu0 0.0
      %5375 = vmatpush2.msra.mxu0 0.0
      %5376 = vmatprep.subr.mxu0 0.0
      %5377 = vmatpush2.msra.mxu0 0.0
      %5378 = vmatprep.subr.mxu0 0.0
      %5379 = vmatpush2.msra.mxu0 0.0
      %5380 = vmatprep.subr.mxu0 0.0
      %5381 = vmatpush2.msra.mxu0 0.0
      %5382 = vmatprep.subr.mxu0 0.0
      %5383 = vmatpush2.msra.mxu0 0.0
      %5384 = vmatprep.subr.mxu0 0.0
      %5385 = vmatpush2.msra.mxu0 0.0
      %5386 = vmatprep.subr.mxu0 0.0
      %5387 = vmatpush2.msra.mxu0 0.0
      %5388 = vmatprep.subr.mxu0 0.0
      %5389 = vmatpush2.msra.mxu0 0.0
      %5390 = vmatprep.subr.mxu0 0.0
      %5391 = vmatpush2.msra.mxu0 0.0
      %5392 = vmatprep.subr.mxu0 0.0
      %5393 = vmatpush2.msra.mxu0 0.0
      %5394 = vmatprep.subr.mxu0 0.0
      %5395 = vmatpush2.msra.mxu0 0.0
      %5396 = vmatprep.subr.mxu0 0.0
      %5397 = vmatpush2.msra.mxu0 0.0
      %5398 = vmatprep.subr.mxu0 0.0
      %5399 = vmatpush2.msra.mxu0 0.0
      %5400 = vmatprep.mubr.f32.mxu0 0.0
      %5401 = vmatmul.mubr.f32.gmra.mxu0 %v3841
      %v5402 = vpop.f32.mrf.mxu0
      %v5403 = vadd.f32 0.0, %v5402
      %v5404 = vpop.f32.mrf.mxu0
      %5405 = vmatprep.mubr.f32.mxu0 0.0
      %5406 = vmatmul.mubr.f32.gmra.mxu0 %v3843
      %v5407 = vpop.f32.mrf.mxu0
      %v5408 = vadd.f32 0.0, %v5407
      %v5409 = vpop.f32.mrf.mxu0
      %5410 = vmatprep.mubr.f32.mxu0 0.0
      %5411 = vmatmul.mubr.f32.gmra.mxu0 %v3849
      %v5412 = vpop.f32.mrf.mxu0
      %v5413 = vadd.f32 0.0, %v5412
      %v5414 = vpop.f32.mrf.mxu0
      %5415 = vmatprep.mubr.f32.mxu0 0.0
      %5416 = vmatmul.mubr.f32.gmra.mxu0 %v3851
      %v5417 = vpop.f32.mrf.mxu0
      %v5418 = vadd.f32 0.0, %v5417
      %v5419 = vpop.f32.mrf.mxu0
      %5420 = vmatprep.mubr.f32.mxu0 0.0
      %5421 = vmatmul.mubr.f32.gmra.mxu0 %v3853
      %v5422 = vpop.f32.mrf.mxu0
      %v5423 = vadd.f32 0.0, %v5422
      %v5424 = vpop.f32.mrf.mxu0
      %5425 = vmatprep.mubr.f32.mxu0 0.0
      %5426 = vmatmul.mubr.f32.gmra.mxu0 %v3855
      %v5427 = vpop.f32.mrf.mxu0
      %v5428 = vadd.f32 0.0, %v5427
      %v5429 = vpop.f32.mrf.mxu0
      %5430 = vmatprep.mubr.f32.mxu0 0.0
      %5431 = vmatmul.mubr.f32.gmra.mxu0 %v3857
      %v5432 = vpop.f32.mrf.mxu0
      %v5433 = vadd.f32 0.0, %v5432
      %v5434 = vpop.f32.mrf.mxu0
      %5435 = vmatprep.mubr.f32.mxu0 0.0
      %5436 = vmatmul.mubr.f32.gmra.mxu0 %v3859
      %v5437 = vpop.f32.mrf.mxu0
      %v5438 = vadd.f32 0.0, %v5437
      %v5439 = vpop.f32.mrf.mxu0
      %5440 = vmatprep.mubr.f32.mxu0 0.0
      %5441 = vmatmul.mubr.f32.gmra.mxu0 %v3861
      %v5442 = vpop.f32.mrf.mxu0
      %v5443 = vadd.f32 0.0, %v5442
      %v5444 = vpop.f32.mrf.mxu0
      %5445 = vmatprep.mubr.f32.mxu0 0.0
      %5446 = vmatmul.mubr.f32.gmra.mxu0 %v3863
      %v5447 = vpop.f32.mrf.mxu0
      %v5448 = vadd.f32 0.0, %v5447
      %v5449 = vpop.f32.mrf.mxu0
      %5450 = vmatprep.mubr.f32.mxu0 0.0
      %5451 = vmatmul.mubr.f32.gmra.mxu0 %v3865
      %v5452 = vpop.f32.mrf.mxu0
      %v5453 = vadd.f32 0.0, %v5452
      %v5454 = vpop.f32.mrf.mxu0
      %5455 = vmatprep.mubr.f32.mxu0 0.0
      %5456 = vmatmul.mubr.f32.gmra.mxu0 %v3867
      %v5457 = vpop.f32.mrf.mxu0
      %v5458 = vadd.f32 0.0, %v5457
      %v5459 = vpop.f32.mrf.mxu0
      %5460 = vmatprep.mubr.f32.mxu0 0.0
      %5461 = vmatmul.mubr.f32.gmra.mxu0 %v3869
      %v5462 = vpop.f32.mrf.mxu0
      %v5463 = vadd.f32 0.0, %v5462
      %v5464 = vpop.f32.mrf.mxu0
      %5465 = vmatprep.mubr.f32.mxu0 0.0
      %5466 = vmatmul.mubr.f32.gmra.mxu0 %v3871
      %v5467 = vpop.f32.mrf.mxu0
      %v5468 = vadd.f32 0.0, %v5467
      %v5469 = vpop.f32.mrf.mxu0
      %5470 = vmatprep.mubr.f32.mxu0 0.0
      %5471 = vmatmul.mubr.f32.gmra.mxu0 %v3873
      %v5472 = vpop.f32.mrf.mxu0
      %v5473 = vadd.f32 0.0, %v5472
      %v5474 = vpop.f32.mrf.mxu0
      %5475 = vmatprep.mubr.f32.mxu0 0.0
      %5476 = vmatmul.mubr.f32.gmra.mxu0 %v3875
      %v5477 = vpop.f32.mrf.mxu0
      %v5478 = vadd.f32 0.0, %v5477
      %v5479 = vpop.f32.mrf.mxu0
      %5480 = vmatprep.mubr.f32.mxu0 0.0
      %5481 = vmatmul.mubr.f32.gmra.mxu0 %v3877
      %v5482 = vpop.f32.mrf.mxu0
      %v5483 = vadd.f32 0.0, %v5482
      %v5484 = vpop.f32.mrf.mxu0
      %5485 = vmatprep.mubr.f32.mxu0 0.0
      %5486 = vmatmul.mubr.f32.gmra.mxu0 %v3879
      %v5487 = vpop.f32.mrf.mxu0
      %v5488 = vadd.f32 0.0, %v5487
      %v5489 = vpop.f32.mrf.mxu0
      %5490 = vmatprep.mubr.f32.mxu0 0.0
      %5491 = vmatmul.mubr.f32.gmra.mxu0 %v3881
      %v5492 = vpop.f32.mrf.mxu0
      %v5493 = vadd.f32 0.0, %v5492
      %v5494 = vpop.f32.mrf.mxu0
      %5495 = vmatprep.mubr.f32.mxu0 0.0
      %5496 = vmatmul.mubr.f32.gmra.mxu0 %v3883
      %v5497 = vpop.f32.mrf.mxu0
      %v5498 = vadd.f32 0.0, %v5497
      %v5499 = vpop.f32.mrf.mxu0
      %5500 = vmatprep.mubr.f32.mxu0 0.0
      %5501 = vmatmul.mubr.f32.gmra.mxu0 %v3885
      %v5502 = vpop.f32.mrf.mxu0
      %v5503 = vadd.f32 0.0, %v5502
      %v5504 = vpop.f32.mrf.mxu0
      %5505 = vmatprep.mubr.f32.mxu0 0.0
      %5506 = vmatmul.mubr.f32.gmra.mxu0 %v3887
      %v5507 = vpop.f32.mrf.mxu0
      %v5508 = vadd.f32 0.0, %v5507
      %v5509 = vpop.f32.mrf.mxu0
      %5510 = vmatprep.mubr.f32.mxu0 0.0
      %5511 = vmatmul.mubr.f32.gmra.mxu0 %v3889
      %v5512 = vpop.f32.mrf.mxu0
      %v5513 = vadd.f32 0.0, %v5512
      %v5514 = vpop.f32.mrf.mxu0
      %5515 = vmatprep.mubr.f32.mxu0 0.0
      %5516 = vmatmul.mubr.f32.gmra.mxu0 %v3891
      %v5517 = vpop.f32.mrf.mxu0
      %v5518 = vadd.f32 0.0, %v5517
      %v5519 = vpop.f32.mrf.mxu0
      %5520 = vmatprep.mubr.f32.mxu0 0.0
      %5521 = vmatmul.mubr.f32.gmra.mxu0 %v3893
      %v5522 = vpop.f32.mrf.mxu0
      %v5523 = vadd.f32 0.0, %v5522
      %v5524 = vpop.f32.mrf.mxu0
      %5525 = vmatprep.mubr.f32.mxu0 0.0
      %5526 = vmatmul.mubr.f32.gmra.mxu0 %v3895
      %v5527 = vpop.f32.mrf.mxu0
      %v5528 = vadd.f32 0.0, %v5527
      %v5529 = vpop.f32.mrf.mxu0
      %5530 = vmatprep.mubr.f32.mxu0 0.0
      %5531 = vmatmul.mubr.f32.gmra.mxu0 %v3897
      %v5532 = vpop.f32.mrf.mxu0
      %v5533 = vadd.f32 0.0, %v5532
      %v5534 = vpop.f32.mrf.mxu0
      %5535 = vmatprep.mubr.f32.mxu0 0.0
      %5536 = vmatmul.mubr.f32.gmra.mxu0 %v3899
      %v5537 = vpop.f32.mrf.mxu0
      %v5538 = vadd.f32 0.0, %v5537
      %v5539 = vpop.f32.mrf.mxu0
      %5540 = vmatprep.mubr.f32.mxu0 0.0
      %5541 = vmatmul.mubr.f32.gmra.mxu0 %v4527
      %v5542 = vpop.f32.mrf.mxu0
      %v5543 = vadd.f32 0.0, %v5542
      %v5544 = vpop.f32.mrf.mxu0
      %5545 = vmatprep.mubr.f32.mxu0 0.0
      %5546 = vmatmul.mubr.f32.gmra.mxu0 %v4529
      %v5547 = vpop.f32.mrf.mxu0
      %v5548 = vadd.f32 0.0, %v5547
      %v5549 = vpop.f32.mrf.mxu0
      %5550 = vmatprep.mubr.f32.mxu0 0.0
      %5551 = vmatmul.mubr.f32.gmra.mxu0 %v3897
      %v5552 = vpop.f32.mrf.mxu0
      %v5553 = vadd.f32 0.0, %v5552
      %v5554 = vpop.f32.mrf.mxu0
      %5555 = vmatprep.mubr.f32.mxu0 0.0
      %5556 = vmatmul.mubr.f32.gmra.mxu0 %v3899
      %v5557 = vpop.f32.mrf.mxu0
      %v5558 = vadd.f32 0.0, %v5557
      %v5559 = vpop.f32.mrf.mxu0
      %5560 = vdwg.mxu0
      %v5561 = vadd.f32 %v5300, %v5403
      %v5562 = vadd.f32 %v5301, %v5408
      %v5563 = vadd.f32 %v5302, %v5413
      %v5564 = vadd.f32 %v5303, %v5418
      %v5565 = vadd.f32 %v5304, %v5423
      %v5566 = vadd.f32 %v5305, %v5428
      %v5567 = vadd.f32 %v5306, %v5433
      %v5568 = vadd.f32 %v5307, %v5438
      %v5569 = vadd.f32 %v5308, %v5443
      %v5570 = vadd.f32 %v5309, %v5448
      %v5571 = vadd.f32 %v5310, %v5453
      %v5572 = vadd.f32 %v5311, %v5458
      %v5573 = vadd.f32 %v5312, %v5463
      %v5574 = vadd.f32 %v5313, %v5468
      %v5575 = vadd.f32 %v5314, %v5473
      %v5576 = vadd.f32 %v5315, %v5478
      %v5577 = vadd.f32 %v5316, %v5483
      %v5578 = vadd.f32 %v5317, %v5488
      %v5579 = vadd.f32 %v5318, %v5493
      %v5580 = vadd.f32 %v5319, %v5498
      %v5581 = vadd.f32 %v5320, %v5503
      %v5582 = vadd.f32 %v5321, %v5508
      %v5583 = vadd.f32 %v5322, %v5513
      %v5584 = vadd.f32 %v5323, %v5518
      %v5585 = vadd.f32 %v5324, %v5523
      %v5586 = vadd.f32 %v5325, %v5528
      %v5587 = vadd.f32 %v5326, %v5533
      %v5588 = vadd.f32 %v5327, %v5538
      %v5589 = vadd.f32 %v5328, %v5543
      %v5590 = vadd.f32 %v5329, %v5548
      %v5591 = vadd.f32 %v5330, %v5553
      %v5592 = vadd.f32 %v5331, %v5558
      %v5593 = vld [vmem:[%s2 + $0x1c] sm:$0xf]
      %v5595 = vsel %vm421, %v5593, 0
      %5597 = vmatprep.subr.mxu0 0.0
      %5598 = vmatpush1.msra.mxu0 0.0
      %5599 = vmatprep.subr.mxu0 0.0
      %5600 = vmatpush1.msra.mxu0 0.0
      %5601 = vmatprep.subr.mxu0 0.0
      %5602 = vmatpush1.msra.mxu0 0.0
      %5603 = vmatprep.subr.mxu0 0.0
      %5604 = vmatpush1.msra.mxu0 0.0
      %5605 = vmatprep.subr.mxu0 0.0
      %5606 = vmatpush1.msra.mxu0 0.0
      %5607 = vmatprep.subr.mxu0 0.0
      %5608 = vmatpush1.msra.mxu0 0.0
      %5609 = vmatprep.subr.mxu0 0.0
      %5610 = vmatpush1.msra.mxu0 0.0
      %5611 = vmatprep.subr.mxu0 0.0
      %5612 = vmatpush1.msra.mxu0 0.0
      %5613 = vmatprep.subr.mxu0 0.0
      %5614 = vmatpush1.msra.mxu0 0.0
      %5615 = vmatprep.subr.mxu0 0.0
      %5616 = vmatpush1.msra.mxu0 0.0
      %5617 = vmatprep.subr.mxu0 0.0
      %5618 = vmatpush1.msra.mxu0 0.0
      %5619 = vmatprep.subr.mxu0 0.0
      %5620 = vmatpush1.msra.mxu0 0.0
      %5621 = vmatprep.subr.mxu0 0.0
      %5622 = vmatpush1.msra.mxu0 0.0
      %5623 = vmatprep.subr.mxu0 0.0
      %5624 = vmatpush1.msra.mxu0 0.0
      %5625 = vmatprep.subr.mxu0 0.0
      %5626 = vmatpush1.msra.mxu0 0.0
      %5627 = vmatprep.subr.mxu0 0.0
      %5628 = vmatpush1.msra.mxu0 %v5595
      %5629 = vmatprep.subr.mxu0 0.0
      %5630 = vmatpush2.msra.mxu0 0.0
      %5631 = vmatprep.subr.mxu0 0.0
      %5632 = vmatpush2.msra.mxu0 0.0
      %5633 = vmatprep.subr.mxu0 0.0
      %5634 = vmatpush2.msra.mxu0 0.0
      %5635 = vmatprep.subr.mxu0 0.0
      %5636 = vmatpush2.msra.mxu0 0.0
      %5637 = vmatprep.subr.mxu0 0.0
      %5638 = vmatpush2.msra.mxu0 0.0
      %5639 = vmatprep.subr.mxu0 0.0
      %5640 = vmatpush2.msra.mxu0 0.0
      %5641 = vmatprep.subr.mxu0 0.0
      %5642 = vmatpush2.msra.mxu0 0.0
      %5643 = vmatprep.subr.mxu0 0.0
      %5644 = vmatpush2.msra.mxu0 0.0
      %5645 = vmatprep.subr.mxu0 0.0
      %5646 = vmatpush2.msra.mxu0 0.0
      %5647 = vmatprep.subr.mxu0 0.0
      %5648 = vmatpush2.msra.mxu0 0.0
      %5649 = vmatprep.subr.mxu0 0.0
      %5650 = vmatpush2.msra.mxu0 0.0
      %5651 = vmatprep.subr.mxu0 0.0
      %5652 = vmatpush2.msra.mxu0 0.0
      %5653 = vmatprep.subr.mxu0 0.0
      %5654 = vmatpush2.msra.mxu0 0.0
      %5655 = vmatprep.subr.mxu0 0.0
      %5656 = vmatpush2.msra.mxu0 0.0
      %5657 = vmatprep.subr.mxu0 0.0
      %5658 = vmatpush2.msra.mxu0 0.0
      %5659 = vmatprep.subr.mxu0 0.0
      %5660 = vmatpush2.msra.mxu0 0.0
      %5661 = vmatprep.mubr.f32.mxu0 0.0
      %5662 = vmatmul.mubr.f32.gmra.mxu0 %v3553
      %v5663 = vpop.f32.mrf.mxu0
      %v5664 = vadd.f32 0.0, %v5663
      %v5665 = vpop.f32.mrf.mxu0
      %5666 = vmatprep.mubr.f32.mxu0 0.0
      %5667 = vmatmul.mubr.f32.gmra.mxu0 %v3555
      %v5668 = vpop.f32.mrf.mxu0
      %v5669 = vadd.f32 0.0, %v5668
      %v5670 = vpop.f32.mrf.mxu0
      %5671 = vmatprep.mubr.f32.mxu0 0.0
      %5672 = vmatmul.mubr.f32.gmra.mxu0 %v3561
      %v5673 = vpop.f32.mrf.mxu0
      %v5674 = vadd.f32 0.0, %v5673
      %v5675 = vpop.f32.mrf.mxu0
      %5676 = vmatprep.mubr.f32.mxu0 0.0
      %5677 = vmatmul.mubr.f32.gmra.mxu0 %v3563
      %v5678 = vpop.f32.mrf.mxu0
      %v5679 = vadd.f32 0.0, %v5678
      %v5680 = vpop.f32.mrf.mxu0
      %5681 = vmatprep.mubr.f32.mxu0 0.0
      %5682 = vmatmul.mubr.f32.gmra.mxu0 %v3565
      %v5683 = vpop.f32.mrf.mxu0
      %v5684 = vadd.f32 0.0, %v5683
      %v5685 = vpop.f32.mrf.mxu0
      %5686 = vmatprep.mubr.f32.mxu0 0.0
      %5687 = vmatmul.mubr.f32.gmra.mxu0 %v3567
      %v5688 = vpop.f32.mrf.mxu0
      %v5689 = vadd.f32 0.0, %v5688
      %v5690 = vpop.f32.mrf.mxu0
      %5691 = vmatprep.mubr.f32.mxu0 0.0
      %5692 = vmatmul.mubr.f32.gmra.mxu0 %v3569
      %v5693 = vpop.f32.mrf.mxu0
      %v5694 = vadd.f32 0.0, %v5693
      %v5695 = vpop.f32.mrf.mxu0
      %5696 = vmatprep.mubr.f32.mxu0 0.0
      %5697 = vmatmul.mubr.f32.gmra.mxu0 %v3571
      %v5698 = vpop.f32.mrf.mxu0
      %v5699 = vadd.f32 0.0, %v5698
      %v5700 = vpop.f32.mrf.mxu0
      %5701 = vmatprep.mubr.f32.mxu0 0.0
      %5702 = vmatmul.mubr.f32.gmra.mxu0 %v3573
      %v5703 = vpop.f32.mrf.mxu0
      %v5704 = vadd.f32 0.0, %v5703
      %v5705 = vpop.f32.mrf.mxu0
      %5706 = vmatprep.mubr.f32.mxu0 0.0
      %5707 = vmatmul.mubr.f32.gmra.mxu0 %v3575
      %v5708 = vpop.f32.mrf.mxu0
      %v5709 = vadd.f32 0.0, %v5708
      %v5710 = vpop.f32.mrf.mxu0
      %5711 = vmatprep.mubr.f32.mxu0 0.0
      %5712 = vmatmul.mubr.f32.gmra.mxu0 %v3577
      %v5713 = vpop.f32.mrf.mxu0
      %v5714 = vadd.f32 0.0, %v5713
      %v5715 = vpop.f32.mrf.mxu0
      %5716 = vmatprep.mubr.f32.mxu0 0.0
      %5717 = vmatmul.mubr.f32.gmra.mxu0 %v3579
      %v5718 = vpop.f32.mrf.mxu0
      %v5719 = vadd.f32 0.0, %v5718
      %v5720 = vpop.f32.mrf.mxu0
      %5721 = vmatprep.mubr.f32.mxu0 0.0
      %5722 = vmatmul.mubr.f32.gmra.mxu0 %v3581
      %v5723 = vpop.f32.mrf.mxu0
      %v5724 = vadd.f32 0.0, %v5723
      %v5725 = vpop.f32.mrf.mxu0
      %5726 = vmatprep.mubr.f32.mxu0 0.0
      %5727 = vmatmul.mubr.f32.gmra.mxu0 %v3583
      %v5728 = vpop.f32.mrf.mxu0
      %v5729 = vadd.f32 0.0, %v5728
      %v5730 = vpop.f32.mrf.mxu0
      %5731 = vmatprep.mubr.f32.mxu0 0.0
      %5732 = vmatmul.mubr.f32.gmra.mxu0 %v3585
      %v5733 = vpop.f32.mrf.mxu0
      %v5734 = vadd.f32 0.0, %v5733
      %v5735 = vpop.f32.mrf.mxu0
      %5736 = vmatprep.mubr.f32.mxu0 0.0
      %5737 = vmatmul.mubr.f32.gmra.mxu0 %v3587
      %v5738 = vpop.f32.mrf.mxu0
      %v5739 = vadd.f32 0.0, %v5738
      %v5740 = vpop.f32.mrf.mxu0
      %5741 = vmatprep.mubr.f32.mxu0 0.0
      %5742 = vmatmul.mubr.f32.gmra.mxu0 %v3589
      %v5743 = vpop.f32.mrf.mxu0
      %v5744 = vadd.f32 0.0, %v5743
      %v5745 = vpop.f32.mrf.mxu0
      %5746 = vmatprep.mubr.f32.mxu0 0.0
      %5747 = vmatmul.mubr.f32.gmra.mxu0 %v3591
      %v5748 = vpop.f32.mrf.mxu0
      %v5749 = vadd.f32 0.0, %v5748
      %v5750 = vpop.f32.mrf.mxu0
      %5751 = vmatprep.mubr.f32.mxu0 0.0
      %5752 = vmatmul.mubr.f32.gmra.mxu0 %v3593
      %v5753 = vpop.f32.mrf.mxu0
      %v5754 = vadd.f32 0.0, %v5753
      %v5755 = vpop.f32.mrf.mxu0
      %5756 = vmatprep.mubr.f32.mxu0 0.0
      %5757 = vmatmul.mubr.f32.gmra.mxu0 %v3595
      %v5758 = vpop.f32.mrf.mxu0
      %v5759 = vadd.f32 0.0, %v5758
      %v5760 = vpop.f32.mrf.mxu0
      %5761 = vmatprep.mubr.f32.mxu0 0.0
      %5762 = vmatmul.mubr.f32.gmra.mxu0 %v3597
      %v5763 = vpop.f32.mrf.mxu0
      %v5764 = vadd.f32 0.0, %v5763
      %v5765 = vpop.f32.mrf.mxu0
      %5766 = vmatprep.mubr.f32.mxu0 0.0
      %5767 = vmatmul.mubr.f32.gmra.mxu0 %v3599
      %v5768 = vpop.f32.mrf.mxu0
      %v5769 = vadd.f32 0.0, %v5768
      %v5770 = vpop.f32.mrf.mxu0
      %5771 = vmatprep.mubr.f32.mxu0 0.0
      %5772 = vmatmul.mubr.f32.gmra.mxu0 %v3601
      %v5773 = vpop.f32.mrf.mxu0
      %v5774 = vadd.f32 0.0, %v5773
      %v5775 = vpop.f32.mrf.mxu0
      %5776 = vmatprep.mubr.f32.mxu0 0.0
      %5777 = vmatmul.mubr.f32.gmra.mxu0 %v3603
      %v5778 = vpop.f32.mrf.mxu0
      %v5779 = vadd.f32 0.0, %v5778
      %v5780 = vpop.f32.mrf.mxu0
      %5781 = vmatprep.mubr.f32.mxu0 0.0
      %5782 = vmatmul.mubr.f32.gmra.mxu0 %v3605
      %v5783 = vpop.f32.mrf.mxu0
      %v5784 = vadd.f32 0.0, %v5783
      %v5785 = vpop.f32.mrf.mxu0
      %5786 = vmatprep.mubr.f32.mxu0 0.0
      %5787 = vmatmul.mubr.f32.gmra.mxu0 %v3607
      %v5788 = vpop.f32.mrf.mxu0
      %v5789 = vadd.f32 0.0, %v5788
      %v5790 = vpop.f32.mrf.mxu0
      %5791 = vmatprep.mubr.f32.mxu0 0.0
      %5792 = vmatmul.mubr.f32.gmra.mxu0 %v3609
      %v5793 = vpop.f32.mrf.mxu0
      %v5794 = vadd.f32 0.0, %v5793
      %v5795 = vpop.f32.mrf.mxu0
      %5796 = vmatprep.mubr.f32.mxu0 0.0
      %5797 = vmatmul.mubr.f32.gmra.mxu0 %v3611
      %v5798 = vpop.f32.mrf.mxu0
      %v5799 = vadd.f32 0.0, %v5798
      %v5800 = vpop.f32.mrf.mxu0
      %5801 = vmatprep.mubr.f32.mxu0 0.0
      %5802 = vmatmul.mubr.f32.gmra.mxu0 %v4798
      %v5803 = vpop.f32.mrf.mxu0
      %v5804 = vadd.f32 0.0, %v5803
      %v5805 = vpop.f32.mrf.mxu0
      %5806 = vmatprep.mubr.f32.mxu0 0.0
      %5807 = vmatmul.mubr.f32.gmra.mxu0 %v4800
      %v5808 = vpop.f32.mrf.mxu0
      %v5809 = vadd.f32 0.0, %v5808
      %v5810 = vpop.f32.mrf.mxu0
      %5811 = vmatprep.mubr.f32.mxu0 0.0
      %5812 = vmatmul.mubr.f32.gmra.mxu0 %v3609
      %v5813 = vpop.f32.mrf.mxu0
      %v5814 = vadd.f32 0.0, %v5813
      %v5815 = vpop.f32.mrf.mxu0
      %5816 = vmatprep.mubr.f32.mxu0 0.0
      %5817 = vmatmul.mubr.f32.gmra.mxu0 %v3611
      %v5818 = vpop.f32.mrf.mxu0
      %v5819 = vadd.f32 0.0, %v5818
      %v5820 = vpop.f32.mrf.mxu0
      %5821 = vdwg.mxu0
      %v5822 = vadd.f32 %v5561, %v5664
      %v5823 = vadd.f32 %v5562, %v5669
      %v5824 = vadd.f32 %v5563, %v5674
      %v5825 = vadd.f32 %v5564, %v5679
      %v5826 = vadd.f32 %v5565, %v5684
      %v5827 = vadd.f32 %v5566, %v5689
      %v5828 = vadd.f32 %v5567, %v5694
      %v5829 = vadd.f32 %v5568, %v5699
      %v5830 = vadd.f32 %v5569, %v5704
      %v5831 = vadd.f32 %v5570, %v5709
      %v5832 = vadd.f32 %v5571, %v5714
      %v5833 = vadd.f32 %v5572, %v5719
      %v5834 = vadd.f32 %v5573, %v5724
      %v5835 = vadd.f32 %v5574, %v5729
      %v5836 = vadd.f32 %v5575, %v5734
      %v5837 = vadd.f32 %v5576, %v5739
      %v5838 = vadd.f32 %v5577, %v5744
      %v5839 = vadd.f32 %v5578, %v5749
      %v5840 = vadd.f32 %v5579, %v5754
      %v5841 = vadd.f32 %v5580, %v5759
      %v5842 = vadd.f32 %v5581, %v5764
      %v5843 = vadd.f32 %v5582, %v5769
      %v5844 = vadd.f32 %v5583, %v5774
      %v5845 = vadd.f32 %v5584, %v5779
      %v5846 = vadd.f32 %v5585, %v5784
      %v5847 = vadd.f32 %v5586, %v5789
      %v5848 = vadd.f32 %v5587, %v5794
      %v5849 = vadd.f32 %v5588, %v5799
      %v5850 = vadd.f32 %v5589, %v5804
      %v5851 = vadd.f32 %v5590, %v5809
      %v5852 = vadd.f32 %v5591, %v5814
      %v5853 = vadd.f32 %v5592, %v5819
      %v5854 = vld [vmem:[%s2 + $0x20] sm:$0xf]
      %v5856 = vsel %vm421, %v5854, 0
      %5858 = vmatprep.subr.mxu0 0.0
      %5859 = vmatpush1.msra.mxu0 0.0
      %5860 = vmatprep.subr.mxu0 0.0
      %5861 = vmatpush1.msra.mxu0 0.0
      %5862 = vmatprep.subr.mxu0 0.0
      %5863 = vmatpush1.msra.mxu0 0.0
      %5864 = vmatprep.subr.mxu0 0.0
      %5865 = vmatpush1.msra.mxu0 0.0
      %5866 = vmatprep.subr.mxu0 0.0
      %5867 = vmatpush1.msra.mxu0 0.0
      %5868 = vmatprep.subr.mxu0 0.0
      %5869 = vmatpush1.msra.mxu0 0.0
      %5870 = vmatprep.subr.mxu0 0.0
      %5871 = vmatpush1.msra.mxu0 0.0
      %5872 = vmatprep.subr.mxu0 0.0
      %5873 = vmatpush1.msra.mxu0 0.0
      %5874 = vmatprep.subr.mxu0 0.0
      %5875 = vmatpush1.msra.mxu0 0.0
      %5876 = vmatprep.subr.mxu0 0.0
      %5877 = vmatpush1.msra.mxu0 0.0
      %5878 = vmatprep.subr.mxu0 0.0
      %5879 = vmatpush1.msra.mxu0 0.0
      %5880 = vmatprep.subr.mxu0 0.0
      %5881 = vmatpush1.msra.mxu0 0.0
      %5882 = vmatprep.subr.mxu0 0.0
      %5883 = vmatpush1.msra.mxu0 0.0
      %5884 = vmatprep.subr.mxu0 0.0
      %5885 = vmatpush1.msra.mxu0 0.0
      %5886 = vmatprep.subr.mxu0 0.0
      %5887 = vmatpush1.msra.mxu0 0.0
      %5888 = vmatprep.subr.mxu0 0.0
      %5889 = vmatpush1.msra.mxu0 %v5856
      %5890 = vmatprep.subr.mxu0 0.0
      %5891 = vmatpush2.msra.mxu0 0.0
      %5892 = vmatprep.subr.mxu0 0.0
      %5893 = vmatpush2.msra.mxu0 0.0
      %5894 = vmatprep.subr.mxu0 0.0
      %5895 = vmatpush2.msra.mxu0 0.0
      %5896 = vmatprep.subr.mxu0 0.0
      %5897 = vmatpush2.msra.mxu0 0.0
      %5898 = vmatprep.subr.mxu0 0.0
      %5899 = vmatpush2.msra.mxu0 0.0
      %5900 = vmatprep.subr.mxu0 0.0
      %5901 = vmatpush2.msra.mxu0 0.0
      %5902 = vmatprep.subr.mxu0 0.0
      %5903 = vmatpush2.msra.mxu0 0.0
      %5904 = vmatprep.subr.mxu0 0.0
      %5905 = vmatpush2.msra.mxu0 0.0
      %5906 = vmatprep.subr.mxu0 0.0
      %5907 = vmatpush2.msra.mxu0 0.0
      %5908 = vmatprep.subr.mxu0 0.0
      %5909 = vmatpush2.msra.mxu0 0.0
      %5910 = vmatprep.subr.mxu0 0.0
      %5911 = vmatpush2.msra.mxu0 0.0
      %5912 = vmatprep.subr.mxu0 0.0
      %5913 = vmatpush2.msra.mxu0 0.0
      %5914 = vmatprep.subr.mxu0 0.0
      %5915 = vmatpush2.msra.mxu0 0.0
      %5916 = vmatprep.subr.mxu0 0.0
      %5917 = vmatpush2.msra.mxu0 0.0
      %5918 = vmatprep.subr.mxu0 0.0
      %5919 = vmatpush2.msra.mxu0 0.0
      %5920 = vmatprep.subr.mxu0 0.0
      %5921 = vmatpush2.msra.mxu0 0.0
      %5922 = vmatprep.mubr.f32.mxu0 0.0
      %5923 = vmatmul.mubr.f32.gmra.mxu0 %v4205
      %v5924 = vpop.f32.mrf.mxu0
      %v5925 = vadd.f32 0.0, %v5924
      %v5926 = vpop.f32.mrf.mxu0
      %5927 = vmatprep.mubr.f32.mxu0 0.0
      %5928 = vmatmul.mubr.f32.gmra.mxu0 %v4207
      %v5929 = vpop.f32.mrf.mxu0
      %v5930 = vadd.f32 0.0, %v5929
      %v5931 = vpop.f32.mrf.mxu0
      %5932 = vmatprep.mubr.f32.mxu0 0.0
      %5933 = vmatmul.mubr.f32.gmra.mxu0 %v4213
      %v5934 = vpop.f32.mrf.mxu0
      %v5935 = vadd.f32 0.0, %v5934
      %v5936 = vpop.f32.mrf.mxu0
      %5937 = vmatprep.mubr.f32.mxu0 0.0
      %5938 = vmatmul.mubr.f32.gmra.mxu0 %v4215
      %v5939 = vpop.f32.mrf.mxu0
      %v5940 = vadd.f32 0.0, %v5939
      %v5941 = vpop.f32.mrf.mxu0
      %5942 = vmatprep.mubr.f32.mxu0 0.0
      %5943 = vmatmul.mubr.f32.gmra.mxu0 %v4217
      %v5944 = vpop.f32.mrf.mxu0
      %v5945 = vadd.f32 0.0, %v5944
      %v5946 = vpop.f32.mrf.mxu0
      %5947 = vmatprep.mubr.f32.mxu0 0.0
      %5948 = vmatmul.mubr.f32.gmra.mxu0 %v4219
      %v5949 = vpop.f32.mrf.mxu0
      %v5950 = vadd.f32 0.0, %v5949
      %v5951 = vpop.f32.mrf.mxu0
      %5952 = vmatprep.mubr.f32.mxu0 0.0
      %5953 = vmatmul.mubr.f32.gmra.mxu0 %v4221
      %v5954 = vpop.f32.mrf.mxu0
      %v5955 = vadd.f32 0.0, %v5954
      %v5956 = vpop.f32.mrf.mxu0
      %5957 = vmatprep.mubr.f32.mxu0 0.0
      %5958 = vmatmul.mubr.f32.gmra.mxu0 %v4223
      %v5959 = vpop.f32.mrf.mxu0
      %v5960 = vadd.f32 0.0, %v5959
      %v5961 = vpop.f32.mrf.mxu0
      %5962 = vmatprep.mubr.f32.mxu0 0.0
      %5963 = vmatmul.mubr.f32.gmra.mxu0 %v4225
      %v5964 = vpop.f32.mrf.mxu0
      %v5965 = vadd.f32 0.0, %v5964
      %v5966 = vpop.f32.mrf.mxu0
      %5967 = vmatprep.mubr.f32.mxu0 0.0
      %5968 = vmatmul.mubr.f32.gmra.mxu0 %v4227
      %v5969 = vpop.f32.mrf.mxu0
      %v5970 = vadd.f32 0.0, %v5969
      %v5971 = vpop.f32.mrf.mxu0
      %5972 = vmatprep.mubr.f32.mxu0 0.0
      %5973 = vmatmul.mubr.f32.gmra.mxu0 %v4229
      %v5974 = vpop.f32.mrf.mxu0
      %v5975 = vadd.f32 0.0, %v5974
      %v5976 = vpop.f32.mrf.mxu0
      %5977 = vmatprep.mubr.f32.mxu0 0.0
      %5978 = vmatmul.mubr.f32.gmra.mxu0 %v4231
      %v5979 = vpop.f32.mrf.mxu0
      %v5980 = vadd.f32 0.0, %v5979
      %v5981 = vpop.f32.mrf.mxu0
      %5982 = vmatprep.mubr.f32.mxu0 0.0
      %5983 = vmatmul.mubr.f32.gmra.mxu0 %v4233
      %v5984 = vpop.f32.mrf.mxu0
      %v5985 = vadd.f32 0.0, %v5984
      %v5986 = vpop.f32.mrf.mxu0
      %5987 = vmatprep.mubr.f32.mxu0 0.0
      %5988 = vmatmul.mubr.f32.gmra.mxu0 %v4235
      %v5989 = vpop.f32.mrf.mxu0
      %v5990 = vadd.f32 0.0, %v5989
      %v5991 = vpop.f32.mrf.mxu0
      %5992 = vmatprep.mubr.f32.mxu0 0.0
      %5993 = vmatmul.mubr.f32.gmra.mxu0 %v4237
      %v5994 = vpop.f32.mrf.mxu0
      %v5995 = vadd.f32 0.0, %v5994
      %v5996 = vpop.f32.mrf.mxu0
      %5997 = vmatprep.mubr.f32.mxu0 0.0
      %5998 = vmatmul.mubr.f32.gmra.mxu0 %v4239
      %v5999 = vpop.f32.mrf.mxu0
      %v6000 = vadd.f32 0.0, %v5999
      %v6001 = vpop.f32.mrf.mxu0
      %6002 = vmatprep.mubr.f32.mxu0 0.0
      %6003 = vmatmul.mubr.f32.gmra.mxu0 %v4241
      %v6004 = vpop.f32.mrf.mxu0
      %v6005 = vadd.f32 0.0, %v6004
      %v6006 = vpop.f32.mrf.mxu0
      %6007 = vmatprep.mubr.f32.mxu0 0.0
      %6008 = vmatmul.mubr.f32.gmra.mxu0 %v4243
      %v6009 = vpop.f32.mrf.mxu0
      %v6010 = vadd.f32 0.0, %v6009
      %v6011 = vpop.f32.mrf.mxu0
      %6012 = vmatprep.mubr.f32.mxu0 0.0
      %6013 = vmatmul.mubr.f32.gmra.mxu0 %v4245
      %v6014 = vpop.f32.mrf.mxu0
      %v6015 = vadd.f32 0.0, %v6014
      %v6016 = vpop.f32.mrf.mxu0
      %6017 = vmatprep.mubr.f32.mxu0 0.0
      %6018 = vmatmul.mubr.f32.gmra.mxu0 %v4247
      %v6019 = vpop.f32.mrf.mxu0
      %v6020 = vadd.f32 0.0, %v6019
      %v6021 = vpop.f32.mrf.mxu0
      %6022 = vmatprep.mubr.f32.mxu0 0.0
      %6023 = vmatmul.mubr.f32.gmra.mxu0 %v4249
      %v6024 = vpop.f32.mrf.mxu0
      %v6025 = vadd.f32 0.0, %v6024
      %v6026 = vpop.f32.mrf.mxu0
      %6027 = vmatprep.mubr.f32.mxu0 0.0
      %6028 = vmatmul.mubr.f32.gmra.mxu0 %v4251
      %v6029 = vpop.f32.mrf.mxu0
      %v6030 = vadd.f32 0.0, %v6029
      %v6031 = vpop.f32.mrf.mxu0
      %6032 = vmatprep.mubr.f32.mxu0 0.0
      %6033 = vmatmul.mubr.f32.gmra.mxu0 %v4253
      %v6034 = vpop.f32.mrf.mxu0
      %v6035 = vadd.f32 0.0, %v6034
      %v6036 = vpop.f32.mrf.mxu0
      %6037 = vmatprep.mubr.f32.mxu0 0.0
      %6038 = vmatmul.mubr.f32.gmra.mxu0 %v4255
      %v6039 = vpop.f32.mrf.mxu0
      %v6040 = vadd.f32 0.0, %v6039
      %v6041 = vpop.f32.mrf.mxu0
      %6042 = vmatprep.mubr.f32.mxu0 0.0
      %6043 = vmatmul.mubr.f32.gmra.mxu0 %v4257
      %v6044 = vpop.f32.mrf.mxu0
      %v6045 = vadd.f32 0.0, %v6044
      %v6046 = vpop.f32.mrf.mxu0
      %6047 = vmatprep.mubr.f32.mxu0 0.0
      %6048 = vmatmul.mubr.f32.gmra.mxu0 %v4259
      %v6049 = vpop.f32.mrf.mxu0
      %v6050 = vadd.f32 0.0, %v6049
      %v6051 = vpop.f32.mrf.mxu0
      %6052 = vmatprep.mubr.f32.mxu0 0.0
      %6053 = vmatmul.mubr.f32.gmra.mxu0 %v4261
      %v6054 = vpop.f32.mrf.mxu0
      %v6055 = vadd.f32 0.0, %v6054
      %v6056 = vpop.f32.mrf.mxu0
      %6057 = vmatprep.mubr.f32.mxu0 0.0
      %6058 = vmatmul.mubr.f32.gmra.mxu0 %v4263
      %v6059 = vpop.f32.mrf.mxu0
      %v6060 = vadd.f32 0.0, %v6059
      %v6061 = vpop.f32.mrf.mxu0
      %6062 = vmatprep.mubr.f32.mxu0 0.0
      %6063 = vmatmul.mubr.f32.gmra.mxu0 %v5068
      %v6064 = vpop.f32.mrf.mxu0
      %v6065 = vadd.f32 0.0, %v6064
      %v6066 = vpop.f32.mrf.mxu0
      %6067 = vmatprep.mubr.f32.mxu0 0.0
      %6068 = vmatmul.mubr.f32.gmra.mxu0 %v5070
      %v6069 = vpop.f32.mrf.mxu0
      %v6070 = vadd.f32 0.0, %v6069
      %v6071 = vpop.f32.mrf.mxu0
      %6072 = vmatprep.mubr.f32.mxu0 0.0
      %6073 = vmatmul.mubr.f32.gmra.mxu0 %v4261
      %v6074 = vpop.f32.mrf.mxu0
      %v6075 = vadd.f32 0.0, %v6074
      %v6076 = vpop.f32.mrf.mxu0
      %6077 = vmatprep.mubr.f32.mxu0 0.0
      %6078 = vmatmul.mubr.f32.gmra.mxu0 %v4263
      %v6079 = vpop.f32.mrf.mxu0
      %v6080 = vadd.f32 0.0, %v6079
      %v6081 = vpop.f32.mrf.mxu0
      %6082 = vdwg.mxu0
      %v6083 = vadd.f32 %v5822, %v5925
      %v6084 = vadd.f32 %v5823, %v5930
      %v6085 = vadd.f32 %v5824, %v5935
      %v6086 = vadd.f32 %v5825, %v5940
      %v6087 = vadd.f32 %v5826, %v5945
      %v6088 = vadd.f32 %v5827, %v5950
      %v6089 = vadd.f32 %v5828, %v5955
      %v6090 = vadd.f32 %v5829, %v5960
      %v6091 = vadd.f32 %v5830, %v5965
      %v6092 = vadd.f32 %v5831, %v5970
      %v6093 = vadd.f32 %v5832, %v5975
      %v6094 = vadd.f32 %v5833, %v5980
      %v6095 = vadd.f32 %v5834, %v5985
      %v6096 = vadd.f32 %v5835, %v5990
      %v6097 = vadd.f32 %v5836, %v5995
      %v6098 = vadd.f32 %v5837, %v6000
      %v6099 = vadd.f32 %v5838, %v6005
      %v6100 = vadd.f32 %v5839, %v6010
      %v6101 = vadd.f32 %v5840, %v6015
      %v6102 = vadd.f32 %v5841, %v6020
      %v6103 = vadd.f32 %v5842, %v6025
      %v6104 = vadd.f32 %v5843, %v6030
      %v6105 = vadd.f32 %v5844, %v6035
      %v6106 = vadd.f32 %v5845, %v6040
      %v6107 = vadd.f32 %v5846, %v6045
      %v6108 = vadd.f32 %v5847, %v6050
      %v6109 = vadd.f32 %v5848, %v6055
      %v6110 = vadd.f32 %v5849, %v6060
      %v6111 = vadd.f32 %v5850, %v6065
      %v6112 = vadd.f32 %v5851, %v6070
      %v6113 = vadd.f32 %v5852, %v6075
      %v6114 = vadd.f32 %v5853, %v6080
      %v6115 = vsel %vm356, %v6083, 0.0
      %v6116 = vsel %vm356, %v6084, 0.0
      %v6117 = vadd.f32 %v6115, %v6116
      %v6118 = vsel %vm356, %v6085, 0.0
      %v6119 = vadd.f32 %v6117, %v6118
      %v6120 = vsel %vm356, %v6086, 0.0
      %v6121 = vadd.f32 %v6119, %v6120
      %v6122 = vsel %vm356, %v6087, 0.0
      %v6123 = vadd.f32 %v6121, %v6122
      %v6124 = vsel %vm356, %v6088, 0.0
      %v6125 = vadd.f32 %v6123, %v6124
      %v6126 = vsel %vm356, %v6089, 0.0
      %v6127 = vadd.f32 %v6125, %v6126
      %v6128 = vsel %vm356, %v6090, 0.0
      %v6129 = vadd.f32 %v6127, %v6128
      %v6130 = vsel %vm356, %v6091, 0.0
      %v6131 = vadd.f32 %v6129, %v6130
      %v6132 = vsel %vm356, %v6092, 0.0
      %v6133 = vadd.f32 %v6131, %v6132
      %v6134 = vsel %vm356, %v6093, 0.0
      %v6135 = vadd.f32 %v6133, %v6134
      %v6136 = vsel %vm356, %v6094, 0.0
      %v6137 = vadd.f32 %v6135, %v6136
      %v6138 = vsel %vm356, %v6095, 0.0
      %v6139 = vadd.f32 %v6137, %v6138
      %v6140 = vsel %vm356, %v6096, 0.0
      %v6141 = vadd.f32 %v6139, %v6140
      %v6142 = vsel %vm356, %v6097, 0.0
      %v6143 = vadd.f32 %v6141, %v6142
      %v6144 = vsel %vm356, %v6098, 0.0
      %v6145 = vadd.f32 %v6143, %v6144
      %v6146 = vsel %vm356, %v6099, 0.0
      %v6147 = vadd.f32 %v6145, %v6146
      %v6148 = vsel %vm356, %v6100, 0.0
      %v6149 = vadd.f32 %v6147, %v6148
      %v6150 = vsel %vm356, %v6101, 0.0
      %v6151 = vadd.f32 %v6149, %v6150
      %v6152 = vsel %vm356, %v6102, 0.0
      %v6153 = vadd.f32 %v6151, %v6152
      %v6154 = vsel %vm356, %v6103, 0.0
      %v6155 = vadd.f32 %v6153, %v6154
      %v6156 = vsel %vm356, %v6104, 0.0
      %v6157 = vadd.f32 %v6155, %v6156
      %v6158 = vsel %vm356, %v6105, 0.0
      %v6159 = vadd.f32 %v6157, %v6158
      %v6160 = vsel %vm356, %v6106, 0.0
      %v6161 = vadd.f32 %v6159, %v6160
      %v6162 = vsel %vm356, %v6107, 0.0
      %v6163 = vadd.f32 %v6161, %v6162
      %v6164 = vsel %vm356, %v6108, 0.0
      %v6165 = vadd.f32 %v6163, %v6164
      %v6166 = vsel %vm356, %v6109, 0.0
      %v6167 = vadd.f32 %v6165, %v6166
      %v6168 = vsel %vm356, %v6110, 0.0
      %v6169 = vadd.f32 %v6167, %v6168
      %v6170 = vsel %vm356, %v6111, 0.0
      %v6171 = vadd.f32 %v6169, %v6170
      %v6172 = vsel %vm356, %v6112, 0.0
      %v6173 = vadd.f32 %v6171, %v6172
      %v6174 = vsel %vm356, %v6113, 0.0
      %v6175 = vadd.f32 %v6173, %v6174
      %v6176 = vsel %vm356, %v6114, 0.0
      %v6177 = vadd.f32 %v6175, %v6176
      %v6178 = vrot.slane %v6177, 4
      %v6179 = vadd.f32 %v6177, %v6178
      %v6180 = vrot.slane %v6179, 2
      %v6181 = vadd.f32 %v6179, %v6180
      %v6182 = vrot.slane %v6181, 1
      %v6183 = vadd.f32 %v6181, %v6182
      %v6184 = vmul.f32 %v6183, 0.00390625
      %v6185 = vmul.f32 %v6083, %v6083
      %v6186 = vmul.f32 %v6084, %v6084
      %v6187 = vmul.f32 %v6085, %v6085
      %v6188 = vmul.f32 %v6086, %v6086
      %v6189 = vmul.f32 %v6087, %v6087
      %v6190 = vmul.f32 %v6088, %v6088
      %v6191 = vmul.f32 %v6089, %v6089
      %v6192 = vmul.f32 %v6090, %v6090
      %v6193 = vmul.f32 %v6091, %v6091
      %v6194 = vmul.f32 %v6092, %v6092
      %v6195 = vmul.f32 %v6093, %v6093
      %v6196 = vmul.f32 %v6094, %v6094
      %v6197 = vmul.f32 %v6095, %v6095
      %v6198 = vmul.f32 %v6096, %v6096
      %v6199 = vmul.f32 %v6097, %v6097
      %v6200 = vmul.f32 %v6098, %v6098
      %v6201 = vmul.f32 %v6099, %v6099
      %v6202 = vmul.f32 %v6100, %v6100
      %v6203 = vmul.f32 %v6101, %v6101
      %v6204 = vmul.f32 %v6102, %v6102
      %v6205 = vmul.f32 %v6103, %v6103
      %v6206 = vmul.f32 %v6104, %v6104
      %v6207 = vmul.f32 %v6105, %v6105
      %v6208 = vmul.f32 %v6106, %v6106
      %v6209 = vmul.f32 %v6107, %v6107
      %v6210 = vmul.f32 %v6108, %v6108
      %v6211 = vmul.f32 %v6109, %v6109
      %v6212 = vmul.f32 %v6110, %v6110
      %v6213 = vmul.f32 %v6111, %v6111
      %v6214 = vmul.f32 %v6112, %v6112
      %v6215 = vmul.f32 %v6113, %v6113
      %v6216 = vmul.f32 %v6114, %v6114
      %v6217 = vsel %vm356, %v6185, 0.0
      %v6218 = vsel %vm356, %v6186, 0.0
      %v6219 = vadd.f32 %v6217, %v6218
      %v6220 = vsel %vm356, %v6187, 0.0
      %v6221 = vadd.f32 %v6219, %v6220
      %v6222 = vsel %vm356, %v6188, 0.0
      %v6223 = vadd.f32 %v6221, %v6222
      %v6224 = vsel %vm356, %v6189, 0.0
      %v6225 = vadd.f32 %v6223, %v6224
      %v6226 = vsel %vm356, %v6190, 0.0
      %v6227 = vadd.f32 %v6225, %v6226
      %v6228 = vsel %vm356, %v6191, 0.0
      %v6229 = vadd.f32 %v6227, %v6228
      %v6230 = vsel %vm356, %v6192, 0.0
      %v6231 = vadd.f32 %v6229, %v6230
      %v6232 = vsel %vm356, %v6193, 0.0
      %v6233 = vadd.f32 %v6231, %v6232
      %v6234 = vsel %vm356, %v6194, 0.0
      %v6235 = vadd.f32 %v6233, %v6234
      %v6236 = vsel %vm356, %v6195, 0.0
      %v6237 = vadd.f32 %v6235, %v6236
      %v6238 = vsel %vm356, %v6196, 0.0
      %v6239 = vadd.f32 %v6237, %v6238
      %v6240 = vsel %vm356, %v6197, 0.0
      %v6241 = vadd.f32 %v6239, %v6240
      %v6242 = vsel %vm356, %v6198, 0.0
      %v6243 = vadd.f32 %v6241, %v6242
      %v6244 = vsel %vm356, %v6199, 0.0
      %v6245 = vadd.f32 %v6243, %v6244
      %v6246 = vsel %vm356, %v6200, 0.0
      %v6247 = vadd.f32 %v6245, %v6246
      %v6248 = vsel %vm356, %v6201, 0.0
      %v6249 = vadd.f32 %v6247, %v6248
      %v6250 = vsel %vm356, %v6202, 0.0
      %v6251 = vadd.f32 %v6249, %v6250
      %v6252 = vsel %vm356, %v6203, 0.0
      %v6253 = vadd.f32 %v6251, %v6252
      %v6254 = vsel %vm356, %v6204, 0.0
      %v6255 = vadd.f32 %v6253, %v6254
      %v6256 = vsel %vm356, %v6205, 0.0
      %v6257 = vadd.f32 %v6255, %v6256
      %v6258 = vsel %vm356, %v6206, 0.0
      %v6259 = vadd.f32 %v6257, %v6258
      %v6260 = vsel %vm356, %v6207, 0.0
      %v6261 = vadd.f32 %v6259, %v6260
      %v6262 = vsel %vm356, %v6208, 0.0
      %v6263 = vadd.f32 %v6261, %v6262
      %v6264 = vsel %vm356, %v6209, 0.0
      %v6265 = vadd.f32 %v6263, %v6264
      %v6266 = vsel %vm356, %v6210, 0.0
      %v6267 = vadd.f32 %v6265, %v6266
      %v6268 = vsel %vm356, %v6211, 0.0
      %v6269 = vadd.f32 %v6267, %v6268
      %v6270 = vsel %vm356, %v6212, 0.0
      %v6271 = vadd.f32 %v6269, %v6270
      %v6272 = vsel %vm356, %v6213, 0.0
      %v6273 = vadd.f32 %v6271, %v6272
      %v6274 = vsel %vm356, %v6214, 0.0
      %v6275 = vadd.f32 %v6273, %v6274
      %v6276 = vsel %vm356, %v6215, 0.0
      %v6277 = vadd.f32 %v6275, %v6276
      %v6278 = vsel %vm356, %v6216, 0.0
      %v6279 = vadd.f32 %v6277, %v6278
      %v6280 = vrot.slane %v6279, 4
      %v6281 = vadd.f32 %v6279, %v6280
      %v6282 = vrot.slane %v6281, 2
      %v6283 = vadd.f32 %v6281, %v6282
      %v6284 = vrot.slane %v6283, 1
      %v6285 = vadd.f32 %v6283, %v6284
      %v6286 = vmul.f32 %v6285, 0.00390625
      %v6287 = vmul.f32 %v6184, %v6184
      %v6288 = vsub.f32 %v6286, %v6287
      %v6289 = vmax.f32 %v6288, 0.0
      %v6290 = vsub.f32 %v6083, %v6184
      %v6291 = vsub.f32 %v6084, %v6184
      %v6292 = vsub.f32 %v6085, %v6184
      %v6293 = vsub.f32 %v6086, %v6184
      %v6294 = vsub.f32 %v6087, %v6184
      %v6295 = vsub.f32 %v6088, %v6184
      %v6296 = vsub.f32 %v6089, %v6184
      %v6297 = vsub.f32 %v6090, %v6184
      %v6298 = vsub.f32 %v6091, %v6184
      %v6299 = vsub.f32 %v6092, %v6184
      %v6300 = vsub.f32 %v6093, %v6184
      %v6301 = vsub.f32 %v6094, %v6184
      %v6302 = vsub.f32 %v6095, %v6184
      %v6303 = vsub.f32 %v6096, %v6184
      %v6304 = vsub.f32 %v6097, %v6184
      %v6305 = vsub.f32 %v6098, %v6184
      %v6306 = vsub.f32 %v6099, %v6184
      %v6307 = vsub.f32 %v6100, %v6184
      %v6308 = vsub.f32 %v6101, %v6184
      %v6309 = vsub.f32 %v6102, %v6184
      %v6310 = vsub.f32 %v6103, %v6184
      %v6311 = vsub.f32 %v6104, %v6184
      %v6312 = vsub.f32 %v6105, %v6184
      %v6313 = vsub.f32 %v6106, %v6184
      %v6314 = vsub.f32 %v6107, %v6184
      %v6315 = vsub.f32 %v6108, %v6184
      %v6316 = vsub.f32 %v6109, %v6184
      %v6317 = vsub.f32 %v6110, %v6184
      %v6318 = vsub.f32 %v6111, %v6184
      %v6319 = vsub.f32 %v6112, %v6184
      %v6320 = vsub.f32 %v6113, %v6184
      %v6321 = vsub.f32 %v6114, %v6184
      %v6322 = vadd.f32 %v6289, 1e-05
      %v6323 = vrsqrt.pop %v6322
      %v6324 = vmul.f32 %v6290, %v6323
      %v6325 = vmul.f32 %v6291, %v6323
      %v6326 = vmul.f32 %v6292, %v6323
      %v6327 = vmul.f32 %v6293, %v6323
      %v6328 = vmul.f32 %v6294, %v6323
      %v6329 = vmul.f32 %v6295, %v6323
      %v6330 = vmul.f32 %v6296, %v6323
      %v6331 = vmul.f32 %v6297, %v6323
      %v6332 = vmul.f32 %v6298, %v6323
      %v6333 = vmul.f32 %v6299, %v6323
      %v6334 = vmul.f32 %v6300, %v6323
      %v6335 = vmul.f32 %v6301, %v6323
      %v6336 = vmul.f32 %v6302, %v6323
      %v6337 = vmul.f32 %v6303, %v6323
      %v6338 = vmul.f32 %v6304, %v6323
      %v6339 = vmul.f32 %v6305, %v6323
      %v6340 = vmul.f32 %v6306, %v6323
      %v6341 = vmul.f32 %v6307, %v6323
      %v6342 = vmul.f32 %v6308, %v6323
      %v6343 = vmul.f32 %v6309, %v6323
      %v6344 = vmul.f32 %v6310, %v6323
      %v6345 = vmul.f32 %v6311, %v6323
      %v6346 = vmul.f32 %v6312, %v6323
      %v6347 = vmul.f32 %v6313, %v6323
      %v6348 = vmul.f32 %v6314, %v6323
      %v6349 = vmul.f32 %v6315, %v6323
      %v6350 = vmul.f32 %v6316, %v6323
      %v6351 = vmul.f32 %v6317, %v6323
      %v6352 = vmul.f32 %v6318, %v6323
      %v6353 = vmul.f32 %v6319, %v6323
      %v6354 = vmul.f32 %v6320, %v6323
      %v6355 = vmul.f32 %v6321, %v6323
      %v6356 = vadd.f32 %v282, %v6324
      %v6357 = vadd.f32 %v284, %v6325
      %v6358 = vadd.f32 %v287, %v6326
      %v6359 = vadd.f32 %v289, %v6327
      %v6360 = vadd.f32 %v292, %v6328
      %v6361 = vadd.f32 %v294, %v6329
      %v6362 = vadd.f32 %v297, %v6330
      %v6363 = vadd.f32 %v299, %v6331
      %v6364 = vadd.f32 %v302, %v6332
      %v6365 = vadd.f32 %v304, %v6333
      %v6366 = vadd.f32 %v307, %v6334
      %v6367 = vadd.f32 %v309, %v6335
      %v6368 = vadd.f32 %v312, %v6336
      %v6369 = vadd.f32 %v314, %v6337
      %v6370 = vadd.f32 %v317, %v6338
      %v6371 = vadd.f32 %v319, %v6339
      %v6372 = vadd.f32 %v322, %v6340
      %v6373 = vadd.f32 %v324, %v6341
      %v6374 = vadd.f32 %v327, %v6342
      %v6375 = vadd.f32 %v329, %v6343
      %v6376 = vadd.f32 %v332, %v6344
      %v6377 = vadd.f32 %v334, %v6345
      %v6378 = vadd.f32 %v337, %v6346
      %v6379 = vadd.f32 %v339, %v6347
      %v6380 = vadd.f32 %v342, %v6348
      %v6381 = vadd.f32 %v344, %v6349
      %v6382 = vadd.f32 %v347, %v6350
      %v6383 = vadd.f32 %v349, %v6351
      %v6384 = vadd.f32 %v352, %v6352
      %v6385 = vadd.f32 %v354, %v6353
      %v6386 = vadd.f32 %v1618, %v6354
      %v6387 = vadd.f32 %v1620, %v6355
      %6388 = vst.msk [vmem:[%s170] sm:$0xff] %vm356, %v6356
      %6389 = vst.msk [vmem:[%s170 + $0x8] sm:$0xff] %vm356, %v6357
      %6390 = vst.msk [vmem:[%s170 + $0x10] sm:$0xff] %vm356, %v6358
      %6391 = vst.msk [vmem:[%s170 + $0x18] sm:$0xff] %vm356, %v6359
      %6392 = vst.msk [vmem:[%s170 + $0x20] sm:$0xff] %vm356, %v6360
      %6393 = vst.msk [vmem:[%s170 + $0x28] sm:$0xff] %vm356, %v6361
      %6394 = vst.msk [vmem:[%s170 + $0x30] sm:$0xff] %vm356, %v6362
      %6395 = vst.msk [vmem:[%s170 + $0x38] sm:$0xff] %vm356, %v6363
      %6396 = vst.msk [vmem:[%s170 + $0x40] sm:$0xff] %vm356, %v6364
      %6397 = vst.msk [vmem:[%s170 + $0x48] sm:$0xff] %vm356, %v6365
      %6398 = vst.msk [vmem:[%s170 + $0x50] sm:$0xff] %vm356, %v6366
      %6399 = vst.msk [vmem:[%s170 + $0x58] sm:$0xff] %vm356, %v6367
      %6400 = vst.msk [vmem:[%s170 + $0x60] sm:$0xff] %vm356, %v6368
      %6401 = vst.msk [vmem:[%s170 + $0x68] sm:$0xff] %vm356, %v6369
      %6402 = vst.msk [vmem:[%s170 + $0x70] sm:$0xff] %vm356, %v6370
      %6403 = vst.msk [vmem:[%s170 + $0x78] sm:$0xff] %vm356, %v6371
      %6404 = vst.msk [vmem:[%s170 + $0x80] sm:$0xff] %vm356, %v6372
      %6405 = vst.msk [vmem:[%s170 + $0x88] sm:$0xff] %vm356, %v6373
      %6406 = vst.msk [vmem:[%s170 + $0x90] sm:$0xff] %vm356, %v6374
      %6407 = vst.msk [vmem:[%s170 + $0x98] sm:$0xff] %vm356, %v6375
      %6408 = vst.msk [vmem:[%s170 + $0xa0] sm:$0xff] %vm356, %v6376
      %6409 = vst.msk [vmem:[%s170 + $0xa8] sm:$0xff] %vm356, %v6377
      %6410 = vst.msk [vmem:[%s170 + $0xb0] sm:$0xff] %vm356, %v6378
      %6411 = vst.msk [vmem:[%s170 + $0xb8] sm:$0xff] %vm356, %v6379
      %6412 = vst.msk [vmem:[%s170 + $0xc0] sm:$0xff] %vm356, %v6380
      %6413 = vst.msk [vmem:[%s170 + $0xc8] sm:$0xff] %vm356, %v6381
      %6414 = vst.msk [vmem:[%s170 + $0xd0] sm:$0xff] %vm356, %v6382
      %6415 = vst.msk [vmem:[%s170 + $0xd8] sm:$0xff] %vm356, %v6383
      %6416 = vst.msk [vmem:[%s170 + $0xe0] sm:$0xff] %vm356, %v6384
      %6417 = vst.msk [vmem:[%s170 + $0xe8] sm:$0xff] %vm356, %v6385
      %6418 = vst.msk [vmem:[%s170 + $0xf0] sm:$0xff] %vm356, %v6386
      %6419 = vst.msk [vmem:[%s170 + $0xf8] sm:$0xff] %vm356, %v6387
      %p6420 = scmp.lt.s32.totalorder %s14, 1
      %s6421 = scalar_select %p6420, %s14, 1
      %s6422 = smul.addr %s6421, 32
      %s6423 = smul.addr %s6422, 8
      %s6424 = scalar_lea.vmem %s3, %s6423
      // Predicated region
      $region33: #{tpu_custom_call.1} parent=31 // pred_check
        %p6425 = pneg %p100
      $region34: #{tpu_custom_call.1} parent=31 // pred_check_branch
        %6427 = sbr.rel (%p6425) target = $region36
      $region35: #{tpu_custom_call.1} parent=31 // pred_region
        _
      $region36: #{tpu_custom_call.1} parent=31 // pred_fallthru
        _
    $region32: #{tpu_custom_call.1} parent=5 // pred_fallthru
      _
    %p6428 = scmp.le.s32.totalorder 2, %s9
    // Predicated region
    $region37: #{tpu_custom_call.1} parent=5 // pred_check
      %p6429 = pneg %p6428
    $region38: #{tpu_custom_call.1} parent=5 // pred_check_branch
      %6431 = sbr.rel (%p6429) target = $region40
    $region39: #{tpu_custom_call.1} parent=5 // pred_region
      %s6432 = ssub.s32 %s9, 2
      // Predicated region
      $region41: #{tpu_custom_call.1} parent=39 // pred_check
        %p6433 = pneg %p106
      $region42: #{tpu_custom_call.1} parent=39 // pred_check_branch
        %6435 = sbr.rel (%p6433) target = $region44
      $region43: #{tpu_custom_call.1} parent=39 // pred_region
        %p6436 = scmp.lt.s32.totalorder %s15, 1
        %s6437 = scalar_select %p6436, %s15, 1
        %s6438 = smul.addr %s6437, 32
        %s6439 = smul.addr %s6438, 8
        %s6440 = scalar_lea.vmem %s3, %s6439
      $region44: #{tpu_custom_call.1} parent=39 // pred_fallthru
        _
    $region40: #{tpu_custom_call.1} parent=5 // pred_fallthru
      _
  $region6: #{tpu_custom_call.1} parent=0 // loop_footer
    %s13 = sadd.s32 1, %s9
  $region7: #{tpu_custom_call.1} parent=0 // loop_footer_branch
    %8 = sbr.rel target = $region3
  $region8: #{tpu_custom_call.1} parent=0 // loop_exit
    _

</llo_original>
